<compile_context>
chip_gen: v7x
topology: tpu7x:2x2x1
jax: 0.10.0
libtpu: 0.0.40
codegen_flags: <defaults>
</compile_context>

<pallas_src>
import functools

import jax
import jax.numpy as jnp
from jax.experimental import pallas as pl
from jax.experimental.pallas import tpu as pltpu

EPS = 1e-5
LANE = 128


def _round_up(x, m):
    return (x + m - 1) // m * m


# ---------------- Pallas kernels ----------------

def _matmul_affine_kernel(x_ref, w_ref, s_ref, b_ref, o_ref, *, relu):
    # x: [TM, K] bf16, w: [K, N] bf16, s/b: [1, N] f32  ->  o: [TM, N]
    acc = jnp.dot(x_ref[...], w_ref[...], preferred_element_type=jnp.float32)
    y = acc * s_ref[...] + b_ref[...]
    if relu:
        y = jnp.maximum(y, 0.0)
    o_ref[...] = y.astype(o_ref.dtype)


def matmul_affine(x, w, scale, bias, *, relu, out_dtype, tm=512):
    """Fused relu?((x @ w) * scale + bias), tiled over M, weights resident."""
    M, K = x.shape
    K2, N = w.shape
    assert K == K2
    assert N % LANE == 0, "output width must be lane-dense (multiple of 128)"
    TM = M if M <= tm else tm
    grid = (pl.cdiv(M, TM),)
    return pl.pallas_call(
        functools.partial(_matmul_affine_kernel, relu=relu),
        out_shape=jax.ShapeDtypeStruct((M, N), out_dtype),
        grid=grid,
        in_specs=[
            pl.BlockSpec((TM, K), lambda i: (i, 0)),   # activations: tiled over M
            pl.BlockSpec((K, N), lambda i: (0, 0)),    # weights: constant block
            pl.BlockSpec((1, N), lambda i: (0, 0)),    # folded BN scale
            pl.BlockSpec((1, N), lambda i: (0, 0)),    # folded BN bias
        ],
        out_specs=pl.BlockSpec((TM, N), lambda i: (i, 0)),
        compiler_params=pltpu.CompilerParams(
            dimension_semantics=("parallel",),
            vmem_limit_bytes=32 * 1024 * 1024,
        ),
    )(x.astype(jnp.bfloat16), w.astype(jnp.bfloat16),
      scale.astype(jnp.float32), bias.astype(jnp.float32))


def _maxpool2x2_kernel(x_ref, o_ref, *, c):
    # x: [TR, 2, OW, 2*c]  (h-pair on axis 1, w-pair packed into lanes)
    x = x_ref[...]
    m = jnp.max(x, axis=1)                         # max over h pair -> [TR, OW, 2*c]
    o_ref[...] = jnp.maximum(m[..., :c], m[..., c:])   # max over w pair (aligned lane halves)


def maxpool2x2(y_flat, batch, oh, ow, c, tr=256):
    """MaxPool2d(2, stride=2).

    y_flat: [batch*(2*oh)*(2*ow), c] conv output, rows ordered (b, h, w),
    c a multiple of 128. Returns [batch, oh, ow, c]. Single read / single write.
    """
    R = batch * oh
    x = y_flat.reshape(R, 2, ow, 2 * c)            # free row-major reshape
    TR = R if R <= tr else tr
    out = pl.pallas_call(
        functools.partial(_maxpool2x2_kernel, c=c),
        out_shape=jax.ShapeDtypeStruct((R, ow, c), y_flat.dtype),
        grid=(pl.cdiv(R, TR),),
        in_specs=[pl.BlockSpec((TR, 2, ow, 2 * c), lambda i: (i, 0, 0, 0))],
        out_specs=pl.BlockSpec((TR, ow, c), lambda i: (i, 0, 0)),
        compiler_params=pltpu.CompilerParams(
            dimension_semantics=("parallel",),
            vmem_limit_bytes=32 * 1024 * 1024,
        ),
    )(x)
    return out.reshape(batch, oh, ow, c)


# ---------------- glue: im2col / weight shaping (not the hot path) ----------------

def im2col_valid(x_nhwc, kh, kw, cin):
    """[B,H,W,C>=cin] -> [B,OH,OW,kh*kw*cin] with feature order (kh, kw, cin)."""
    B, H, W, _ = x_nhwc.shape
    OH, OW = H - kh + 1, W - kw + 1
    cols = []
    for i in range(kh):
        for j in range(kw):
            cols.append(x_nhwc[:, i:i + OH, j:j + OW, :cin])
    return jnp.concatenate(cols, axis=-1)


def conv_w_to_matrix(w_oihw):
    """PyTorch (Cout,Cin,KH,KW) -> matmul weight (KH*KW*Cin, Cout) matching im2col order."""
    Cout, Cin, KH, KW = w_oihw.shape
    return jnp.transpose(w_oihw, (2, 3, 1, 0)).reshape(KH * KW * Cin, Cout)


def bn_fold(lin_bias, gamma, beta, run_mean, run_var):
    """Fold conv/linear bias + eval-mode BatchNorm into per-channel scale/bias."""
    scale = gamma / jnp.sqrt(run_var + EPS)
    bias = (lin_bias - run_mean) * scale + beta
    return scale, bias


def _pad2(w, rows, cols):
    return jnp.pad(w, ((0, rows - w.shape[0]), (0, cols - w.shape[1])))


def _pad_row(v, cols):
    v = v.reshape(1, -1)
    return jnp.pad(v, ((0, 0), (0, cols - v.shape[-1])))


def prepare_params(p):
    """One-time parameter shaping (hoisted off the per-forward path):
    matrix-ize conv weights, fold eval-mode BN, pad to lane multiples, cast to bf16."""
    q = {}
    # conv1 (1 -> 20), N padded 20 -> 128
    w1 = conv_w_to_matrix(p["conv1_w"])                                    # [25, 20]
    s1, b1 = bn_fold(p["conv1_b"], p["bn1_g"], p["bn1_b"], p["bn1_rm"], p["bn1_rv"])
    q["w1"] = _pad2(w1, 25, LANE).astype(jnp.bfloat16)
    q["s1"] = _pad_row(s1, LANE).astype(jnp.float32)
    q["b1"] = _pad_row(b1, LANE).astype(jnp.float32)
    # conv2 (20 -> 50), N padded 50 -> 128
    w2 = conv_w_to_matrix(p["conv2_w"])                                    # [500, 50]
    s2, b2 = bn_fold(p["conv2_b"], p["bn2_g"], p["bn2_b"], p["bn2_rm"], p["bn2_rv"])
    q["w2"] = _pad2(w2, 500, LANE).astype(jnp.bfloat16)
    q["s2"] = _pad_row(s2, LANE).astype(jnp.float32)
    q["b2"] = _pad_row(b2, LANE).astype(jnp.float32)
    # fc1 (800 -> 500) + BN1d(500), N padded 500 -> 512
    n3 = _round_up(500, LANE)                                              # 512
    w3 = p["fc1_w"].T                                                      # [800, 500]
    s3, b3 = bn_fold(p["fc1_b"], p["bn3_g"], p["bn3_b"], p["bn3_rm"], p["bn3_rv"])
    q["w3"] = _pad2(w3, 800, n3).astype(jnp.bfloat16)
    q["s3"] = _pad_row(s3, n3).astype(jnp.float32)
    q["b3"] = _pad_row(b3, n3).astype(jnp.float32)
    # fc2 (500 -> 10): K padded 500 -> 512 (matches padded fc1 out), N padded 10 -> 128
    w4 = p["fc2_w"].T                                                      # [500, 10]
    q["w4"] = _pad2(w4, n3, LANE).astype(jnp.bfloat16)
    q["s4"] = _pad_row(jnp.ones((10,), jnp.float32), LANE)
    q["b4"] = _pad_row(p["fc2_b"], LANE).astype(jnp.float32)
    return q


# ---------------- parameters (deterministic synthetic init) ----------------

def init_params(key):
    ks = jax.random.split(key, 8)

    def rnd(k, shape, s=0.05):
        return s * jax.random.normal(k, shape, jnp.float32)

    p = {}
    p["conv1_w"] = rnd(ks[0], (20, 1, 5, 5));   p["conv1_b"] = rnd(ks[1], (20,))
    p["bn1_g"] = jnp.ones((20,), jnp.float32);  p["bn1_b"] = jnp.zeros((20,), jnp.float32)
    p["bn1_rm"] = jnp.zeros((20,), jnp.float32); p["bn1_rv"] = jnp.ones((20,), jnp.float32)
    p["conv2_w"] = rnd(ks[2], (50, 20, 5, 5));  p["conv2_b"] = rnd(ks[3], (50,))
    p["bn2_g"] = jnp.ones((50,), jnp.float32);  p["bn2_b"] = jnp.zeros((50,), jnp.float32)
    p["bn2_rm"] = jnp.zeros((50,), jnp.float32); p["bn2_rv"] = jnp.ones((50,), jnp.float32)
    p["fc1_w"] = rnd(ks[4], (500, 800));        p["fc1_b"] = rnd(ks[5], (500,))
    p["bn3_g"] = jnp.ones((500,), jnp.float32); p["bn3_b"] = jnp.zeros((500,), jnp.float32)
    p["bn3_rm"] = jnp.zeros((500,), jnp.float32); p["bn3_rv"] = jnp.ones((500,), jnp.float32)
    p["fc2_w"] = rnd(ks[6], (10, 500));         p["fc2_b"] = rnd(ks[7], (10,))
    return p


# ---------------- forward ----------------

@jax.jit
def model_forward(q, x_nchw):
    B = x_nchw.shape[0]
    x = jnp.transpose(x_nchw, (0, 2, 3, 1)).astype(jnp.bfloat16)     # NHWC [B,28,28,1]

    # --- G: conv1 + BN + ReLU (fused Pallas matmul), then 2x2 maxpool ---
    pat1 = im2col_valid(x, 5, 5, 1).reshape(B * 24 * 24, 25)         # [B*576, 25]
    y1 = matmul_affine(pat1, q["w1"], q["s1"], q["b1"],
                       relu=True, out_dtype=jnp.bfloat16)            # [B*576, 128]
    p1 = maxpool2x2(y1, B, 12, 12, LANE)                             # [B,12,12,128] (ch 0:20 real)

    # --- G: conv2 + BN + ReLU, then 2x2 maxpool ---
    pat2 = im2col_valid(p1, 5, 5, 20).reshape(B * 8 * 8, 500)        # [B*64, 500]
    y2 = matmul_affine(pat2, q["w2"], q["s2"], q["b2"],
                       relu=True, out_dtype=jnp.bfloat16)            # [B*64, 128]
    p2 = maxpool2x2(y2, B, 4, 4, LANE)                               # [B,4,4,128] (ch 0:50 real)

    # flatten in PyTorch NCHW order: x.view(B, -1) over (C,H,W)
    feat = jnp.transpose(p2[..., :50], (0, 3, 1, 2)).reshape(B, 800)  # [B,800] bf16

    # --- F: Dropout(p=0.5) is identity in eval mode ---
    h = matmul_affine(feat, q["w3"], q["s3"], q["b3"],
                      relu=True, out_dtype=jnp.bfloat16)             # [B,512] (cols 500:512 == 0)
    logits = matmul_affine(h, q["w4"], q["s4"], q["b4"],
                           relu=False, out_dtype=jnp.float32)        # [B,128]
    return dict(cate=logits[:, :10])


if __name__ == "__main__":
    key = jax.random.PRNGKey(0)
    k_param, k_x = jax.random.split(key)
    params = init_params(k_param)
    prepped = prepare_params(params)   # one-time parameter shaping, off the forward path
    x = jax.random.normal(k_x, (2, 1, 28, 28), jnp.float32)  # usps-style grayscale 28x28

    out = model_forward(prepped, x)
    cate = jax.block_until_ready(out["cate"])
    assert cate.shape == (2, 10) and cate.dtype == jnp.float32
    assert bool(jnp.all(jnp.isfinite(cate)))
    print("KERNEL_OK")
</pallas_src>

<mosaic_0001>
module attributes {stable_mosaic.version = 11 : i64} {
  func.func @_matmul_affine_kernel(%arg0: i32, %arg1: memref<512x25xbf16, #tpu.memory_space<vmem>>, %arg2: memref<25x128xbf16, #tpu.memory_space<vmem>>, %arg3: memref<1x128xf32, #tpu.memory_space<vmem>>, %arg4: memref<1x128xf32, #tpu.memory_space<vmem>>, %arg5: memref<512x128xbf16, #tpu.memory_space<vmem>>) attributes {dimension_semantics = [#tpu.dimension_semantics<parallel>], iteration_bounds = array<i64: 3>, scalar_prefetch = 0 : i64, scratch_operands = 0 : i64, tpu.core_type = #tpu.core_type<tc>, window_params = [{transform_indices = @transform_0, window_bounds = array<i64: 512, 25>}, {pipeline_mode = #tpu.pipeline_mode<synchronous>, transform_indices = @transform_1, window_bounds = array<i64: 25, 128>}, {pipeline_mode = #tpu.pipeline_mode<synchronous>, transform_indices = @transform_2, window_bounds = array<i64: 1, 128>}, {pipeline_mode = #tpu.pipeline_mode<synchronous>, transform_indices = @transform_3, window_bounds = array<i64: 1, 128>}, {transform_indices = @transform_4, window_bounds = array<i64: 512, 128>}]} {
    %c0 = arith.constant 0 : index
    %c0_0 = arith.constant 0 : index
    %0 = vector.load %arg1[%c0, %c0_0] : memref<512x25xbf16, #tpu.memory_space<vmem>>, vector<512x25xbf16>
    %c0_1 = arith.constant 0 : index
    %c0_2 = arith.constant 0 : index
    %1 = vector.load %arg2[%c0_1, %c0_2] : memref<25x128xbf16, #tpu.memory_space<vmem>>, vector<25x128xbf16>
    %cst = arith.constant dense<0.000000e+00> : vector<512x128xf32>
    %2 = tpu.matmul %0, %1, %cst {dimension_numbers = #tpu.dot_dimension_numbers<[1], [0], [0], [1], [0, 0, 1, 1], [], []>} : vector<512x25xbf16>, vector<25x128xbf16>, vector<512x128xf32> -> vector<512x128xf32>
    %c0_3 = arith.constant 0 : index
    %c0_4 = arith.constant 0 : index
    %3 = vector.load %arg3[%c0_3, %c0_4] : memref<1x128xf32, #tpu.memory_space<vmem>>, vector<1x128xf32>
    %4 = vector.broadcast %3 : vector<1x128xf32> to vector<512x128xf32>
    %5 = arith.mulf %2, %4 : vector<512x128xf32>
    %c0_5 = arith.constant 0 : index
    %c0_6 = arith.constant 0 : index
    %6 = vector.load %arg4[%c0_5, %c0_6] : memref<1x128xf32, #tpu.memory_space<vmem>>, vector<1x128xf32>
    %7 = vector.broadcast %6 : vector<1x128xf32> to vector<512x128xf32>
    %8 = arith.addf %5, %7 : vector<512x128xf32>
    %cst_7 = arith.constant 0.000000e+00 : f32
    %9 = vector.broadcast %cst_7 : f32 to vector<512x128xf32>
    %10 = arith.maximumf %8, %9 : vector<512x128xf32>
    %11 = arith.truncf %10 : vector<512x128xf32> to vector<512x128xbf16>
    %c0_8 = arith.constant 0 : index
    %c0_9 = arith.constant 0 : index
    %12 = vector.load %arg5[%c0_8, %c0_9] : memref<512x128xbf16, #tpu.memory_space<vmem>>, vector<512x128xbf16>
    tpu.vector_store %arg5[%c0_8, %c0_9], %11 {strides = array<i32>} : memref<512x128xbf16, #tpu.memory_space<vmem>>, vector<512x128xbf16>,
    return
  }
  func.func @transform_0(%arg0: i32) -> (i32, i32) {
    %c0_i32 = arith.constant 0 : i32
    %c0_i32_0 = arith.constant 0 : i32
    return %arg0, %c0_i32 : i32, i32
  }
  func.func @transform_1(%arg0: i32) -> (i32, i32) {
    %c0_i32 = arith.constant 0 : i32
    %c0_i32_0 = arith.constant 0 : i32
    %c0_i32_1 = arith.constant 0 : i32
    return %c0_i32, %c0_i32_0 : i32, i32
  }
  func.func @transform_2(%arg0: i32) -> (i32, i32) {
    %c0_i32 = arith.constant 0 : i32
    %c0_i32_0 = arith.constant 0 : i32
    %c0_i32_1 = arith.constant 0 : i32
    return %c0_i32, %c0_i32_0 : i32, i32
  }
  func.func @transform_3(%arg0: i32) -> (i32, i32) {
    %c0_i32 = arith.constant 0 : i32
    %c0_i32_0 = arith.constant 0 : i32
    %c0_i32_1 = arith.constant 0 : i32
    return %c0_i32, %c0_i32_0 : i32, i32
  }
  func.func @transform_4(%arg0: i32) -> (i32, i32) {
    %c0_i32 = arith.constant 0 : i32
    %c0_i32_0 = arith.constant 0 : i32
    return %arg0, %c0_i32 : i32, i32
  }
}

module attributes {stable_mosaic.version = 11 : i64} {
  func.func @_maxpool2x2_kernel(%arg0: i32, %arg1: memref<24x2x12x256xbf16, #tpu.memory_space<vmem>>, %arg2: memref<24x12x128xbf16, #tpu.memory_space<vmem>>) attributes {dimension_semantics = [#tpu.dimension_semantics<parallel>], iteration_bounds = array<i64: 1>, scalar_prefetch = 0 : i64, scratch_operands = 0 : i64, tpu.core_type = #tpu.core_type<tc>, window_params = [{transform_indices = @transform_0, window_bounds = array<i64: 24, 2, 12, 256>}, {transform_indices = @transform_1, window_bounds = array<i64: 24, 12, 128>}]} {
    %c0 = arith.constant 0 : index
    %c0_0 = arith.constant 0 : index
    %c0_1 = arith.constant 0 : index
    %c0_2 = arith.constant 0 : index
    %0 = vector.load %arg1[%c0, %c0_0, %c0_1, %c0_2] : memref<24x2x12x256xbf16, #tpu.memory_space<vmem>>, vector<24x2x12x256xbf16>
    %cst = arith.constant dense<0xFF80> : vector<24x12x256xbf16>
    %1 = vector.multi_reduction <maximumf>, %0, %cst [1] : vector<24x2x12x256xbf16> to vector<24x12x256xbf16>
    %2 = vector.extract_strided_slice %1 {offsets = [0, 0, 0], sizes = [24, 12, 128], strides = [1, 1, 1]} : vector<24x12x256xbf16> to vector<24x12x128xbf16>
    %3 = vector.extract_strided_slice %1 {offsets = [0, 0, 128], sizes = [24, 12, 128], strides = [1, 1, 1]} : vector<24x12x256xbf16> to vector<24x12x128xbf16>
    %4 = arith.maximumf %2, %3 : vector<24x12x128xbf16>
    %c0_3 = arith.constant 0 : index
    %c0_4 = arith.constant 0 : index
    %c0_5 = arith.constant 0 : index
    %5 = vector.load %arg2[%c0_3, %c0_4, %c0_5] : memref<24x12x128xbf16, #tpu.memory_space<vmem>>, vector<24x12x128xbf16>
    tpu.vector_store %arg2[%c0_3, %c0_4, %c0_5], %4 {strides = array<i32>} : memref<24x12x128xbf16, #tpu.memory_space<vmem>>, vector<24x12x128xbf16>,
    return
  }
  func.func @transform_0(%arg0: i32) -> (i32, i32, i32, i32) {
    %c0_i32 = arith.constant 0 : i32
    %c0_i32_0 = arith.constant 0 : i32
    %c0_i32_1 = arith.constant 0 : i32
    %c0_i32_2 = arith.constant 0 : i32
    return %arg0, %c0_i32, %c0_i32_0, %c0_i32_1 : i32, i32, i32, i32
  }
  func.func @transform_1(%arg0: i32) -> (i32, i32, i32) {
    %c0_i32 = arith.constant 0 : i32
    %c0_i32_0 = arith.constant 0 : i32
    %c0_i32_1 = arith.constant 0 : i32
    return %arg0, %c0_i32, %c0_i32_0 : i32, i32, i32
  }
}

module attributes {stable_mosaic.version = 11 : i64} {
  func.func @_matmul_affine_kernel(%arg0: i32, %arg1: memref<128x500xbf16, #tpu.memory_space<vmem>>, %arg2: memref<500x128xbf16, #tpu.memory_space<vmem>>, %arg3: memref<1x128xf32, #tpu.memory_space<vmem>>, %arg4: memref<1x128xf32, #tpu.memory_space<vmem>>, %arg5: memref<128x128xbf16, #tpu.memory_space<vmem>>) attributes {dimension_semantics = [#tpu.dimension_semantics<parallel>], iteration_bounds = array<i64: 1>, scalar_prefetch = 0 : i64, scratch_operands = 0 : i64, tpu.core_type = #tpu.core_type<tc>, window_params = [{transform_indices = @transform_0, window_bounds = array<i64: 128, 500>}, {pipeline_mode = #tpu.pipeline_mode<synchronous>, transform_indices = @transform_1, window_bounds = array<i64: 500, 128>}, {pipeline_mode = #tpu.pipeline_mode<synchronous>, transform_indices = @transform_2, window_bounds = array<i64: 1, 128>}, {pipeline_mode = #tpu.pipeline_mode<synchronous>, transform_indices = @transform_3, window_bounds = array<i64: 1, 128>}, {transform_indices = @transform_4, window_bounds = array<i64: 128, 128>}]} {
    %c0 = arith.constant 0 : index
    %c0_0 = arith.constant 0 : index
    %0 = vector.load %arg1[%c0, %c0_0] : memref<128x500xbf16, #tpu.memory_space<vmem>>, vector<128x500xbf16>
    %c0_1 = arith.constant 0 : index
    %c0_2 = arith.constant 0 : index
    %1 = vector.load %arg2[%c0_1, %c0_2] : memref<500x128xbf16, #tpu.memory_space<vmem>>, vector<500x128xbf16>
    %cst = arith.constant dense<0.000000e+00> : vector<128x128xf32>
    %2 = tpu.matmul %0, %1, %cst {dimension_numbers = #tpu.dot_dimension_numbers<[1], [0], [0], [1], [0, 0, 1, 1], [], []>} : vector<128x500xbf16>, vector<500x128xbf16>, vector<128x128xf32> -> vector<128x128xf32>
    %c0_3 = arith.constant 0 : index
    %c0_4 = arith.constant 0 : index
    %3 = vector.load %arg3[%c0_3, %c0_4] : memref<1x128xf32, #tpu.memory_space<vmem>>, vector<1x128xf32>
    %4 = vector.broadcast %3 : vector<1x128xf32> to vector<128x128xf32>
    %5 = arith.mulf %2, %4 : vector<128x128xf32>
    %c0_5 = arith.constant 0 : index
    %c0_6 = arith.constant 0 : index
    %6 = vector.load %arg4[%c0_5, %c0_6] : memref<1x128xf32, #tpu.memory_space<vmem>>, vector<1x128xf32>
    %7 = vector.broadcast %6 : vector<1x128xf32> to vector<128x128xf32>
    %8 = arith.addf %5, %7 : vector<128x128xf32>
    %cst_7 = arith.constant 0.000000e+00 : f32
    %9 = vector.broadcast %cst_7 : f32 to vector<128x128xf32>
    %10 = arith.maximumf %8, %9 : vector<128x128xf32>
    %11 = arith.truncf %10 : vector<128x128xf32> to vector<128x128xbf16>
    %c0_8 = arith.constant 0 : index
    %c0_9 = arith.constant 0 : index
    %12 = vector.load %arg5[%c0_8, %c0_9] : memref<128x128xbf16, #tpu.memory_space<vmem>>, vector<128x128xbf16>
    tpu.vector_store %arg5[%c0_8, %c0_9], %11 {strides = array<i32>} : memref<128x128xbf16, #tpu.memory_space<vmem>>, vector<128x128xbf16>,
    return
  }
  func.func @transform_0(%arg0: i32) -> (i32, i32) {
    %c0_i32 = arith.constant 0 : i32
    %c0_i32_0 = arith.constant 0 : i32
    return %arg0, %c0_i32 : i32, i32
  }
  func.func @transform_1(%arg0: i32) -> (i32, i32) {
    %c0_i32 = arith.constant 0 : i32
    %c0_i32_0 = arith.constant 0 : i32
    %c0_i32_1 = arith.constant 0 : i32
    return %c0_i32, %c0_i32_0 : i32, i32
  }
  func.func @transform_2(%arg0: i32) -> (i32, i32) {
    %c0_i32 = arith.constant 0 : i32
    %c0_i32_0 = arith.constant 0 : i32
    %c0_i32_1 = arith.constant 0 : i32
    return %c0_i32, %c0_i32_0 : i32, i32
  }
  func.func @transform_3(%arg0: i32) -> (i32, i32) {
    %c0_i32 = arith.constant 0 : i32
    %c0_i32_0 = arith.constant 0 : i32
    %c0_i32_1 = arith.constant 0 : i32
    return %c0_i32, %c0_i32_0 : i32, i32
  }
  func.func @transform_4(%arg0: i32) -> (i32, i32) {
    %c0_i32 = arith.constant 0 : i32
    %c0_i32_0 = arith.constant 0 : i32
    return %arg0, %c0_i32 : i32, i32
  }
}

module attributes {stable_mosaic.version = 11 : i64} {
  func.func @_maxpool2x2_kernel(%arg0: i32, %arg1: memref<8x2x4x256xbf16, #tpu.memory_space<vmem>>, %arg2: memref<8x4x128xbf16, #tpu.memory_space<vmem>>) attributes {dimension_semantics = [#tpu.dimension_semantics<parallel>], iteration_bounds = array<i64: 1>, scalar_prefetch = 0 : i64, scratch_operands = 0 : i64, tpu.core_type = #tpu.core_type<tc>, window_params = [{transform_indices = @transform_0, window_bounds = array<i64: 8, 2, 4, 256>}, {transform_indices = @transform_1, window_bounds = array<i64: 8, 4, 128>}]} {
    %c0 = arith.constant 0 : index
    %c0_0 = arith.constant 0 : index
    %c0_1 = arith.constant 0 : index
    %c0_2 = arith.constant 0 : index
    %0 = vector.load %arg1[%c0, %c0_0, %c0_1, %c0_2] : memref<8x2x4x256xbf16, #tpu.memory_space<vmem>>, vector<8x2x4x256xbf16>
    %cst = arith.constant dense<0xFF80> : vector<8x4x256xbf16>
    %1 = vector.multi_reduction <maximumf>, %0, %cst [1] : vector<8x2x4x256xbf16> to vector<8x4x256xbf16>
    %2 = vector.extract_strided_slice %1 {offsets = [0, 0, 0], sizes = [8, 4, 128], strides = [1, 1, 1]} : vector<8x4x256xbf16> to vector<8x4x128xbf16>
    %3 = vector.extract_strided_slice %1 {offsets = [0, 0, 128], sizes = [8, 4, 128], strides = [1, 1, 1]} : vector<8x4x256xbf16> to vector<8x4x128xbf16>
    %4 = arith.maximumf %2, %3 : vector<8x4x128xbf16>
    %c0_3 = arith.constant 0 : index
    %c0_4 = arith.constant 0 : index
    %c0_5 = arith.constant 0 : index
    %5 = vector.load %arg2[%c0_3, %c0_4, %c0_5] : memref<8x4x128xbf16, #tpu.memory_space<vmem>>, vector<8x4x128xbf16>
    tpu.vector_store %arg2[%c0_3, %c0_4, %c0_5], %4 {strides = array<i32>} : memref<8x4x128xbf16, #tpu.memory_space<vmem>>, vector<8x4x128xbf16>,
    return
  }
  func.func @transform_0(%arg0: i32) -> (i32, i32, i32, i32) {
    %c0_i32 = arith.constant 0 : i32
    %c0_i32_0 = arith.constant 0 : i32
    %c0_i32_1 = arith.constant 0 : i32
    %c0_i32_2 = arith.constant 0 : i32
    return %arg0, %c0_i32, %c0_i32_0, %c0_i32_1 : i32, i32, i32, i32
  }
  func.func @transform_1(%arg0: i32) -> (i32, i32, i32) {
    %c0_i32 = arith.constant 0 : i32
    %c0_i32_0 = arith.constant 0 : i32
    %c0_i32_1 = arith.constant 0 : i32
    return %arg0, %c0_i32, %c0_i32_0 : i32, i32, i32
  }
}

module attributes {stable_mosaic.version = 11 : i64} {
  func.func @_matmul_affine_kernel(%arg0: i32, %arg1: memref<2x800xbf16, #tpu.memory_space<vmem>>, %arg2: memref<800x512xbf16, #tpu.memory_space<vmem>>, %arg3: memref<1x512xf32, #tpu.memory_space<vmem>>, %arg4: memref<1x512xf32, #tpu.memory_space<vmem>>, %arg5: memref<2x512xbf16, #tpu.memory_space<vmem>>) attributes {dimension_semantics = [#tpu.dimension_semantics<parallel>], iteration_bounds = array<i64: 1>, scalar_prefetch = 0 : i64, scratch_operands = 0 : i64, tpu.core_type = #tpu.core_type<tc>, window_params = [{transform_indices = @transform_0, window_bounds = array<i64: 2, 800>}, {pipeline_mode = #tpu.pipeline_mode<synchronous>, transform_indices = @transform_1, window_bounds = array<i64: 800, 512>}, {pipeline_mode = #tpu.pipeline_mode<synchronous>, transform_indices = @transform_2, window_bounds = array<i64: 1, 512>}, {pipeline_mode = #tpu.pipeline_mode<synchronous>, transform_indices = @transform_3, window_bounds = array<i64: 1, 512>}, {transform_indices = @transform_4, window_bounds = array<i64: 2, 512>}]} {
    %c0 = arith.constant 0 : index
    %c0_0 = arith.constant 0 : index
    %0 = vector.load %arg1[%c0, %c0_0] : memref<2x800xbf16, #tpu.memory_space<vmem>>, vector<2x800xbf16>
    %c0_1 = arith.constant 0 : index
    %c0_2 = arith.constant 0 : index
    %1 = vector.load %arg2[%c0_1, %c0_2] : memref<800x512xbf16, #tpu.memory_space<vmem>>, vector<800x512xbf16>
    %cst = arith.constant dense<0.000000e+00> : vector<2x512xf32>
    %2 = tpu.matmul %0, %1, %cst {dimension_numbers = #tpu.dot_dimension_numbers<[1], [0], [0], [1], [0, 0, 1, 1], [], []>} : vector<2x800xbf16>, vector<800x512xbf16>, vector<2x512xf32> -> vector<2x512xf32>
    %c0_3 = arith.constant 0 : index
    %c0_4 = arith.constant 0 : index
    %3 = vector.load %arg3[%c0_3, %c0_4] : memref<1x512xf32, #tpu.memory_space<vmem>>, vector<1x512xf32>
    %4 = vector.broadcast %3 : vector<1x512xf32> to vector<2x512xf32>
    %5 = arith.mulf %2, %4 : vector<2x512xf32>
    %c0_5 = arith.constant 0 : index
    %c0_6 = arith.constant 0 : index
    %6 = vector.load %arg4[%c0_5, %c0_6] : memref<1x512xf32, #tpu.memory_space<vmem>>, vector<1x512xf32>
    %7 = vector.broadcast %6 : vector<1x512xf32> to vector<2x512xf32>
    %8 = arith.addf %5, %7 : vector<2x512xf32>
    %cst_7 = arith.constant 0.000000e+00 : f32
    %9 = vector.broadcast %cst_7 : f32 to vector<2x512xf32>
    %10 = arith.maximumf %8, %9 : vector<2x512xf32>
    %11 = arith.truncf %10 : vector<2x512xf32> to vector<2x512xbf16>
    %c0_8 = arith.constant 0 : index
    %c0_9 = arith.constant 0 : index
    %12 = vector.load %arg5[%c0_8, %c0_9] : memref<2x512xbf16, #tpu.memory_space<vmem>>, vector<2x512xbf16>
    tpu.vector_store %arg5[%c0_8, %c0_9], %11 {strides = array<i32>} : memref<2x512xbf16, #tpu.memory_space<vmem>>, vector<2x512xbf16>,
    return
  }
  func.func @transform_0(%arg0: i32) -> (i32, i32) {
    %c0_i32 = arith.constant 0 : i32
    %c0_i32_0 = arith.constant 0 : i32
    return %arg0, %c0_i32 : i32, i32
  }
  func.func @transform_1(%arg0: i32) -> (i32, i32) {
    %c0_i32 = arith.constant 0 : i32
    %c0_i32_0 = arith.constant 0 : i32
    %c0_i32_1 = arith.constant 0 : i32
    return %c0_i32, %c0_i32_0 : i32, i32
  }
  func.func @transform_2(%arg0: i32) -> (i32, i32) {
    %c0_i32 = arith.constant 0 : i32
    %c0_i32_0 = arith.constant 0 : i32
    %c0_i32_1 = arith.constant 0 : i32
    return %c0_i32, %c0_i32_0 : i32, i32
  }
  func.func @transform_3(%arg0: i32) -> (i32, i32) {
    %c0_i32 = arith.constant 0 : i32
    %c0_i32_0 = arith.constant 0 : i32
    %c0_i32_1 = arith.constant 0 : i32
    return %c0_i32, %c0_i32_0 : i32, i32
  }
  func.func @transform_4(%arg0: i32) -> (i32, i32) {
    %c0_i32 = arith.constant 0 : i32
    %c0_i32_0 = arith.constant 0 : i32
    return %arg0, %c0_i32 : i32, i32
  }
}

module attributes {stable_mosaic.version = 11 : i64} {
  func.func @_matmul_affine_kernel(%arg0: i32, %arg1: memref<2x512xbf16, #tpu.memory_space<vmem>>, %arg2: memref<512x128xbf16, #tpu.memory_space<vmem>>, %arg3: memref<1x128xf32, #tpu.memory_space<vmem>>, %arg4: memref<1x128xf32, #tpu.memory_space<vmem>>, %arg5: memref<2x128xf32, #tpu.memory_space<vmem>>) attributes {dimension_semantics = [#tpu.dimension_semantics<parallel>], iteration_bounds = array<i64: 1>, scalar_prefetch = 0 : i64, scratch_operands = 0 : i64, tpu.core_type = #tpu.core_type<tc>, window_params = [{transform_indices = @transform_0, window_bounds = array<i64: 2, 512>}, {pipeline_mode = #tpu.pipeline_mode<synchronous>, transform_indices = @transform_1, window_bounds = array<i64: 512, 128>}, {pipeline_mode = #tpu.pipeline_mode<synchronous>, transform_indices = @transform_2, window_bounds = array<i64: 1, 128>}, {pipeline_mode = #tpu.pipeline_mode<synchronous>, transform_indices = @transform_3, window_bounds = array<i64: 1, 128>}, {transform_indices = @transform_4, window_bounds = array<i64: 2, 128>}]} {
    %c0 = arith.constant 0 : index
    %c0_0 = arith.constant 0 : index
    %0 = vector.load %arg1[%c0, %c0_0] : memref<2x512xbf16, #tpu.memory_space<vmem>>, vector<2x512xbf16>
    %c0_1 = arith.constant 0 : index
    %c0_2 = arith.constant 0 : index
    %1 = vector.load %arg2[%c0_1, %c0_2] : memref<512x128xbf16, #tpu.memory_space<vmem>>, vector<512x128xbf16>
    %cst = arith.constant dense<0.000000e+00> : vector<2x128xf32>
    %2 = tpu.matmul %0, %1, %cst {dimension_numbers = #tpu.dot_dimension_numbers<[1], [0], [0], [1], [0, 0, 1, 1], [], []>} : vector<2x512xbf16>, vector<512x128xbf16>, vector<2x128xf32> -> vector<2x128xf32>
    %c0_3 = arith.constant 0 : index
    %c0_4 = arith.constant 0 : index
    %3 = vector.load %arg3[%c0_3, %c0_4] : memref<1x128xf32, #tpu.memory_space<vmem>>, vector<1x128xf32>
    %4 = vector.broadcast %3 : vector<1x128xf32> to vector<2x128xf32>
    %5 = arith.mulf %2, %4 : vector<2x128xf32>
    %c0_5 = arith.constant 0 : index
    %c0_6 = arith.constant 0 : index
    %6 = vector.load %arg4[%c0_5, %c0_6] : memref<1x128xf32, #tpu.memory_space<vmem>>, vector<1x128xf32>
    %7 = vector.broadcast %6 : vector<1x128xf32> to vector<2x128xf32>
    %8 = arith.addf %5, %7 : vector<2x128xf32>
    %c0_7 = arith.constant 0 : index
    %c0_8 = arith.constant 0 : index
    %9 = vector.load %arg5[%c0_7, %c0_8] : memref<2x128xf32, #tpu.memory_space<vmem>>, vector<2x128xf32>
    tpu.vector_store %arg5[%c0_7, %c0_8], %8 {strides = array<i32>} : memref<2x128xf32, #tpu.memory_space<vmem>>, vector<2x128xf32>,
    return
  }
  func.func @transform_0(%arg0: i32) -> (i32, i32) {
    %c0_i32 = arith.constant 0 : i32
    %c0_i32_0 = arith.constant 0 : i32
    return %arg0, %c0_i32 : i32, i32
  }
  func.func @transform_1(%arg0: i32) -> (i32, i32) {
    %c0_i32 = arith.constant 0 : i32
    %c0_i32_0 = arith.constant 0 : i32
    %c0_i32_1 = arith.constant 0 : i32
    return %c0_i32, %c0_i32_0 : i32, i32
  }
  func.func @transform_2(%arg0: i32) -> (i32, i32) {
    %c0_i32 = arith.constant 0 : i32
    %c0_i32_0 = arith.constant 0 : i32
    %c0_i32_1 = arith.constant 0 : i32
    return %c0_i32, %c0_i32_0 : i32, i32
  }
  func.func @transform_3(%arg0: i32) -> (i32, i32) {
    %c0_i32 = arith.constant 0 : i32
    %c0_i32_0 = arith.constant 0 : i32
    %c0_i32_1 = arith.constant 0 : i32
    return %c0_i32, %c0_i32_0 : i32, i32
  }
  func.func @transform_4(%arg0: i32) -> (i32, i32) {
    %c0_i32 = arith.constant 0 : i32
    %c0_i32_0 = arith.constant 0 : i32
    return %arg0, %c0_i32 : i32, i32
  }
}

</mosaic_0001>

<llo_original>
// kernel: model_forward.7
$region0: #{model_forward.7}
  #allocation0 [shape = 'u32[]', space=smem, size = 0x4, offset = 0x4, fixed_abs, tag = 'smem constant byte address 0x4 - core index']
  #allocation1 [shape = 'u32[144,128]{1,0:T(1,128)}', space=vmem, size = 0x12000, scoped, tag = 'internal scratch']
  %s0 = inlined_call_operand.vmem [shape: bf16[24,2,12,256], index: 0, kind: input, shape index: {}]
  %s1 = inlined_call_operand.vmem [shape: bf16[24,12,128], index: 1, kind: output, shape index: {}]
  %s2 = sld [smem:[#allocation0]]
  $region14: #{model_forward.7} parent=0
    _
  %s4 = ssub.s32 1, %s2
  %s5 = scalar_select 0, %s4, %s2
  // Predicated region
  $region2: #{model_forward.7} parent=0 // pred_check
    _
  $region3: #{model_forward.7} parent=0 // pred_check_branch
    %7 = sbr.rel (0) target = $region5
  $region4: #{model_forward.7} parent=0 // pred_region
    _
  $region5: #{model_forward.7} parent=0 // pred_fallthru
    _
  %v9 = vld [vmem:[%s0] sm:$0xff]
  %v10 = vld [vmem:[%s0 + $0x8] sm:$0x33]
  %v11 = vld [vmem:[%s0 + $0x10] sm:$0xff]
  %v12 = vld [vmem:[%s0 + $0x18] sm:$0x33]
  %v13 = vld [vmem:[%s0 + $0x20] sm:$0xff]
  %v14 = vld [vmem:[%s0 + $0x28] sm:$0x33]
  %v15 = vld [vmem:[%s0 + $0x30] sm:$0xff]
  %v16 = vld [vmem:[%s0 + $0x38] sm:$0x33]
  %v17 = vld [vmem:[%s0 + $0x40] sm:$0xff]
  %v18 = vld [vmem:[%s0 + $0x48] sm:$0x33]
  %v19 = vld [vmem:[%s0 + $0x50] sm:$0xff]
  %v20 = vld [vmem:[%s0 + $0x58] sm:$0x33]
  %v21 = vld [vmem:[%s0 + $0x60] sm:$0xff]
  %v22 = vld [vmem:[%s0 + $0x68] sm:$0x33]
  %v23 = vld [vmem:[%s0 + $0x70] sm:$0xff]
  %v24 = vld [vmem:[%s0 + $0x78] sm:$0x33]
  %v25 = vld [vmem:[%s0 + $0x80] sm:$0xff]
  %v26 = vld [vmem:[%s0 + $0x88] sm:$0x33]
  %v27 = vld [vmem:[%s0 + $0x90] sm:$0xff]
  %v28 = vld [vmem:[%s0 + $0x98] sm:$0x33]
  %v29 = vld [vmem:[%s0 + $0xa0] sm:$0xff]
  %v30 = vld [vmem:[%s0 + $0xa8] sm:$0x33]
  %v31 = vld [vmem:[%s0 + $0xb0] sm:$0xff]
  %v32 = vld [vmem:[%s0 + $0xb8] sm:$0x33]
  %v33 = vld [vmem:[%s0 + $0xc0] sm:$0xff]
  %v34 = vld [vmem:[%s0 + $0xc8] sm:$0x33]
  %v35 = vld [vmem:[%s0 + $0xd0] sm:$0xff]
  %v36 = vld [vmem:[%s0 + $0xd8] sm:$0x33]
  %v37 = vld [vmem:[%s0 + $0xe0] sm:$0xff]
  %v38 = vld [vmem:[%s0 + $0xe8] sm:$0x33]
  %v39 = vld [vmem:[%s0 + $0xf0] sm:$0xff]
  %v40 = vld [vmem:[%s0 + $0xf8] sm:$0x33]
  %v41 = vld [vmem:[%s0 + $0x100] sm:$0xff]
  %v42 = vld [vmem:[%s0 + $0x108] sm:$0x33]
  %v43 = vld [vmem:[%s0 + $0x110] sm:$0xff]
  %v44 = vld [vmem:[%s0 + $0x118] sm:$0x33]
  %v45 = vld [vmem:[%s0 + $0x120] sm:$0xff]
  %v46 = vld [vmem:[%s0 + $0x128] sm:$0x33]
  %v47 = vld [vmem:[%s0 + $0x130] sm:$0xff]
  %v48 = vld [vmem:[%s0 + $0x138] sm:$0x33]
  %v49 = vld [vmem:[%s0 + $0x140] sm:$0xff]
  %v50 = vld [vmem:[%s0 + $0x148] sm:$0x33]
  %v51 = vld [vmem:[%s0 + $0x150] sm:$0xff]
  %v52 = vld [vmem:[%s0 + $0x158] sm:$0x33]
  %v53 = vld [vmem:[%s0 + $0x160] sm:$0xff]
  %v54 = vld [vmem:[%s0 + $0x168] sm:$0x33]
  %v55 = vld [vmem:[%s0 + $0x170] sm:$0xff]
  %v56 = vld [vmem:[%s0 + $0x178] sm:$0x33]
  %v57 = vld [vmem:[%s0 + $0x180] sm:$0xff]
  %v58 = vld [vmem:[%s0 + $0x188] sm:$0x33]
  %v59 = vld [vmem:[%s0 + $0x190] sm:$0xff]
  %v60 = vld [vmem:[%s0 + $0x198] sm:$0x33]
  %v61 = vld [vmem:[%s0 + $0x1a0] sm:$0xff]
  %v62 = vld [vmem:[%s0 + $0x1a8] sm:$0x33]
  %v63 = vld [vmem:[%s0 + $0x1b0] sm:$0xff]
  %v64 = vld [vmem:[%s0 + $0x1b8] sm:$0x33]
  %v65 = vld [vmem:[%s0 + $0x1c0] sm:$0xff]
  %v66 = vld [vmem:[%s0 + $0x1c8] sm:$0x33]
  %v67 = vld [vmem:[%s0 + $0x1d0] sm:$0xff]
  %v68 = vld [vmem:[%s0 + $0x1d8] sm:$0x33]
  %v69 = vld [vmem:[%s0 + $0x1e0] sm:$0xff]
  %v70 = vld [vmem:[%s0 + $0x1e8] sm:$0x33]
  %v71 = vld [vmem:[%s0 + $0x1f0] sm:$0xff]
  %v72 = vld [vmem:[%s0 + $0x1f8] sm:$0x33]
  %v73 = vld [vmem:[%s0 + $0x200] sm:$0xff]
  %v74 = vld [vmem:[%s0 + $0x208] sm:$0x33]
  %v75 = vld [vmem:[%s0 + $0x210] sm:$0xff]
  %v76 = vld [vmem:[%s0 + $0x218] sm:$0x33]
  %v77 = vld [vmem:[%s0 + $0x220] sm:$0xff]
  %v78 = vld [vmem:[%s0 + $0x228] sm:$0x33]
  %v79 = vld [vmem:[%s0 + $0x230] sm:$0xff]
  %v80 = vld [vmem:[%s0 + $0x238] sm:$0x33]
  %v81 = vld [vmem:[%s0 + $0x240] sm:$0xff]
  %v82 = vld [vmem:[%s0 + $0x248] sm:$0x33]
  %v83 = vld [vmem:[%s0 + $0x250] sm:$0xff]
  %v84 = vld [vmem:[%s0 + $0x258] sm:$0x33]
  %v85 = vld [vmem:[%s0 + $0x260] sm:$0xff]
  %v86 = vld [vmem:[%s0 + $0x268] sm:$0x33]
  %v87 = vld [vmem:[%s0 + $0x270] sm:$0xff]
  %v88 = vld [vmem:[%s0 + $0x278] sm:$0x33]
  %v89 = vld [vmem:[%s0 + $0x280] sm:$0xff]
  %v90 = vld [vmem:[%s0 + $0x288] sm:$0x33]
  %v91 = vld [vmem:[%s0 + $0x290] sm:$0xff]
  %v92 = vld [vmem:[%s0 + $0x298] sm:$0x33]
  %v93 = vld [vmem:[%s0 + $0x2a0] sm:$0xff]
  %v94 = vld [vmem:[%s0 + $0x2a8] sm:$0x33]
  %v95 = vld [vmem:[%s0 + $0x2b0] sm:$0xff]
  %v96 = vld [vmem:[%s0 + $0x2b8] sm:$0x33]
  %v97 = vld [vmem:[%s0 + $0x2c0] sm:$0xff]
  %v98 = vld [vmem:[%s0 + $0x2c8] sm:$0x33]
  %v99 = vld [vmem:[%s0 + $0x2d0] sm:$0xff]
  %v100 = vld [vmem:[%s0 + $0x2d8] sm:$0x33]
  %v101 = vld [vmem:[%s0 + $0x2e0] sm:$0xff]
  %v102 = vld [vmem:[%s0 + $0x2e8] sm:$0x33]
  %v103 = vld [vmem:[%s0 + $0x2f0] sm:$0xff]
  %v104 = vld [vmem:[%s0 + $0x2f8] sm:$0x33]
  %v105 = vmax.bf16 %v9, %v11
  %vm106 = vcmask 1041408
  %vm107 = vcmask 1045508
  %vm108 = vmor %vm107, %vm106
  %v111 = vsel %vm108, %v10, 4286644096
  %v114 = vsel %vm108, %v12, 4286644096
  %v116 = vmax.bf16 %v111, %v114
  %v117 = vmax.bf16 %v13, %v15
  %v119 = vsel %vm108, %v14, 4286644096
  %v122 = vsel %vm108, %v16, 4286644096
  %v124 = vmax.bf16 %v119, %v122
  %v125 = vmax.bf16 %v17, %v19
  %v127 = vsel %vm108, %v18, 4286644096
  %v130 = vsel %vm108, %v20, 4286644096
  %v132 = vmax.bf16 %v127, %v130
  %v133 = vmax.bf16 %v21, %v23
  %v135 = vsel %vm108, %v22, 4286644096
  %v138 = vsel %vm108, %v24, 4286644096
  %v140 = vmax.bf16 %v135, %v138
  %v141 = vmax.bf16 %v25, %v27
  %v143 = vsel %vm108, %v26, 4286644096
  %v146 = vsel %vm108, %v28, 4286644096
  %v148 = vmax.bf16 %v143, %v146
  %v149 = vmax.bf16 %v29, %v31
  %v151 = vsel %vm108, %v30, 4286644096
  %v154 = vsel %vm108, %v32, 4286644096
  %v156 = vmax.bf16 %v151, %v154
  %v157 = vmax.bf16 %v33, %v35
  %v159 = vsel %vm108, %v34, 4286644096
  %v162 = vsel %vm108, %v36, 4286644096
  %v164 = vmax.bf16 %v159, %v162
  %v165 = vmax.bf16 %v37, %v39
  %v167 = vsel %vm108, %v38, 4286644096
  %v170 = vsel %vm108, %v40, 4286644096
  %v172 = vmax.bf16 %v167, %v170
  %v173 = vmax.bf16 %v41, %v43
  %v175 = vsel %vm108, %v42, 4286644096
  %v178 = vsel %vm108, %v44, 4286644096
  %v180 = vmax.bf16 %v175, %v178
  %v181 = vmax.bf16 %v45, %v47
  %v183 = vsel %vm108, %v46, 4286644096
  %v186 = vsel %vm108, %v48, 4286644096
  %v188 = vmax.bf16 %v183, %v186
  %v189 = vmax.bf16 %v49, %v51
  %v191 = vsel %vm108, %v50, 4286644096
  %v194 = vsel %vm108, %v52, 4286644096
  %v196 = vmax.bf16 %v191, %v194
  %v197 = vmax.bf16 %v53, %v55
  %v199 = vsel %vm108, %v54, 4286644096
  %v202 = vsel %vm108, %v56, 4286644096
  %v204 = vmax.bf16 %v199, %v202
  %v205 = vmax.bf16 %v57, %v59
  %v207 = vsel %vm108, %v58, 4286644096
  %v210 = vsel %vm108, %v60, 4286644096
  %v212 = vmax.bf16 %v207, %v210
  %v213 = vmax.bf16 %v61, %v63
  %v215 = vsel %vm108, %v62, 4286644096
  %v218 = vsel %vm108, %v64, 4286644096
  %v220 = vmax.bf16 %v215, %v218
  %v221 = vmax.bf16 %v65, %v67
  %v223 = vsel %vm108, %v66, 4286644096
  %v226 = vsel %vm108, %v68, 4286644096
  %v228 = vmax.bf16 %v223, %v226
  %v229 = vmax.bf16 %v69, %v71
  %v231 = vsel %vm108, %v70, 4286644096
  %v234 = vsel %vm108, %v72, 4286644096
  %v236 = vmax.bf16 %v231, %v234
  %v237 = vmax.bf16 %v73, %v75
  %v239 = vsel %vm108, %v74, 4286644096
  %v242 = vsel %vm108, %v76, 4286644096
  %v244 = vmax.bf16 %v239, %v242
  %v245 = vmax.bf16 %v77, %v79
  %v247 = vsel %vm108, %v78, 4286644096
  %v250 = vsel %vm108, %v80, 4286644096
  %v252 = vmax.bf16 %v247, %v250
  %v253 = vmax.bf16 %v81, %v83
  %v255 = vsel %vm108, %v82, 4286644096
  %v258 = vsel %vm108, %v84, 4286644096
  %v260 = vmax.bf16 %v255, %v258
  %v261 = vmax.bf16 %v85, %v87
  %v263 = vsel %vm108, %v86, 4286644096
  %v266 = vsel %vm108, %v88, 4286644096
  %v268 = vmax.bf16 %v263, %v266
  %v269 = vmax.bf16 %v89, %v91
  %v271 = vsel %vm108, %v90, 4286644096
  %v274 = vsel %vm108, %v92, 4286644096
  %v276 = vmax.bf16 %v271, %v274
  %v277 = vmax.bf16 %v93, %v95
  %v279 = vsel %vm108, %v94, 4286644096
  %v282 = vsel %vm108, %v96, 4286644096
  %v284 = vmax.bf16 %v279, %v282
  %v285 = vmax.bf16 %v97, %v99
  %v287 = vsel %vm108, %v98, 4286644096
  %v290 = vsel %vm108, %v100, 4286644096
  %v292 = vmax.bf16 %v287, %v290
  %v293 = vmax.bf16 %v101, %v103
  %v295 = vsel %vm108, %v102, 4286644096
  %v298 = vsel %vm108, %v104, 4286644096
  %v300 = vmax.bf16 %v295, %v298
  %v349 = vrot.slane %v105, 4
  %v350 = vrot.slane %v116, 4
  %v351 = vrot.slane %v117, 4
  %v352 = vrot.slane %v124, 4
  %v353 = vrot.slane %v125, 4
  %v354 = vrot.slane %v132, 4
  %v355 = vrot.slane %v133, 4
  %v356 = vrot.slane %v140, 4
  %v357 = vrot.slane %v141, 4
  %v358 = vrot.slane %v148, 4
  %v359 = vrot.slane %v149, 4
  %v360 = vrot.slane %v156, 4
  %v361 = vrot.slane %v157, 4
  %v362 = vrot.slane %v164, 4
  %v363 = vrot.slane %v165, 4
  %v364 = vrot.slane %v172, 4
  %v365 = vrot.slane %v173, 4
  %v366 = vrot.slane %v180, 4
  %v367 = vrot.slane %v181, 4
  %v368 = vrot.slane %v188, 4
  %v369 = vrot.slane %v189, 4
  %v370 = vrot.slane %v196, 4
  %v371 = vrot.slane %v197, 4
  %v372 = vrot.slane %v204, 4
  %v373 = vrot.slane %v205, 4
  %v374 = vrot.slane %v212, 4
  %v375 = vrot.slane %v213, 4
  %v376 = vrot.slane %v220, 4
  %v377 = vrot.slane %v221, 4
  %v378 = vrot.slane %v228, 4
  %v379 = vrot.slane %v229, 4
  %v380 = vrot.slane %v236, 4
  %v381 = vrot.slane %v237, 4
  %v382 = vrot.slane %v244, 4
  %v383 = vrot.slane %v245, 4
  %v384 = vrot.slane %v252, 4
  %v385 = vrot.slane %v253, 4
  %v386 = vrot.slane %v260, 4
  %v387 = vrot.slane %v261, 4
  %v388 = vrot.slane %v268, 4
  %v389 = vrot.slane %v269, 4
  %v390 = vrot.slane %v276, 4
  %v391 = vrot.slane %v277, 4
  %v392 = vrot.slane %v284, 4
  %v393 = vrot.slane %v285, 4
  %v394 = vrot.slane %v292, 4
  %v395 = vrot.slane %v293, 4
  %v396 = vrot.slane %v300, 4
  %v445 = vmax.bf16 %v105, %v349
  %v446 = vmax.bf16 %v116, %v350
  %v447 = vmax.bf16 %v117, %v351
  %v448 = vmax.bf16 %v124, %v352
  %v449 = vmax.bf16 %v125, %v353
  %v450 = vmax.bf16 %v132, %v354
  %v451 = vmax.bf16 %v133, %v355
  %v452 = vmax.bf16 %v140, %v356
  %v453 = vmax.bf16 %v141, %v357
  %v454 = vmax.bf16 %v148, %v358
  %v455 = vmax.bf16 %v149, %v359
  %v456 = vmax.bf16 %v156, %v360
  %v457 = vmax.bf16 %v157, %v361
  %v458 = vmax.bf16 %v164, %v362
  %v459 = vmax.bf16 %v165, %v363
  %v460 = vmax.bf16 %v172, %v364
  %v461 = vmax.bf16 %v173, %v365
  %v462 = vmax.bf16 %v180, %v366
  %v463 = vmax.bf16 %v181, %v367
  %v464 = vmax.bf16 %v188, %v368
  %v465 = vmax.bf16 %v189, %v369
  %v466 = vmax.bf16 %v196, %v370
  %v467 = vmax.bf16 %v197, %v371
  %v468 = vmax.bf16 %v204, %v372
  %v469 = vmax.bf16 %v205, %v373
  %v470 = vmax.bf16 %v212, %v374
  %v471 = vmax.bf16 %v213, %v375
  %v472 = vmax.bf16 %v220, %v376
  %v473 = vmax.bf16 %v221, %v377
  %v474 = vmax.bf16 %v228, %v378
  %v475 = vmax.bf16 %v229, %v379
  %v476 = vmax.bf16 %v236, %v380
  %v477 = vmax.bf16 %v237, %v381
  %v478 = vmax.bf16 %v244, %v382
  %v479 = vmax.bf16 %v245, %v383
  %v480 = vmax.bf16 %v252, %v384
  %v481 = vmax.bf16 %v253, %v385
  %v482 = vmax.bf16 %v260, %v386
  %v483 = vmax.bf16 %v261, %v387
  %v484 = vmax.bf16 %v268, %v388
  %v485 = vmax.bf16 %v269, %v389
  %v486 = vmax.bf16 %v276, %v390
  %v487 = vmax.bf16 %v277, %v391
  %v488 = vmax.bf16 %v284, %v392
  %v489 = vmax.bf16 %v285, %v393
  %v490 = vmax.bf16 %v292, %v394
  %v491 = vmax.bf16 %v293, %v395
  %v492 = vmax.bf16 %v300, %v396
  %493 = vst [vmem:[%s1] sm:$0xf] %v445
  %494 = vst [vmem:[%s1 + $0x4] sm:$0x3] %v446
  %495 = vst [vmem:[%s1 + $0x8] sm:$0xf] %v447
  %496 = vst [vmem:[%s1 + $0xc] sm:$0x3] %v448
  %497 = vst [vmem:[%s1 + $0x10] sm:$0xf] %v449
  %498 = vst [vmem:[%s1 + $0x14] sm:$0x3] %v450
  %499 = vst [vmem:[%s1 + $0x18] sm:$0xf] %v451
  %500 = vst [vmem:[%s1 + $0x1c] sm:$0x3] %v452
  %501 = vst [vmem:[%s1 + $0x20] sm:$0xf] %v453
  %502 = vst [vmem:[%s1 + $0x24] sm:$0x3] %v454
  %503 = vst [vmem:[%s1 + $0x28] sm:$0xf] %v455
  %504 = vst [vmem:[%s1 + $0x2c] sm:$0x3] %v456
  %505 = vst [vmem:[%s1 + $0x30] sm:$0xf] %v457
  %506 = vst [vmem:[%s1 + $0x34] sm:$0x3] %v458
  %507 = vst [vmem:[%s1 + $0x38] sm:$0xf] %v459
  %508 = vst [vmem:[%s1 + $0x3c] sm:$0x3] %v460
  %509 = vst [vmem:[%s1 + $0x40] sm:$0xf] %v461
  %510 = vst [vmem:[%s1 + $0x44] sm:$0x3] %v462
  %511 = vst [vmem:[%s1 + $0x48] sm:$0xf] %v463
  %512 = vst [vmem:[%s1 + $0x4c] sm:$0x3] %v464
  %513 = vst [vmem:[%s1 + $0x50] sm:$0xf] %v465
  %514 = vst [vmem:[%s1 + $0x54] sm:$0x3] %v466
  %515 = vst [vmem:[%s1 + $0x58] sm:$0xf] %v467
  %516 = vst [vmem:[%s1 + $0x5c] sm:$0x3] %v468
  %517 = vst [vmem:[%s1 + $0x60] sm:$0xf] %v469
  %518 = vst [vmem:[%s1 + $0x64] sm:$0x3] %v470
  %519 = vst [vmem:[%s1 + $0x68] sm:$0xf] %v471
  %520 = vst [vmem:[%s1 + $0x6c] sm:$0x3] %v472
  %521 = vst [vmem:[%s1 + $0x70] sm:$0xf] %v473
  %522 = vst [vmem:[%s1 + $0x74] sm:$0x3] %v474
  %523 = vst [vmem:[%s1 + $0x78] sm:$0xf] %v475
  %524 = vst [vmem:[%s1 + $0x7c] sm:$0x3] %v476
  %525 = vst [vmem:[%s1 + $0x80] sm:$0xf] %v477
  %526 = vst [vmem:[%s1 + $0x84] sm:$0x3] %v478
  %527 = vst [vmem:[%s1 + $0x88] sm:$0xf] %v479
  %528 = vst [vmem:[%s1 + $0x8c] sm:$0x3] %v480
  %529 = vst [vmem:[%s1 + $0x90] sm:$0xf] %v481
  %530 = vst [vmem:[%s1 + $0x94] sm:$0x3] %v482
  %531 = vst [vmem:[%s1 + $0x98] sm:$0xf] %v483
  %532 = vst [vmem:[%s1 + $0x9c] sm:$0x3] %v484
  %533 = vst [vmem:[%s1 + $0xa0] sm:$0xf] %v485
  %534 = vst [vmem:[%s1 + $0xa4] sm:$0x3] %v486
  %535 = vst [vmem:[%s1 + $0xa8] sm:$0xf] %v487
  %536 = vst [vmem:[%s1 + $0xac] sm:$0x3] %v488
  %537 = vst [vmem:[%s1 + $0xb0] sm:$0xf] %v489
  %538 = vst [vmem:[%s1 + $0xb4] sm:$0x3] %v490
  %539 = vst [vmem:[%s1 + $0xb8] sm:$0xf] %v491
  %540 = vst [vmem:[%s1 + $0xbc] sm:$0x3] %v492
  // Predicated region
  $region6: #{model_forward.7} parent=0 // pred_check
    _
  $region7: #{model_forward.7} parent=0 // pred_check_branch
    %542 = sbr.rel (0) target = $region9
  $region8: #{model_forward.7} parent=0 // pred_region
    _
  $region9: #{model_forward.7} parent=0 // pred_fallthru
    _
  // Predicated region
  $region10: #{model_forward.7} parent=0 // pred_check
    _
  $region11: #{model_forward.7} parent=0 // pred_check_branch
    %544 = sbr.rel (0) target = $region13
  $region12: #{model_forward.7} parent=0 // pred_region
    _
  $region13: #{model_forward.7} parent=0 // pred_fallthru
    _

// kernel: model_forward.6
$region0: #{model_forward.6}
  #allocation0 [shape = 'u32[]', space=smem, size = 0x4, offset = 0x4, fixed_abs, tag = 'smem constant byte address 0x4 - core index']
  #allocation1 [shape = 'u32[144,128]{1,0:T(1,128)}', space=vmem, size = 0x12000, scoped, tag = 'internal scratch']
  %s0 = inlined_call_operand.vmem [shape: bf16[1152,25], index: 0, kind: input, shape index: {}]
  %s1 = inlined_call_operand.vmem [shape: bf16[25,128], index: 1, kind: input, shape index: {}]
  %s2 = inlined_call_operand.vmem [shape: f32[1,128], index: 2, kind: input, shape index: {}]
  %s3 = inlined_call_operand.vmem [shape: f32[1,128], index: 3, kind: input, shape index: {}]
  %s4 = inlined_call_operand.vmem [shape: bf16[1152,128], index: 4, kind: output, shape index: {}]
  %s5 = sld [smem:[#allocation0]]
  $region93: #{model_forward.6} parent=0
    _
  %s7 = ssub.s32 1, %s5
  %s8 = scalar_select 0, %s7, %s5
  $region1: #{model_forward.6} parent=0
    #allocation2 [shape = 'u8[262144]{0}', space=vmem, size = 0x40000, scoped, tag = 'output window, operand 0']
    loop: start=0, step=1, limit=5
    $region2: #{model_forward.6} parent=1 // loop_pre_header
      _
    $region3: #{model_forward.6} parent=1 // loop_header
      %s10 = sphi 0, %s14
      %p11 = scmp.ge.s32.totalorder %s10, 5
      %s20 = sphi 0, %s22
      %s23 = sphi 0, %s20
      %s24 = sphi 0, %s23
      %s40 = sphi 0, %s24
      %s44 = sphi 0, %s44
      %s46 = sphi 0, %s44
      %s47 = sphi 0, %s46
      %s61 = sphi 0, %s47
      %s65 = sphi 0, %s65
      %s67 = sphi 0, %s65
      %s68 = sphi 0, %s67
      %s82 = sphi 0, %s68
      %s86 = sphi 0, %s86
      %s88 = sphi 0, %s86
      %s89 = sphi 0, %s88
      %s103 = sphi 0, %s89
      %s109 = sphi 0, %s111
      %s112 = sphi 0, %s109
      %s113 = sphi 0, %s112
      %s129 = sphi 0, %s113
    $region4: #{model_forward.6} parent=1 // loop_header_branch
      %13 = sbr.rel (%p11) target = $region8
    $region5: #{model_forward.6} parent=1 // loop_body
      %s15 = ssub.s32 %s10, 1
      %s16 = ssub.s32 %s10, 2
      %s17 = sadd.s32 %s10, 1
      %s18 = ssub.s32 %s10, %s17
      %p19 = scmp.eq.s32.totalorder %s18, 0
      %s21 = sadd.s32 %s20, 1
      %s22 = scalar_select %p19, %s20, %s21
      %p25 = pneg %p19
      %p26 = scmp.eq.s32.totalorder %s10, 2
      %p27 = por %p25, %p26
      %p28 = scmp.ne.s32.totalorder %s20, %s23
      %p29 = scmp.eq.s32.totalorder %s10, 0
      %p30 = por %p28, %p29
      %p31 = scmp.ne.s32.totalorder %s20, %s23
      %p32 = scmp.eq.s32.totalorder %s15, 2
      %p33 = por %p31, %p32
      %p34 = scmp.ne.s32.totalorder %s23, %s24
      %p35 = scmp.eq.s32.totalorder %s15, 0
      %p36 = por %p34, %p35
      %p37 = scmp.ne.s32.totalorder %s23, %s24
      %p38 = scmp.eq.s32.totalorder %s16, 2
      %p39 = por %p37, %p38
      %p41 = scmp.ne.s32.totalorder %s24, %s40
      %p42 = scmp.eq.s32.totalorder %s16, 0
      %p43 = por %p41, %p42
      %s45 = sadd.s32 %s44, 1
      %p48 = scmp.eq.s32.totalorder %s10, 2
      %p49 = scmp.ne.s32.totalorder %s44, %s46
      %p50 = scmp.eq.s32.totalorder %s10, 0
      %p51 = por %p49, %p50
      %p52 = scmp.ne.s32.totalorder %s44, %s46
      %p53 = scmp.eq.s32.totalorder %s15, 2
      %p54 = por %p52, %p53
      %p55 = scmp.ne.s32.totalorder %s46, %s47
      %p56 = scmp.eq.s32.totalorder %s15, 0
      %p57 = por %p55, %p56
      %p58 = scmp.ne.s32.totalorder %s46, %s47
      %p59 = scmp.eq.s32.totalorder %s16, 2
      %p60 = por %p58, %p59
      %p62 = scmp.ne.s32.totalorder %s47, %s61
      %p63 = scmp.eq.s32.totalorder %s16, 0
      %p64 = por %p62, %p63
      %s66 = sadd.s32 %s65, 1
      %p69 = scmp.eq.s32.totalorder %s10, 2
      %p70 = scmp.ne.s32.totalorder %s65, %s67
      %p71 = scmp.eq.s32.totalorder %s10, 0
      %p72 = por %p70, %p71
      %p73 = scmp.ne.s32.totalorder %s65, %s67
      %p74 = scmp.eq.s32.totalorder %s15, 2
      %p75 = por %p73, %p74
      %p76 = scmp.ne.s32.totalorder %s67, %s68
      %p77 = scmp.eq.s32.totalorder %s15, 0
      %p78 = por %p76, %p77
      %p79 = scmp.ne.s32.totalorder %s67, %s68
      %p80 = scmp.eq.s32.totalorder %s16, 2
      %p81 = por %p79, %p80
      %p83 = scmp.ne.s32.totalorder %s68, %s82
      %p84 = scmp.eq.s32.totalorder %s16, 0
      %p85 = por %p83, %p84
      %s87 = sadd.s32 %s86, 1
      %p90 = scmp.eq.s32.totalorder %s10, 2
      %p91 = scmp.ne.s32.totalorder %s86, %s88
      %p92 = scmp.eq.s32.totalorder %s10, 0
      %p93 = por %p91, %p92
      %p94 = scmp.ne.s32.totalorder %s86, %s88
      %p95 = scmp.eq.s32.totalorder %s15, 2
      %p96 = por %p94, %p95
      %p97 = scmp.ne.s32.totalorder %s88, %s89
      %p98 = scmp.eq.s32.totalorder %s15, 0
      %p99 = por %p97, %p98
      %p100 = scmp.ne.s32.totalorder %s88, %s89
      %p101 = scmp.eq.s32.totalorder %s16, 2
      %p102 = por %p100, %p101
      %p104 = scmp.ne.s32.totalorder %s89, %s103
      %p105 = scmp.eq.s32.totalorder %s16, 0
      %p106 = por %p104, %p105
      %s107 = ssub.s32 %s10, %s17
      %p108 = scmp.eq.s32.totalorder %s107, 0
      %s110 = sadd.s32 %s109, 1
      %s111 = scalar_select %p108, %s109, %s110
      %p114 = pneg %p108
      %p115 = scmp.eq.s32.totalorder %s10, 2
      %p116 = por %p114, %p115
      %p117 = scmp.ne.s32.totalorder %s109, %s112
      %p118 = scmp.eq.s32.totalorder %s10, 0
      %p119 = por %p117, %p118
      %p120 = scmp.ne.s32.totalorder %s109, %s112
      %p121 = scmp.eq.s32.totalorder %s15, 2
      %p122 = por %p120, %p121
      %p123 = scmp.ne.s32.totalorder %s112, %s113
      %p124 = scmp.eq.s32.totalorder %s15, 0
      %p125 = por %p123, %p124
      %p126 = scmp.ne.s32.totalorder %s112, %s113
      %p127 = scmp.eq.s32.totalorder %s16, 2
      %p128 = por %p126, %p127
      %p130 = scmp.ne.s32.totalorder %s113, %s129
      %p131 = scmp.eq.s32.totalorder %s16, 0
      %p132 = por %p130, %p131
      %p133 = scmp.le.s32.totalorder 1, %s10
      %p134 = scmp.lt.s32.totalorder %s10, 4
      %p135 = pnand %p133, %p134
      %p136 = pneg %p135
      // Predicated region
      $region9: #{model_forward.6} parent=5 // pred_check
        _
      $region10: #{model_forward.6} parent=5 // pred_check_branch
        %138 = sbr.rel (%p135) target = $region12
      $region11: #{model_forward.6} parent=5 // pred_region
        %s139 = ssub.s32 %s10, 1
        // Predicated region
        $region13: #{model_forward.6} parent=11 // pred_check
          %p140 = pneg %p57
        $region14: #{model_forward.6} parent=11 // pred_check_branch
          %142 = sbr.rel (%p140) target = $region16
        $region15: #{model_forward.6} parent=11 // pred_region
          _
        $region16: #{model_forward.6} parent=11 // pred_fallthru
          _
        // Predicated region
        $region17: #{model_forward.6} parent=11 // pred_check
          %p143 = pneg %p78
        $region18: #{model_forward.6} parent=11 // pred_check_branch
          %145 = sbr.rel (%p143) target = $region20
        $region19: #{model_forward.6} parent=11 // pred_region
          _
        $region20: #{model_forward.6} parent=11 // pred_fallthru
          _
        // Predicated region
        $region21: #{model_forward.6} parent=11 // pred_check
          %p146 = pneg %p99
        $region22: #{model_forward.6} parent=11 // pred_check_branch
          %148 = sbr.rel (%p146) target = $region24
        $region23: #{model_forward.6} parent=11 // pred_region
          _
        $region24: #{model_forward.6} parent=11 // pred_fallthru
          _
      $region12: #{model_forward.6} parent=5 // pred_fallthru
        _
      %p149 = scmp.lt.s32.totalorder %s10, 3
      // Predicated region
      $region25: #{model_forward.6} parent=5 // pred_check
        %p150 = pneg %p149
      $region26: #{model_forward.6} parent=5 // pred_check_branch
        %152 = sbr.rel (%p150) target = $region28
      $region27: #{model_forward.6} parent=5 // pred_region
        // Predicated region
        $region29: #{model_forward.6} parent=27 // pred_check
          %p153 = pneg %p30
        $region30: #{model_forward.6} parent=27 // pred_check_branch
          %155 = sbr.rel (%p153) target = $region32
        $region31: #{model_forward.6} parent=27 // pred_region
          %s156 = smul.u32 64, %s10
          %s157 = ssub.s32 144, %s156
          %p158 = scmp.lt.s32.totalorder %s157, 64
          %s159 = scalar_select %p158, %s157, 64
          %s160 = smul.u32 64, %s159
          %p161 = scmp.lt.s32.totalorder %s156, 143
          %s162 = scalar_select %p161, %s156, 143
          %s163 = smul.addr %s162, 4
          %s164 = scalar_lea.vmem %s0, %s163
          %s165 = smul.u32 64, %s10
          %s166 = ssub.s32 144, %s165
          %p167 = scmp.lt.s32.totalorder %s166, 64
          %s168 = scalar_select %p167, %s166, 64
          %s169 = smul.u32 64, %s168
        $region32: #{model_forward.6} parent=27 // pred_fallthru
          _
      $region28: #{model_forward.6} parent=5 // pred_fallthru
        _
      %p170 = scmp.le.s32.totalorder 1, %s10
      %p171 = scmp.lt.s32.totalorder %s10, 4
      %p172 = pnand %p170, %p171
      %p173 = pneg %p172
      // Predicated region
      $region33: #{model_forward.6} parent=5 // pred_check
        _
      $region34: #{model_forward.6} parent=5 // pred_check_branch
        %175 = sbr.rel (%p172) target = $region36
      $region35: #{model_forward.6} parent=5 // pred_region
        %s176 = ssub.s32 %s10, 1
        %s177 = smul.u32 64, %s15
        %s178 = ssub.s32 144, %s177
        %p179 = scmp.lt.s32.totalorder %s178, 64
        %s180 = scalar_select %p179, %s178, 64
        %s181 = smul.u32 64, %s180
        %p182 = scmp.lt.s32.totalorder %s177, 143
        %s183 = scalar_select %p182, %s177, 143
        %s184 = smul.addr %s183, 4
        %s185 = scalar_lea.vmem %s0, %s184
        %p186 = pneg %p36
        %p187 = pneg %p33
        %p188 = pneg %p57
        %p189 = pneg %p54
        %p190 = pneg %p78
        %p191 = pneg %p75
        %p192 = pneg %p99
        %p193 = pneg %p96
        %p194 = pneg %p125
        %p195 = pneg %p122
        %s196 = sand.u32 %s112, 1
        %s197 = sand.u32 %s112, 1
        %s198 = smul.addr %s197, 256
        %s199 = scalar_lea.vmem [#allocation2], %s198
        %s200 = smul.u32 64, %s15
        %s201 = ssub.s32 144, %s200
        %p202 = scmp.lt.s32.totalorder %s201, 64
        %s203 = scalar_select %p202, %s201, 64
        %s204 = smul.u32 64, %s203
        %p205 = scmp.lt.s32.totalorder %s200, 143
        %s206 = scalar_select %p205, %s200, 143
        %s207 = smul.addr %s206, 4
        %s208 = scalar_lea.vmem %s0, %s207
        %s209 = smul.u32 64, %s15
        %s210 = ssub.s32 144, %s209
        %p211 = scmp.lt.s32.totalorder %s210, 64
        %s212 = scalar_select %p211, %s210, 64
        %s213 = smul.u32 64, %s212
        %s214 = smul.u32 64, %s15
        %s215 = ssub.s32 144, %s214
        %p216 = scmp.lt.s32.totalorder %s215, 64
        %s217 = scalar_select %p216, %s215, 64
        %s218 = smul.u32 64, %s217
        %v220 = vld [vmem:[%s208] sm:$0xf]
        %v221 = vld [vmem:[%s208 + $0x4] sm:$0xf]
        %v222 = vld [vmem:[%s208 + $0x8] sm:$0xf]
        %v223 = vld [vmem:[%s208 + $0xc] sm:$0xf]
        %v224 = vld [vmem:[%s208 + $0x10] sm:$0xf]
        %v225 = vld [vmem:[%s208 + $0x14] sm:$0xf]
        %v226 = vld [vmem:[%s208 + $0x18] sm:$0xf]
        %v227 = vld [vmem:[%s208 + $0x1c] sm:$0xf]
        %v228 = vld [vmem:[%s208 + $0x20] sm:$0xf]
        %v229 = vld [vmem:[%s208 + $0x24] sm:$0xf]
        %v230 = vld [vmem:[%s208 + $0x28] sm:$0xf]
        %v231 = vld [vmem:[%s208 + $0x2c] sm:$0xf]
        %v232 = vld [vmem:[%s208 + $0x30] sm:$0xf]
        %v233 = vld [vmem:[%s208 + $0x34] sm:$0xf]
        %v234 = vld [vmem:[%s208 + $0x38] sm:$0xf]
        %v235 = vld [vmem:[%s208 + $0x3c] sm:$0xf]
        %v236 = vld [vmem:[%s208 + $0x40] sm:$0xf]
        %v237 = vld [vmem:[%s208 + $0x44] sm:$0xf]
        %v238 = vld [vmem:[%s208 + $0x48] sm:$0xf]
        %v239 = vld [vmem:[%s208 + $0x4c] sm:$0xf]
        %v240 = vld [vmem:[%s208 + $0x50] sm:$0xf]
        %v241 = vld [vmem:[%s208 + $0x54] sm:$0xf]
        %v242 = vld [vmem:[%s208 + $0x58] sm:$0xf]
        %v243 = vld [vmem:[%s208 + $0x5c] sm:$0xf]
        %v244 = vld [vmem:[%s208 + $0x60] sm:$0xf]
        %v245 = vld [vmem:[%s208 + $0x64] sm:$0xf]
        %v246 = vld [vmem:[%s208 + $0x68] sm:$0xf]
        %v247 = vld [vmem:[%s208 + $0x6c] sm:$0xf]
        %v248 = vld [vmem:[%s208 + $0x70] sm:$0xf]
        %v249 = vld [vmem:[%s208 + $0x74] sm:$0xf]
        %v250 = vld [vmem:[%s208 + $0x78] sm:$0xf]
        %v251 = vld [vmem:[%s208 + $0x7c] sm:$0xf]
        %v252 = vld [vmem:[%s208 + $0x80] sm:$0xf]
        %v253 = vld [vmem:[%s208 + $0x84] sm:$0xf]
        %v254 = vld [vmem:[%s208 + $0x88] sm:$0xf]
        %v255 = vld [vmem:[%s208 + $0x8c] sm:$0xf]
        %v256 = vld [vmem:[%s208 + $0x90] sm:$0xf]
        %v257 = vld [vmem:[%s208 + $0x94] sm:$0xf]
        %v258 = vld [vmem:[%s208 + $0x98] sm:$0xf]
        %v259 = vld [vmem:[%s208 + $0x9c] sm:$0xf]
        %v260 = vld [vmem:[%s208 + $0xa0] sm:$0xf]
        %v261 = vld [vmem:[%s208 + $0xa4] sm:$0xf]
        %v262 = vld [vmem:[%s208 + $0xa8] sm:$0xf]
        %v263 = vld [vmem:[%s208 + $0xac] sm:$0xf]
        %v264 = vld [vmem:[%s208 + $0xb0] sm:$0xf]
        %v265 = vld [vmem:[%s208 + $0xb4] sm:$0xf]
        %v266 = vld [vmem:[%s208 + $0xb8] sm:$0xf]
        %v267 = vld [vmem:[%s208 + $0xbc] sm:$0xf]
        %v268 = vld [vmem:[%s208 + $0xc0] sm:$0xf]
        %v269 = vld [vmem:[%s208 + $0xc4] sm:$0xf]
        %v270 = vld [vmem:[%s208 + $0xc8] sm:$0xf]
        %v271 = vld [vmem:[%s208 + $0xcc] sm:$0xf]
        %v272 = vld [vmem:[%s208 + $0xd0] sm:$0xf]
        %v273 = vld [vmem:[%s208 + $0xd4] sm:$0xf]
        %v274 = vld [vmem:[%s208 + $0xd8] sm:$0xf]
        %v275 = vld [vmem:[%s208 + $0xdc] sm:$0xf]
        %v276 = vld [vmem:[%s208 + $0xe0] sm:$0xf]
        %v277 = vld [vmem:[%s208 + $0xe4] sm:$0xf]
        %v278 = vld [vmem:[%s208 + $0xe8] sm:$0xf]
        %v279 = vld [vmem:[%s208 + $0xec] sm:$0xf]
        %v280 = vld [vmem:[%s208 + $0xf0] sm:$0xf]
        %v281 = vld [vmem:[%s208 + $0xf4] sm:$0xf]
        %v282 = vld [vmem:[%s208 + $0xf8] sm:$0xf]
        %v283 = vld [vmem:[%s208 + $0xfc] sm:$0xf]
        %v284 = vld [vmem:[%s1] sm:$0xf]
        %v285 = vld [vmem:[%s1 + $0x4] sm:$0xf]
        %v286 = vld [vmem:[%s1 + $0x8] sm:$0xf]
        %v287 = vld [vmem:[%s1 + $0xc] sm:$0x1]
        %v352 = vunpack.c.l.b16 %v220
        %v353 = vunpack.c.l.b16 %v221
        %v354 = vunpack.c.l.b16 %v222
        %v355 = vunpack.c.l.b16 %v223
        %v356 = vunpack.c.l.b16 %v224
        %v357 = vunpack.c.l.b16 %v225
        %v358 = vunpack.c.l.b16 %v226
        %v359 = vunpack.c.l.b16 %v227
        %v360 = vunpack.c.l.b16 %v228
        %v361 = vunpack.c.l.b16 %v229
        %v362 = vunpack.c.l.b16 %v230
        %v363 = vunpack.c.l.b16 %v231
        %v364 = vunpack.c.l.b16 %v232
        %v365 = vunpack.c.l.b16 %v233
        %v366 = vunpack.c.l.b16 %v234
        %v367 = vunpack.c.l.b16 %v235
        %v368 = vunpack.c.l.b16 %v236
        %v369 = vunpack.c.l.b16 %v237
        %v370 = vunpack.c.l.b16 %v238
        %v371 = vunpack.c.l.b16 %v239
        %v372 = vunpack.c.l.b16 %v240
        %v373 = vunpack.c.l.b16 %v241
        %v374 = vunpack.c.l.b16 %v242
        %v375 = vunpack.c.l.b16 %v243
        %v376 = vunpack.c.l.b16 %v244
        %v377 = vunpack.c.l.b16 %v245
        %v378 = vunpack.c.l.b16 %v246
        %v379 = vunpack.c.l.b16 %v247
        %v380 = vunpack.c.l.b16 %v248
        %v381 = vunpack.c.l.b16 %v249
        %v382 = vunpack.c.l.b16 %v250
        %v383 = vunpack.c.l.b16 %v251
        %v384 = vunpack.c.l.b16 %v252
        %v385 = vunpack.c.l.b16 %v253
        %v386 = vunpack.c.l.b16 %v254
        %v387 = vunpack.c.l.b16 %v255
        %v388 = vunpack.c.l.b16 %v256
        %v389 = vunpack.c.l.b16 %v257
        %v390 = vunpack.c.l.b16 %v258
        %v391 = vunpack.c.l.b16 %v259
        %v392 = vunpack.c.l.b16 %v260
        %v393 = vunpack.c.l.b16 %v261
        %v394 = vunpack.c.l.b16 %v262
        %v395 = vunpack.c.l.b16 %v263
        %v396 = vunpack.c.l.b16 %v264
        %v397 = vunpack.c.l.b16 %v265
        %v398 = vunpack.c.l.b16 %v266
        %v399 = vunpack.c.l.b16 %v267
        %v400 = vunpack.c.l.b16 %v268
        %v401 = vunpack.c.l.b16 %v269
        %v402 = vunpack.c.l.b16 %v270
        %v403 = vunpack.c.l.b16 %v271
        %v404 = vunpack.c.l.b16 %v272
        %v405 = vunpack.c.l.b16 %v273
        %v406 = vunpack.c.l.b16 %v274
        %v407 = vunpack.c.l.b16 %v275
        %v408 = vunpack.c.l.b16 %v276
        %v409 = vunpack.c.l.b16 %v277
        %v410 = vunpack.c.l.b16 %v278
        %v411 = vunpack.c.l.b16 %v279
        %v412 = vunpack.c.l.b16 %v280
        %v413 = vunpack.c.l.b16 %v281
        %v414 = vunpack.c.l.b16 %v282
        %v415 = vunpack.c.l.b16 %v283
        %v416 = vpack.c.b16 %v353, %v352
        %v417 = vpack.c.b16 %v355, %v354
        %v418 = vpack.c.b16 %v357, %v356
        %v419 = vpack.c.b16 %v359, %v358
        %v420 = vpack.c.b16 %v361, %v360
        %v421 = vpack.c.b16 %v363, %v362
        %v422 = vpack.c.b16 %v365, %v364
        %v423 = vpack.c.b16 %v367, %v366
        %v424 = vpack.c.b16 %v369, %v368
        %v425 = vpack.c.b16 %v371, %v370
        %v426 = vpack.c.b16 %v373, %v372
        %v427 = vpack.c.b16 %v375, %v374
        %v428 = vpack.c.b16 %v377, %v376
        %v429 = vpack.c.b16 %v379, %v378
        %v430 = vpack.c.b16 %v381, %v380
        %v431 = vpack.c.b16 %v383, %v382
        %v432 = vpack.c.b16 %v385, %v384
        %v433 = vpack.c.b16 %v387, %v386
        %v434 = vpack.c.b16 %v389, %v388
        %v435 = vpack.c.b16 %v391, %v390
        %v436 = vpack.c.b16 %v393, %v392
        %v437 = vpack.c.b16 %v395, %v394
        %v438 = vpack.c.b16 %v397, %v396
        %v439 = vpack.c.b16 %v399, %v398
        %v440 = vpack.c.b16 %v401, %v400
        %v441 = vpack.c.b16 %v403, %v402
        %v442 = vpack.c.b16 %v405, %v404
        %v443 = vpack.c.b16 %v407, %v406
        %v444 = vpack.c.b16 %v409, %v408
        %v445 = vpack.c.b16 %v411, %v410
        %v446 = vpack.c.b16 %v413, %v412
        %v447 = vpack.c.b16 %v415, %v414
        %v452 = vunpack.c.l.b16 %v284
        %v453 = vunpack.c.l.b16 %v285
        %v454 = vunpack.c.l.b16 %v286
        %v455 = vunpack.c.l.b16 %v287
        %v456 = vpack.c.b16 %v453, %v452
        %v457 = vpack.c.b16 %v455, %v454
        %vm459 = vcmask 203776
        %v461 = vsel %vm459, %v416, 0
        %v464 = vsel %vm459, %v417, 0
        %v467 = vsel %vm459, %v418, 0
        %v470 = vsel %vm459, %v419, 0
        %v473 = vsel %vm459, %v420, 0
        %v476 = vsel %vm459, %v421, 0
        %v479 = vsel %vm459, %v422, 0
        %v482 = vsel %vm459, %v423, 0
        %v485 = vsel %vm459, %v424, 0
        %v488 = vsel %vm459, %v425, 0
        %v491 = vsel %vm459, %v426, 0
        %v494 = vsel %vm459, %v427, 0
        %v497 = vsel %vm459, %v428, 0
        %v500 = vsel %vm459, %v429, 0
        %v503 = vsel %vm459, %v430, 0
        %v506 = vsel %vm459, %v431, 0
        %v509 = vsel %vm459, %v432, 0
        %v512 = vsel %vm459, %v433, 0
        %v515 = vsel %vm459, %v434, 0
        %v518 = vsel %vm459, %v435, 0
        %v521 = vsel %vm459, %v436, 0
        %v524 = vsel %vm459, %v437, 0
        %v527 = vsel %vm459, %v438, 0
        %v530 = vsel %vm459, %v439, 0
        %v533 = vsel %vm459, %v440, 0
        %v536 = vsel %vm459, %v441, 0
        %v539 = vsel %vm459, %v442, 0
        %v542 = vsel %vm459, %v443, 0
        %v545 = vsel %vm459, %v444, 0
        %v548 = vsel %vm459, %v445, 0
        %v551 = vsel %vm459, %v446, 0
        %v554 = vsel %vm459, %v447, 0
        %vm556 = vcmask 1043456
        %vm557 = vcmask 1044480
        %v558 = vsel %vm556, 4294967295, 65535
        %v559 = vsel %vm557, %v558, 0
        %v561 = vand.u32 %v457, %v559
        %563 = vmatprep.subr.bf16.mxu0 0
        %564 = vmatpush1.bf16.msra.mxu0 %v456
        %565 = vmatprep.subr.bf16.mxu0 0
        %566 = vmatpush1.bf16.msra.mxu0 %v561
        %567 = vmatprep.subr.bf16.mxu0 0
        %568 = vmatpush1.bf16.msra.mxu0 0
        %569 = vmatprep.subr.bf16.mxu0 0
        %570 = vmatpush1.bf16.msra.mxu0 0
        %571 = vmatprep.subr.bf16.mxu0 0
        %572 = vmatpush1.bf16.msra.mxu0 0
        %573 = vmatprep.subr.bf16.mxu0 0
        %574 = vmatpush1.bf16.msra.mxu0 0
        %575 = vmatprep.subr.bf16.mxu0 0
        %576 = vmatpush1.bf16.msra.mxu0 0
        %577 = vmatprep.subr.bf16.mxu0 0
        %578 = vmatpush1.bf16.msra.mxu0 0
        %579 = vmatprep.subr.bf16.mxu0 0
        %580 = vmatpush1.bf16.msra.mxu0 0
        %581 = vmatprep.subr.bf16.mxu0 0
        %582 = vmatpush1.bf16.msra.mxu0 0
        %583 = vmatprep.subr.bf16.mxu0 0
        %584 = vmatpush1.bf16.msra.mxu0 0
        %585 = vmatprep.subr.bf16.mxu0 0
        %586 = vmatpush1.bf16.msra.mxu0 0
        %587 = vmatprep.subr.bf16.mxu0 0
        %588 = vmatpush1.bf16.msra.mxu0 0
        %589 = vmatprep.subr.bf16.mxu0 0
        %590 = vmatpush1.bf16.msra.mxu0 0
        %591 = vmatprep.subr.bf16.mxu0 0
        %592 = vmatpush1.bf16.msra.mxu0 0
        %593 = vmatprep.subr.bf16.mxu0 0
        %594 = vmatpush1.bf16.msra.mxu0 0
        %595 = vmatprep.mubr.bf16.mxu0 0
        %596 = vmatmul.mubr.bf16.gmra.mrb[0].mxu0 %v461
        %v597 = vpop.f32.mrb[0].mxu0
        %v598 = vadd.f32 0.0, %v597
        %v599 = vpop.f32.mrb[0].mxu0
        %v600 = vpop.f32.mrb[0].mxu0
        %v601 = vadd.f32 0.0, %v600
        %v602 = vpop.f32.mrb[0].mxu0
        %603 = vmatprep.mubr.bf16.mxu0 0
        %604 = vmatmul.mubr.bf16.gmra.mrb[0].mxu0 %v464
        %v605 = vpop.f32.mrb[0].mxu0
        %v606 = vadd.f32 0.0, %v605
        %v607 = vpop.f32.mrb[0].mxu0
        %v608 = vpop.f32.mrb[0].mxu0
        %v609 = vadd.f32 0.0, %v608
        %v610 = vpop.f32.mrb[0].mxu0
        %611 = vmatprep.mubr.bf16.mxu0 0
        %612 = vmatmul.mubr.bf16.gmra.mrb[0].mxu0 %v467
        %v613 = vpop.f32.mrb[0].mxu0
        %v614 = vadd.f32 0.0, %v613
        %v615 = vpop.f32.mrb[0].mxu0
        %v616 = vpop.f32.mrb[0].mxu0
        %v617 = vadd.f32 0.0, %v616
        %v618 = vpop.f32.mrb[0].mxu0
        %619 = vmatprep.mubr.bf16.mxu0 0
        %620 = vmatmul.mubr.bf16.gmra.mrb[0].mxu0 %v470
        %v621 = vpop.f32.mrb[0].mxu0
        %v622 = vadd.f32 0.0, %v621
        %v623 = vpop.f32.mrb[0].mxu0
        %v624 = vpop.f32.mrb[0].mxu0
        %v625 = vadd.f32 0.0, %v624
        %v626 = vpop.f32.mrb[0].mxu0
        %627 = vmatprep.mubr.bf16.mxu0 0
        %628 = vmatmul.mubr.bf16.gmra.mrb[0].mxu0 %v473
        %v629 = vpop.f32.mrb[0].mxu0
        %v630 = vadd.f32 0.0, %v629
        %v631 = vpop.f32.mrb[0].mxu0
        %v632 = vpop.f32.mrb[0].mxu0
        %v633 = vadd.f32 0.0, %v632
        %v634 = vpop.f32.mrb[0].mxu0
        %635 = vmatprep.mubr.bf16.mxu0 0
        %636 = vmatmul.mubr.bf16.gmra.mrb[0].mxu0 %v476
        %v637 = vpop.f32.mrb[0].mxu0
        %v638 = vadd.f32 0.0, %v637
        %v639 = vpop.f32.mrb[0].mxu0
        %v640 = vpop.f32.mrb[0].mxu0
        %v641 = vadd.f32 0.0, %v640
        %v642 = vpop.f32.mrb[0].mxu0
        %643 = vmatprep.mubr.bf16.mxu0 0
        %644 = vmatmul.mubr.bf16.gmra.mrb[0].mxu0 %v479
        %v645 = vpop.f32.mrb[0].mxu0
        %v646 = vadd.f32 0.0, %v645
        %v647 = vpop.f32.mrb[0].mxu0
        %v648 = vpop.f32.mrb[0].mxu0
        %v649 = vadd.f32 0.0, %v648
        %v650 = vpop.f32.mrb[0].mxu0
        %651 = vmatprep.mubr.bf16.mxu0 0
        %652 = vmatmul.mubr.bf16.gmra.mrb[0].mxu0 %v482
        %v653 = vpop.f32.mrb[0].mxu0
        %v654 = vadd.f32 0.0, %v653
        %v655 = vpop.f32.mrb[0].mxu0
        %v656 = vpop.f32.mrb[0].mxu0
        %v657 = vadd.f32 0.0, %v656
        %v658 = vpop.f32.mrb[0].mxu0
        %659 = vmatprep.mubr.bf16.mxu0 0
        %660 = vmatmul.mubr.bf16.gmra.mrb[0].mxu0 %v485
        %v661 = vpop.f32.mrb[0].mxu0
        %v662 = vadd.f32 0.0, %v661
        %v663 = vpop.f32.mrb[0].mxu0
        %v664 = vpop.f32.mrb[0].mxu0
        %v665 = vadd.f32 0.0, %v664
        %v666 = vpop.f32.mrb[0].mxu0
        %667 = vmatprep.mubr.bf16.mxu0 0
        %668 = vmatmul.mubr.bf16.gmra.mrb[0].mxu0 %v488
        %v669 = vpop.f32.mrb[0].mxu0
        %v670 = vadd.f32 0.0, %v669
        %v671 = vpop.f32.mrb[0].mxu0
        %v672 = vpop.f32.mrb[0].mxu0
        %v673 = vadd.f32 0.0, %v672
        %v674 = vpop.f32.mrb[0].mxu0
        %675 = vmatprep.mubr.bf16.mxu0 0
        %676 = vmatmul.mubr.bf16.gmra.mrb[0].mxu0 %v491
        %v677 = vpop.f32.mrb[0].mxu0
        %v678 = vadd.f32 0.0, %v677
        %v679 = vpop.f32.mrb[0].mxu0
        %v680 = vpop.f32.mrb[0].mxu0
        %v681 = vadd.f32 0.0, %v680
        %v682 = vpop.f32.mrb[0].mxu0
        %683 = vmatprep.mubr.bf16.mxu0 0
        %684 = vmatmul.mubr.bf16.gmra.mrb[0].mxu0 %v494
        %v685 = vpop.f32.mrb[0].mxu0
        %v686 = vadd.f32 0.0, %v685
        %v687 = vpop.f32.mrb[0].mxu0
        %v688 = vpop.f32.mrb[0].mxu0
        %v689 = vadd.f32 0.0, %v688
        %v690 = vpop.f32.mrb[0].mxu0
        %691 = vmatprep.mubr.bf16.mxu0 0
        %692 = vmatmul.mubr.bf16.gmra.mrb[0].mxu0 %v497
        %v693 = vpop.f32.mrb[0].mxu0
        %v694 = vadd.f32 0.0, %v693
        %v695 = vpop.f32.mrb[0].mxu0
        %v696 = vpop.f32.mrb[0].mxu0
        %v697 = vadd.f32 0.0, %v696
        %v698 = vpop.f32.mrb[0].mxu0
        %699 = vmatprep.mubr.bf16.mxu0 0
        %700 = vmatmul.mubr.bf16.gmra.mrb[0].mxu0 %v500
        %v701 = vpop.f32.mrb[0].mxu0
        %v702 = vadd.f32 0.0, %v701
        %v703 = vpop.f32.mrb[0].mxu0
        %v704 = vpop.f32.mrb[0].mxu0
        %v705 = vadd.f32 0.0, %v704
        %v706 = vpop.f32.mrb[0].mxu0
        %707 = vmatprep.mubr.bf16.mxu0 0
        %708 = vmatmul.mubr.bf16.gmra.mrb[0].mxu0 %v503
        %v709 = vpop.f32.mrb[0].mxu0
        %v710 = vadd.f32 0.0, %v709
        %v711 = vpop.f32.mrb[0].mxu0
        %v712 = vpop.f32.mrb[0].mxu0
        %v713 = vadd.f32 0.0, %v712
        %v714 = vpop.f32.mrb[0].mxu0
        %715 = vmatprep.mubr.bf16.mxu0 0
        %716 = vmatmul.mubr.bf16.gmra.mrb[0].mxu0 %v506
        %v717 = vpop.f32.mrb[0].mxu0
        %v718 = vadd.f32 0.0, %v717
        %v719 = vpop.f32.mrb[0].mxu0
        %v720 = vpop.f32.mrb[0].mxu0
        %v721 = vadd.f32 0.0, %v720
        %v722 = vpop.f32.mrb[0].mxu0
        %723 = vmatprep.mubr.bf16.mxu0 0
        %724 = vmatmul.mubr.bf16.gmra.mrb[0].mxu0 %v509
        %v725 = vpop.f32.mrb[0].mxu0
        %v726 = vadd.f32 0.0, %v725
        %v727 = vpop.f32.mrb[0].mxu0
        %v728 = vpop.f32.mrb[0].mxu0
        %v729 = vadd.f32 0.0, %v728
        %v730 = vpop.f32.mrb[0].mxu0
        %731 = vmatprep.mubr.bf16.mxu0 0
        %732 = vmatmul.mubr.bf16.gmra.mrb[0].mxu0 %v512
        %v733 = vpop.f32.mrb[0].mxu0
        %v734 = vadd.f32 0.0, %v733
        %v735 = vpop.f32.mrb[0].mxu0
        %v736 = vpop.f32.mrb[0].mxu0
        %v737 = vadd.f32 0.0, %v736
        %v738 = vpop.f32.mrb[0].mxu0
        %739 = vmatprep.mubr.bf16.mxu0 0
        %740 = vmatmul.mubr.bf16.gmra.mrb[0].mxu0 %v515
        %v741 = vpop.f32.mrb[0].mxu0
        %v742 = vadd.f32 0.0, %v741
        %v743 = vpop.f32.mrb[0].mxu0
        %v744 = vpop.f32.mrb[0].mxu0
        %v745 = vadd.f32 0.0, %v744
        %v746 = vpop.f32.mrb[0].mxu0
        %747 = vmatprep.mubr.bf16.mxu0 0
        %748 = vmatmul.mubr.bf16.gmra.mrb[0].mxu0 %v518
        %v749 = vpop.f32.mrb[0].mxu0
        %v750 = vadd.f32 0.0, %v749
        %v751 = vpop.f32.mrb[0].mxu0
        %v752 = vpop.f32.mrb[0].mxu0
        %v753 = vadd.f32 0.0, %v752
        %v754 = vpop.f32.mrb[0].mxu0
        %755 = vmatprep.mubr.bf16.mxu0 0
        %756 = vmatmul.mubr.bf16.gmra.mrb[0].mxu0 %v521
        %v757 = vpop.f32.mrb[0].mxu0
        %v758 = vadd.f32 0.0, %v757
        %v759 = vpop.f32.mrb[0].mxu0
        %v760 = vpop.f32.mrb[0].mxu0
        %v761 = vadd.f32 0.0, %v760
        %v762 = vpop.f32.mrb[0].mxu0
        %763 = vmatprep.mubr.bf16.mxu0 0
        %764 = vmatmul.mubr.bf16.gmra.mrb[0].mxu0 %v524
        %v765 = vpop.f32.mrb[0].mxu0
        %v766 = vadd.f32 0.0, %v765
        %v767 = vpop.f32.mrb[0].mxu0
        %v768 = vpop.f32.mrb[0].mxu0
        %v769 = vadd.f32 0.0, %v768
        %v770 = vpop.f32.mrb[0].mxu0
        %771 = vmatprep.mubr.bf16.mxu0 0
        %772 = vmatmul.mubr.bf16.gmra.mrb[0].mxu0 %v527
        %v773 = vpop.f32.mrb[0].mxu0
        %v774 = vadd.f32 0.0, %v773
        %v775 = vpop.f32.mrb[0].mxu0
        %v776 = vpop.f32.mrb[0].mxu0
        %v777 = vadd.f32 0.0, %v776
        %v778 = vpop.f32.mrb[0].mxu0
        %779 = vmatprep.mubr.bf16.mxu0 0
        %780 = vmatmul.mubr.bf16.gmra.mrb[0].mxu0 %v530
        %v781 = vpop.f32.mrb[0].mxu0
        %v782 = vadd.f32 0.0, %v781
        %v783 = vpop.f32.mrb[0].mxu0
        %v784 = vpop.f32.mrb[0].mxu0
        %v785 = vadd.f32 0.0, %v784
        %v786 = vpop.f32.mrb[0].mxu0
        %787 = vmatprep.mubr.bf16.mxu0 0
        %788 = vmatmul.mubr.bf16.gmra.mrb[0].mxu0 %v533
        %v789 = vpop.f32.mrb[0].mxu0
        %v790 = vadd.f32 0.0, %v789
        %v791 = vpop.f32.mrb[0].mxu0
        %v792 = vpop.f32.mrb[0].mxu0
        %v793 = vadd.f32 0.0, %v792
        %v794 = vpop.f32.mrb[0].mxu0
        %795 = vmatprep.mubr.bf16.mxu0 0
        %796 = vmatmul.mubr.bf16.gmra.mrb[0].mxu0 %v536
        %v797 = vpop.f32.mrb[0].mxu0
        %v798 = vadd.f32 0.0, %v797
        %v799 = vpop.f32.mrb[0].mxu0
        %v800 = vpop.f32.mrb[0].mxu0
        %v801 = vadd.f32 0.0, %v800
        %v802 = vpop.f32.mrb[0].mxu0
        %803 = vmatprep.mubr.bf16.mxu0 0
        %804 = vmatmul.mubr.bf16.gmra.mrb[0].mxu0 %v539
        %v805 = vpop.f32.mrb[0].mxu0
        %v806 = vadd.f32 0.0, %v805
        %v807 = vpop.f32.mrb[0].mxu0
        %v808 = vpop.f32.mrb[0].mxu0
        %v809 = vadd.f32 0.0, %v808
        %v810 = vpop.f32.mrb[0].mxu0
        %811 = vmatprep.mubr.bf16.mxu0 0
        %812 = vmatmul.mubr.bf16.gmra.mrb[0].mxu0 %v542
        %v813 = vpop.f32.mrb[0].mxu0
        %v814 = vadd.f32 0.0, %v813
        %v815 = vpop.f32.mrb[0].mxu0
        %v816 = vpop.f32.mrb[0].mxu0
        %v817 = vadd.f32 0.0, %v816
        %v818 = vpop.f32.mrb[0].mxu0
        %819 = vmatprep.mubr.bf16.mxu0 0
        %820 = vmatmul.mubr.bf16.gmra.mrb[0].mxu0 %v545
        %v821 = vpop.f32.mrb[0].mxu0
        %v822 = vadd.f32 0.0, %v821
        %v823 = vpop.f32.mrb[0].mxu0
        %v824 = vpop.f32.mrb[0].mxu0
        %v825 = vadd.f32 0.0, %v824
        %v826 = vpop.f32.mrb[0].mxu0
        %827 = vmatprep.mubr.bf16.mxu0 0
        %828 = vmatmul.mubr.bf16.gmra.mrb[0].mxu0 %v548
        %v829 = vpop.f32.mrb[0].mxu0
        %v830 = vadd.f32 0.0, %v829
        %v831 = vpop.f32.mrb[0].mxu0
        %v832 = vpop.f32.mrb[0].mxu0
        %v833 = vadd.f32 0.0, %v832
        %v834 = vpop.f32.mrb[0].mxu0
        %835 = vmatprep.mubr.bf16.mxu0 0
        %836 = vmatmul.mubr.bf16.gmra.mrb[0].mxu0 %v551
        %v837 = vpop.f32.mrb[0].mxu0
        %v838 = vadd.f32 0.0, %v837
        %v839 = vpop.f32.mrb[0].mxu0
        %v840 = vpop.f32.mrb[0].mxu0
        %v841 = vadd.f32 0.0, %v840
        %v842 = vpop.f32.mrb[0].mxu0
        %843 = vmatprep.mubr.bf16.mxu0 0
        %844 = vmatmul.mubr.bf16.gmra.mrb[0].mxu0 %v554
        %v845 = vpop.f32.mrb[0].mxu0
        %v846 = vadd.f32 0.0, %v845
        %v847 = vpop.f32.mrb[0].mxu0
        %v848 = vpop.f32.mrb[0].mxu0
        %v849 = vadd.f32 0.0, %v848
        %v850 = vpop.f32.mrb[0].mxu0
        %851 = vdwg.mxu0
        %v852 = vld [vmem:[%s2] sm:$0x1]
        %v854 = vlaneseq
        %v855 = vshrl.u32 %v854, 7
        %v856 = vsub.s32 0, %v855
        %v857 = vrot.slane %v852, %v856
        %v859 = vmul.f32 %v598, %v857
        %v860 = vmul.f32 %v601, %v857
        %v861 = vmul.f32 %v606, %v857
        %v862 = vmul.f32 %v609, %v857
        %v863 = vmul.f32 %v614, %v857
        %v864 = vmul.f32 %v617, %v857
        %v865 = vmul.f32 %v622, %v857
        %v866 = vmul.f32 %v625, %v857
        %v867 = vmul.f32 %v630, %v857
        %v868 = vmul.f32 %v633, %v857
        %v869 = vmul.f32 %v638, %v857
        %v870 = vmul.f32 %v641, %v857
        %v871 = vmul.f32 %v646, %v857
        %v872 = vmul.f32 %v649, %v857
        %v873 = vmul.f32 %v654, %v857
        %v874 = vmul.f32 %v657, %v857
        %v875 = vmul.f32 %v662, %v857
        %v876 = vmul.f32 %v665, %v857
        %v877 = vmul.f32 %v670, %v857
        %v878 = vmul.f32 %v673, %v857
        %v879 = vmul.f32 %v678, %v857
        %v880 = vmul.f32 %v681, %v857
        %v881 = vmul.f32 %v686, %v857
        %v882 = vmul.f32 %v689, %v857
        %v883 = vmul.f32 %v694, %v857
        %v884 = vmul.f32 %v697, %v857
        %v885 = vmul.f32 %v702, %v857
        %v886 = vmul.f32 %v705, %v857
        %v887 = vmul.f32 %v710, %v857
        %v888 = vmul.f32 %v713, %v857
        %v889 = vmul.f32 %v718, %v857
        %v890 = vmul.f32 %v721, %v857
        %v891 = vmul.f32 %v726, %v857
        %v892 = vmul.f32 %v729, %v857
        %v893 = vmul.f32 %v734, %v857
        %v894 = vmul.f32 %v737, %v857
        %v895 = vmul.f32 %v742, %v857
        %v896 = vmul.f32 %v745, %v857
        %v897 = vmul.f32 %v750, %v857
        %v898 = vmul.f32 %v753, %v857
        %v899 = vmul.f32 %v758, %v857
        %v900 = vmul.f32 %v761, %v857
        %v901 = vmul.f32 %v766, %v857
        %v902 = vmul.f32 %v769, %v857
        %v903 = vmul.f32 %v774, %v857
        %v904 = vmul.f32 %v777, %v857
        %v905 = vmul.f32 %v782, %v857
        %v906 = vmul.f32 %v785, %v857
        %v907 = vmul.f32 %v790, %v857
        %v908 = vmul.f32 %v793, %v857
        %v909 = vmul.f32 %v798, %v857
        %v910 = vmul.f32 %v801, %v857
        %v911 = vmul.f32 %v806, %v857
        %v912 = vmul.f32 %v809, %v857
        %v913 = vmul.f32 %v814, %v857
        %v914 = vmul.f32 %v817, %v857
        %v915 = vmul.f32 %v822, %v857
        %v916 = vmul.f32 %v825, %v857
        %v917 = vmul.f32 %v830, %v857
        %v918 = vmul.f32 %v833, %v857
        %v919 = vmul.f32 %v838, %v857
        %v920 = vmul.f32 %v841, %v857
        %v921 = vmul.f32 %v846, %v857
        %v922 = vmul.f32 %v849, %v857
        %v923 = vld [vmem:[%s3] sm:$0x1]
        %v925 = vlaneseq
        %v926 = vshrl.u32 %v925, 7
        %v927 = vsub.s32 0, %v926
        %v928 = vrot.slane %v923, %v927
        %v930 = vadd.f32 %v859, %v928
        %v931 = vadd.f32 %v860, %v928
        %v932 = vadd.f32 %v861, %v928
        %v933 = vadd.f32 %v862, %v928
        %v934 = vadd.f32 %v863, %v928
        %v935 = vadd.f32 %v864, %v928
        %v936 = vadd.f32 %v865, %v928
        %v937 = vadd.f32 %v866, %v928
        %v938 = vadd.f32 %v867, %v928
        %v939 = vadd.f32 %v868, %v928
        %v940 = vadd.f32 %v869, %v928
        %v941 = vadd.f32 %v870, %v928
        %v942 = vadd.f32 %v871, %v928
        %v943 = vadd.f32 %v872, %v928
        %v944 = vadd.f32 %v873, %v928
        %v945 = vadd.f32 %v874, %v928
        %v946 = vadd.f32 %v875, %v928
        %v947 = vadd.f32 %v876, %v928
        %v948 = vadd.f32 %v877, %v928
        %v949 = vadd.f32 %v878, %v928
        %v950 = vadd.f32 %v879, %v928
        %v951 = vadd.f32 %v880, %v928
        %v952 = vadd.f32 %v881, %v928
        %v953 = vadd.f32 %v882, %v928
        %v954 = vadd.f32 %v883, %v928
        %v955 = vadd.f32 %v884, %v928
        %v956 = vadd.f32 %v885, %v928
        %v957 = vadd.f32 %v886, %v928
        %v958 = vadd.f32 %v887, %v928
        %v959 = vadd.f32 %v888, %v928
        %v960 = vadd.f32 %v889, %v928
        %v961 = vadd.f32 %v890, %v928
        %v962 = vadd.f32 %v891, %v928
        %v963 = vadd.f32 %v892, %v928
        %v964 = vadd.f32 %v893, %v928
        %v965 = vadd.f32 %v894, %v928
        %v966 = vadd.f32 %v895, %v928
        %v967 = vadd.f32 %v896, %v928
        %v968 = vadd.f32 %v897, %v928
        %v969 = vadd.f32 %v898, %v928
        %v970 = vadd.f32 %v899, %v928
        %v971 = vadd.f32 %v900, %v928
        %v972 = vadd.f32 %v901, %v928
        %v973 = vadd.f32 %v902, %v928
        %v974 = vadd.f32 %v903, %v928
        %v975 = vadd.f32 %v904, %v928
        %v976 = vadd.f32 %v905, %v928
        %v977 = vadd.f32 %v906, %v928
        %v978 = vadd.f32 %v907, %v928
        %v979 = vadd.f32 %v908, %v928
        %v980 = vadd.f32 %v909, %v928
        %v981 = vadd.f32 %v910, %v928
        %v982 = vadd.f32 %v911, %v928
        %v983 = vadd.f32 %v912, %v928
        %v984 = vadd.f32 %v913, %v928
        %v985 = vadd.f32 %v914, %v928
        %v986 = vadd.f32 %v915, %v928
        %v987 = vadd.f32 %v916, %v928
        %v988 = vadd.f32 %v917, %v928
        %v989 = vadd.f32 %v918, %v928
        %v990 = vadd.f32 %v919, %v928
        %v991 = vadd.f32 %v920, %v928
        %v992 = vadd.f32 %v921, %v928
        %v993 = vadd.f32 %v922, %v928
        %v994 = vmax.f32 %v930, 0.0
        %v995 = vmax.f32 %v931, 0.0
        %v996 = vmax.f32 %v932, 0.0
        %v997 = vmax.f32 %v933, 0.0
        %v998 = vmax.f32 %v934, 0.0
        %v999 = vmax.f32 %v935, 0.0
        %v1000 = vmax.f32 %v936, 0.0
        %v1001 = vmax.f32 %v937, 0.0
        %v1002 = vmax.f32 %v938, 0.0
        %v1003 = vmax.f32 %v939, 0.0
        %v1004 = vmax.f32 %v940, 0.0
        %v1005 = vmax.f32 %v941, 0.0
        %v1006 = vmax.f32 %v942, 0.0
        %v1007 = vmax.f32 %v943, 0.0
        %v1008 = vmax.f32 %v944, 0.0
        %v1009 = vmax.f32 %v945, 0.0
        %v1010 = vmax.f32 %v946, 0.0
        %v1011 = vmax.f32 %v947, 0.0
        %v1012 = vmax.f32 %v948, 0.0
        %v1013 = vmax.f32 %v949, 0.0
        %v1014 = vmax.f32 %v950, 0.0
        %v1015 = vmax.f32 %v951, 0.0
        %v1016 = vmax.f32 %v952, 0.0
        %v1017 = vmax.f32 %v953, 0.0
        %v1018 = vmax.f32 %v954, 0.0
        %v1019 = vmax.f32 %v955, 0.0
        %v1020 = vmax.f32 %v956, 0.0
        %v1021 = vmax.f32 %v957, 0.0
        %v1022 = vmax.f32 %v958, 0.0
        %v1023 = vmax.f32 %v959, 0.0
        %v1024 = vmax.f32 %v960, 0.0
        %v1025 = vmax.f32 %v961, 0.0
        %v1026 = vmax.f32 %v962, 0.0
        %v1027 = vmax.f32 %v963, 0.0
        %v1028 = vmax.f32 %v964, 0.0
        %v1029 = vmax.f32 %v965, 0.0
        %v1030 = vmax.f32 %v966, 0.0
        %v1031 = vmax.f32 %v967, 0.0
        %v1032 = vmax.f32 %v968, 0.0
        %v1033 = vmax.f32 %v969, 0.0
        %v1034 = vmax.f32 %v970, 0.0
        %v1035 = vmax.f32 %v971, 0.0
        %v1036 = vmax.f32 %v972, 0.0
        %v1037 = vmax.f32 %v973, 0.0
        %v1038 = vmax.f32 %v974, 0.0
        %v1039 = vmax.f32 %v975, 0.0
        %v1040 = vmax.f32 %v976, 0.0
        %v1041 = vmax.f32 %v977, 0.0
        %v1042 = vmax.f32 %v978, 0.0
        %v1043 = vmax.f32 %v979, 0.0
        %v1044 = vmax.f32 %v980, 0.0
        %v1045 = vmax.f32 %v981, 0.0
        %v1046 = vmax.f32 %v982, 0.0
        %v1047 = vmax.f32 %v983, 0.0
        %v1048 = vmax.f32 %v984, 0.0
        %v1049 = vmax.f32 %v985, 0.0
        %v1050 = vmax.f32 %v986, 0.0
        %v1051 = vmax.f32 %v987, 0.0
        %v1052 = vmax.f32 %v988, 0.0
        %v1053 = vmax.f32 %v989, 0.0
        %v1054 = vmax.f32 %v990, 0.0
        %v1055 = vmax.f32 %v991, 0.0
        %v1056 = vmax.f32 %v992, 0.0
        %v1057 = vmax.f32 %v993, 0.0
        %v1058 = vpack.c.bf16 %v995, %v994
        %v1059 = vpack.c.bf16 %v997, %v996
        %v1060 = vpack.c.bf16 %v999, %v998
        %v1061 = vpack.c.bf16 %v1001, %v1000
        %v1062 = vpack.c.bf16 %v1003, %v1002
        %v1063 = vpack.c.bf16 %v1005, %v1004
        %v1064 = vpack.c.bf16 %v1007, %v1006
        %v1065 = vpack.c.bf16 %v1009, %v1008
        %v1066 = vpack.c.bf16 %v1011, %v1010
        %v1067 = vpack.c.bf16 %v1013, %v1012
        %v1068 = vpack.c.bf16 %v1015, %v1014
        %v1069 = vpack.c.bf16 %v1017, %v1016
        %v1070 = vpack.c.bf16 %v1019, %v1018
        %v1071 = vpack.c.bf16 %v1021, %v1020
        %v1072 = vpack.c.bf16 %v1023, %v1022
        %v1073 = vpack.c.bf16 %v1025, %v1024
        %v1074 = vpack.c.bf16 %v1027, %v1026
        %v1075 = vpack.c.bf16 %v1029, %v1028
        %v1076 = vpack.c.bf16 %v1031, %v1030
        %v1077 = vpack.c.bf16 %v1033, %v1032
        %v1078 = vpack.c.bf16 %v1035, %v1034
        %v1079 = vpack.c.bf16 %v1037, %v1036
        %v1080 = vpack.c.bf16 %v1039, %v1038
        %v1081 = vpack.c.bf16 %v1041, %v1040
        %v1082 = vpack.c.bf16 %v1043, %v1042
        %v1083 = vpack.c.bf16 %v1045, %v1044
        %v1084 = vpack.c.bf16 %v1047, %v1046
        %v1085 = vpack.c.bf16 %v1049, %v1048
        %v1086 = vpack.c.bf16 %v1051, %v1050
        %v1087 = vpack.c.bf16 %v1053, %v1052
        %v1088 = vpack.c.bf16 %v1055, %v1054
        %v1089 = vpack.c.bf16 %v1057, %v1056
        %v1122 = vunpack.c.l.b16 %v1058
        %v1123 = vunpack.c.h.b16 %v1058
        %v1124 = vunpack.c.l.b16 %v1059
        %v1125 = vunpack.c.h.b16 %v1059
        %v1126 = vunpack.c.l.b16 %v1060
        %v1127 = vunpack.c.h.b16 %v1060
        %v1128 = vunpack.c.l.b16 %v1061
        %v1129 = vunpack.c.h.b16 %v1061
        %v1130 = vunpack.c.l.b16 %v1062
        %v1131 = vunpack.c.h.b16 %v1062
        %v1132 = vunpack.c.l.b16 %v1063
        %v1133 = vunpack.c.h.b16 %v1063
        %v1134 = vunpack.c.l.b16 %v1064
        %v1135 = vunpack.c.h.b16 %v1064
        %v1136 = vunpack.c.l.b16 %v1065
        %v1137 = vunpack.c.h.b16 %v1065
        %v1138 = vunpack.c.l.b16 %v1066
        %v1139 = vunpack.c.h.b16 %v1066
        %v1140 = vunpack.c.l.b16 %v1067
        %v1141 = vunpack.c.h.b16 %v1067
        %v1142 = vunpack.c.l.b16 %v1068
        %v1143 = vunpack.c.h.b16 %v1068
        %v1144 = vunpack.c.l.b16 %v1069
        %v1145 = vunpack.c.h.b16 %v1069
        %v1146 = vunpack.c.l.b16 %v1070
        %v1147 = vunpack.c.h.b16 %v1070
        %v1148 = vunpack.c.l.b16 %v1071
        %v1149 = vunpack.c.h.b16 %v1071
        %v1150 = vunpack.c.l.b16 %v1072
        %v1151 = vunpack.c.h.b16 %v1072
        %v1152 = vunpack.c.l.b16 %v1073
        %v1153 = vunpack.c.h.b16 %v1073
        %v1154 = vunpack.c.l.b16 %v1074
        %v1155 = vunpack.c.h.b16 %v1074
        %v1156 = vunpack.c.l.b16 %v1075
        %v1157 = vunpack.c.h.b16 %v1075
        %v1158 = vunpack.c.l.b16 %v1076
        %v1159 = vunpack.c.h.b16 %v1076
        %v1160 = vunpack.c.l.b16 %v1077
        %v1161 = vunpack.c.h.b16 %v1077
        %v1162 = vunpack.c.l.b16 %v1078
        %v1163 = vunpack.c.h.b16 %v1078
        %v1164 = vunpack.c.l.b16 %v1079
        %v1165 = vunpack.c.h.b16 %v1079
        %v1166 = vunpack.c.l.b16 %v1080
        %v1167 = vunpack.c.h.b16 %v1080
        %v1168 = vunpack.c.l.b16 %v1081
        %v1169 = vunpack.c.h.b16 %v1081
        %v1170 = vunpack.c.l.b16 %v1082
        %v1171 = vunpack.c.h.b16 %v1082
        %v1172 = vunpack.c.l.b16 %v1083
        %v1173 = vunpack.c.h.b16 %v1083
        %v1174 = vunpack.c.l.b16 %v1084
        %v1175 = vunpack.c.h.b16 %v1084
        %v1176 = vunpack.c.l.b16 %v1085
        %v1177 = vunpack.c.h.b16 %v1085
        %v1178 = vunpack.c.l.b16 %v1086
        %v1179 = vunpack.c.h.b16 %v1086
        %v1180 = vunpack.c.l.b16 %v1087
        %v1181 = vunpack.c.h.b16 %v1087
        %v1182 = vunpack.c.l.b16 %v1088
        %v1183 = vunpack.c.h.b16 %v1088
        %v1184 = vunpack.c.l.b16 %v1089
        %v1185 = vunpack.c.h.b16 %v1089
        %v1186 = vpack.c.b16 %v1122, %v1122
        %v1187 = vpack.c.b16 %v1123, %v1123
        %v1188 = vpack.c.b16 %v1124, %v1124
        %v1189 = vpack.c.b16 %v1125, %v1125
        %v1190 = vpack.c.b16 %v1126, %v1126
        %v1191 = vpack.c.b16 %v1127, %v1127
        %v1192 = vpack.c.b16 %v1128, %v1128
        %v1193 = vpack.c.b16 %v1129, %v1129
        %v1194 = vpack.c.b16 %v1130, %v1130
        %v1195 = vpack.c.b16 %v1131, %v1131
        %v1196 = vpack.c.b16 %v1132, %v1132
        %v1197 = vpack.c.b16 %v1133, %v1133
        %v1198 = vpack.c.b16 %v1134, %v1134
        %v1199 = vpack.c.b16 %v1135, %v1135
        %v1200 = vpack.c.b16 %v1136, %v1136
        %v1201 = vpack.c.b16 %v1137, %v1137
        %v1202 = vpack.c.b16 %v1138, %v1138
        %v1203 = vpack.c.b16 %v1139, %v1139
        %v1204 = vpack.c.b16 %v1140, %v1140
        %v1205 = vpack.c.b16 %v1141, %v1141
        %v1206 = vpack.c.b16 %v1142, %v1142
        %v1207 = vpack.c.b16 %v1143, %v1143
        %v1208 = vpack.c.b16 %v1144, %v1144
        %v1209 = vpack.c.b16 %v1145, %v1145
        %v1210 = vpack.c.b16 %v1146, %v1146
        %v1211 = vpack.c.b16 %v1147, %v1147
        %v1212 = vpack.c.b16 %v1148, %v1148
        %v1213 = vpack.c.b16 %v1149, %v1149
        %v1214 = vpack.c.b16 %v1150, %v1150
        %v1215 = vpack.c.b16 %v1151, %v1151
        %v1216 = vpack.c.b16 %v1152, %v1152
        %v1217 = vpack.c.b16 %v1153, %v1153
        %v1218 = vpack.c.b16 %v1154, %v1154
        %v1219 = vpack.c.b16 %v1155, %v1155
        %v1220 = vpack.c.b16 %v1156, %v1156
        %v1221 = vpack.c.b16 %v1157, %v1157
        %v1222 = vpack.c.b16 %v1158, %v1158
        %v1223 = vpack.c.b16 %v1159, %v1159
        %v1224 = vpack.c.b16 %v1160, %v1160
        %v1225 = vpack.c.b16 %v1161, %v1161
        %v1226 = vpack.c.b16 %v1162, %v1162
        %v1227 = vpack.c.b16 %v1163, %v1163
        %v1228 = vpack.c.b16 %v1164, %v1164
        %v1229 = vpack.c.b16 %v1165, %v1165
        %v1230 = vpack.c.b16 %v1166, %v1166
        %v1231 = vpack.c.b16 %v1167, %v1167
        %v1232 = vpack.c.b16 %v1168, %v1168
        %v1233 = vpack.c.b16 %v1169, %v1169
        %v1234 = vpack.c.b16 %v1170, %v1170
        %v1235 = vpack.c.b16 %v1171, %v1171
        %v1236 = vpack.c.b16 %v1172, %v1172
        %v1237 = vpack.c.b16 %v1173, %v1173
        %v1238 = vpack.c.b16 %v1174, %v1174
        %v1239 = vpack.c.b16 %v1175, %v1175
        %v1240 = vpack.c.b16 %v1176, %v1176
        %v1241 = vpack.c.b16 %v1177, %v1177
        %v1242 = vpack.c.b16 %v1178, %v1178
        %v1243 = vpack.c.b16 %v1179, %v1179
        %v1244 = vpack.c.b16 %v1180, %v1180
        %v1245 = vpack.c.b16 %v1181, %v1181
        %v1246 = vpack.c.b16 %v1182, %v1182
        %v1247 = vpack.c.b16 %v1183, %v1183
        %v1248 = vpack.c.b16 %v1184, %v1184
        %v1249 = vpack.c.b16 %v1185, %v1185
        %1314 = vst [vmem:[%s199] sm:$0xf] %v1186
        %1315 = vst [vmem:[%s199 + $0x4] sm:$0xf] %v1187
        %1316 = vst [vmem:[%s199 + $0x8] sm:$0xf] %v1188
        %1317 = vst [vmem:[%s199 + $0xc] sm:$0xf] %v1189
        %1318 = vst [vmem:[%s199 + $0x10] sm:$0xf] %v1190
        %1319 = vst [vmem:[%s199 + $0x14] sm:$0xf] %v1191
        %1320 = vst [vmem:[%s199 + $0x18] sm:$0xf] %v1192
        %1321 = vst [vmem:[%s199 + $0x1c] sm:$0xf] %v1193
        %1322 = vst [vmem:[%s199 + $0x20] sm:$0xf] %v1194
        %1323 = vst [vmem:[%s199 + $0x24] sm:$0xf] %v1195
        %1324 = vst [vmem:[%s199 + $0x28] sm:$0xf] %v1196
        %1325 = vst [vmem:[%s199 + $0x2c] sm:$0xf] %v1197
        %1326 = vst [vmem:[%s199 + $0x30] sm:$0xf] %v1198
        %1327 = vst [vmem:[%s199 + $0x34] sm:$0xf] %v1199
        %1328 = vst [vmem:[%s199 + $0x38] sm:$0xf] %v1200
        %1329 = vst [vmem:[%s199 + $0x3c] sm:$0xf] %v1201
        %1330 = vst [vmem:[%s199 + $0x40] sm:$0xf] %v1202
        %1331 = vst [vmem:[%s199 + $0x44] sm:$0xf] %v1203
        %1332 = vst [vmem:[%s199 + $0x48] sm:$0xf] %v1204
        %1333 = vst [vmem:[%s199 + $0x4c] sm:$0xf] %v1205
        %1334 = vst [vmem:[%s199 + $0x50] sm:$0xf] %v1206
        %1335 = vst [vmem:[%s199 + $0x54] sm:$0xf] %v1207
        %1336 = vst [vmem:[%s199 + $0x58] sm:$0xf] %v1208
        %1337 = vst [vmem:[%s199 + $0x5c] sm:$0xf] %v1209
        %1338 = vst [vmem:[%s199 + $0x60] sm:$0xf] %v1210
        %1339 = vst [vmem:[%s199 + $0x64] sm:$0xf] %v1211
        %1340 = vst [vmem:[%s199 + $0x68] sm:$0xf] %v1212
        %1341 = vst [vmem:[%s199 + $0x6c] sm:$0xf] %v1213
        %1342 = vst [vmem:[%s199 + $0x70] sm:$0xf] %v1214
        %1343 = vst [vmem:[%s199 + $0x74] sm:$0xf] %v1215
        %1344 = vst [vmem:[%s199 + $0x78] sm:$0xf] %v1216
        %1345 = vst [vmem:[%s199 + $0x7c] sm:$0xf] %v1217
        %1346 = vst [vmem:[%s199 + $0x80] sm:$0xf] %v1218
        %1347 = vst [vmem:[%s199 + $0x84] sm:$0xf] %v1219
        %1348 = vst [vmem:[%s199 + $0x88] sm:$0xf] %v1220
        %1349 = vst [vmem:[%s199 + $0x8c] sm:$0xf] %v1221
        %1350 = vst [vmem:[%s199 + $0x90] sm:$0xf] %v1222
        %1351 = vst [vmem:[%s199 + $0x94] sm:$0xf] %v1223
        %1352 = vst [vmem:[%s199 + $0x98] sm:$0xf] %v1224
        %1353 = vst [vmem:[%s199 + $0x9c] sm:$0xf] %v1225
        %1354 = vst [vmem:[%s199 + $0xa0] sm:$0xf] %v1226
        %1355 = vst [vmem:[%s199 + $0xa4] sm:$0xf] %v1227
        %1356 = vst [vmem:[%s199 + $0xa8] sm:$0xf] %v1228
        %1357 = vst [vmem:[%s199 + $0xac] sm:$0xf] %v1229
        %1358 = vst [vmem:[%s199 + $0xb0] sm:$0xf] %v1230
        %1359 = vst [vmem:[%s199 + $0xb4] sm:$0xf] %v1231
        %1360 = vst [vmem:[%s199 + $0xb8] sm:$0xf] %v1232
        %1361 = vst [vmem:[%s199 + $0xbc] sm:$0xf] %v1233
        %1362 = vst [vmem:[%s199 + $0xc0] sm:$0xf] %v1234
        %1363 = vst [vmem:[%s199 + $0xc4] sm:$0xf] %v1235
        %1364 = vst [vmem:[%s199 + $0xc8] sm:$0xf] %v1236
        %1365 = vst [vmem:[%s199 + $0xcc] sm:$0xf] %v1237
        %1366 = vst [vmem:[%s199 + $0xd0] sm:$0xf] %v1238
        %1367 = vst [vmem:[%s199 + $0xd4] sm:$0xf] %v1239
        %1368 = vst [vmem:[%s199 + $0xd8] sm:$0xf] %v1240
        %1369 = vst [vmem:[%s199 + $0xdc] sm:$0xf] %v1241
        %1370 = vst [vmem:[%s199 + $0xe0] sm:$0xf] %v1242
        %1371 = vst [vmem:[%s199 + $0xe4] sm:$0xf] %v1243
        %1372 = vst [vmem:[%s199 + $0xe8] sm:$0xf] %v1244
        %1373 = vst [vmem:[%s199 + $0xec] sm:$0xf] %v1245
        %1374 = vst [vmem:[%s199 + $0xf0] sm:$0xf] %v1246
        %1375 = vst [vmem:[%s199 + $0xf4] sm:$0xf] %v1247
        %1376 = vst [vmem:[%s199 + $0xf8] sm:$0xf] %v1248
        %1377 = vst [vmem:[%s199 + $0xfc] sm:$0xf] %v1249
        %s1378 = sand.u32 %s112, 1
        %s1379 = sand.u32 %s112, 1
        %s1380 = smul.addr %s1379, 256
        %s1381 = scalar_lea.vmem [#allocation2], %s1380
        // Predicated region
        $region37: #{model_forward.6} parent=35 // pred_check
          %p1382 = pneg %p122
        $region38: #{model_forward.6} parent=35 // pred_check_branch
          %1384 = sbr.rel (%p1382) target = $region40
        $region39: #{model_forward.6} parent=35 // pred_region
          %s1385 = smul.u32 64, %s15
          %s1386 = ssub.s32 144, %s1385
          %p1387 = scmp.lt.s32.totalorder %s1386, 64
          %s1388 = scalar_select %p1387, %s1386, 64
          %s1389 = smul.u32 64, %s1388
          %p1390 = scmp.ne.s32.totalorder 0, %s1389
          %s1391 = smul.addr %s1385, 4
          %s1392 = scalar_lea.vmem %s4, %s1391
          // Predicated region
          $region41: #{model_forward.6} parent=39 // pred_check
            %p1393 = pneg %p1390
          $region42: #{model_forward.6} parent=39 // pred_check_branch
            %1395 = sbr.rel (%p1393) target = $region44
          $region43: #{model_forward.6} parent=39 // pred_region
            // Predicated region
            $region45: #{model_forward.6} parent=43 // pred_check
              _
            $region46: #{model_forward.6} parent=43 // pred_check_branch
              %1397 = sbr.rel target = $region48
            $region47: #{model_forward.6} parent=43 // pred_region
              // Predicated region
              $region67: #{model_forward.6} parent=47 // pred_check
                _
              $region68: #{model_forward.6} parent=47 // pred_check_branch
                %1572 = sbr.rel (0) target = $region70
              $region69: #{model_forward.6} parent=47 // pred_region
                %s1574 = sshrl.u32 %s1388, 6
                // While loop
                $region71: #{model_forward.6} parent=69 // loop_pre_header
                  _
                $region72: #{model_forward.6} parent=69 // loop_header
                  %s1576 = sphi 0, %s1578
                  %p1577 = scmp.ge.s32.totalorder %s1576, %s1574
                  %s1581 = sphi 0, %s1714
                  %s1582 = sphi %s1381, %s1717
                  %s1583 = sphi %s1392, %s1718
                $region73: #{model_forward.6} parent=69 // loop_header_branch
                  %1580 = sbr.rel (%p1577) target = $region77
                $region74: #{model_forward.6} parent=69 // loop_body
                  %v1584 = vld [vmem:[%s1582] sm:$0xf]
                  %1585 = vst [vmem:[%s1583] sm:$0xf] %v1584
                  %v1586 = vld [vmem:[%s1582 + $0x4] sm:$0xf]
                  %1587 = vst [vmem:[%s1583 + $0x4] sm:$0xf] %v1586
                  %v1588 = vld [vmem:[%s1582 + $0x8] sm:$0xf]
                  %1589 = vst [vmem:[%s1583 + $0x8] sm:$0xf] %v1588
                  %v1590 = vld [vmem:[%s1582 + $0xc] sm:$0xf]
                  %1591 = vst [vmem:[%s1583 + $0xc] sm:$0xf] %v1590
                  %v1592 = vld [vmem:[%s1582 + $0x10] sm:$0xf]
                  %1593 = vst [vmem:[%s1583 + $0x10] sm:$0xf] %v1592
                  %v1594 = vld [vmem:[%s1582 + $0x14] sm:$0xf]
                  %1595 = vst [vmem:[%s1583 + $0x14] sm:$0xf] %v1594
                  %v1596 = vld [vmem:[%s1582 + $0x18] sm:$0xf]
                  %1597 = vst [vmem:[%s1583 + $0x18] sm:$0xf] %v1596
                  %v1598 = vld [vmem:[%s1582 + $0x1c] sm:$0xf]
                  %1599 = vst [vmem:[%s1583 + $0x1c] sm:$0xf] %v1598
                  %v1600 = vld [vmem:[%s1582 + $0x20] sm:$0xf]
                  %1601 = vst [vmem:[%s1583 + $0x20] sm:$0xf] %v1600
                  %v1602 = vld [vmem:[%s1582 + $0x24] sm:$0xf]
                  %1603 = vst [vmem:[%s1583 + $0x24] sm:$0xf] %v1602
                  %v1604 = vld [vmem:[%s1582 + $0x28] sm:$0xf]
                  %1605 = vst [vmem:[%s1583 + $0x28] sm:$0xf] %v1604
                  %v1606 = vld [vmem:[%s1582 + $0x2c] sm:$0xf]
                  %1607 = vst [vmem:[%s1583 + $0x2c] sm:$0xf] %v1606
                  %v1608 = vld [vmem:[%s1582 + $0x30] sm:$0xf]
                  %1609 = vst [vmem:[%s1583 + $0x30] sm:$0xf] %v1608
                  %v1610 = vld [vmem:[%s1582 + $0x34] sm:$0xf]
                  %1611 = vst [vmem:[%s1583 + $0x34] sm:$0xf] %v1610
                  %v1612 = vld [vmem:[%s1582 + $0x38] sm:$0xf]
                  %1613 = vst [vmem:[%s1583 + $0x38] sm:$0xf] %v1612
                  %v1614 = vld [vmem:[%s1582 + $0x3c] sm:$0xf]
                  %1615 = vst [vmem:[%s1583 + $0x3c] sm:$0xf] %v1614
                  %v1616 = vld [vmem:[%s1582 + $0x40] sm:$0xf]
                  %1617 = vst [vmem:[%s1583 + $0x40] sm:$0xf] %v1616
                  %v1618 = vld [vmem:[%s1582 + $0x44] sm:$0xf]
                  %1619 = vst [vmem:[%s1583 + $0x44] sm:$0xf] %v1618
                  %v1620 = vld [vmem:[%s1582 + $0x48] sm:$0xf]
                  %1621 = vst [vmem:[%s1583 + $0x48] sm:$0xf] %v1620
                  %v1622 = vld [vmem:[%s1582 + $0x4c] sm:$0xf]
                  %1623 = vst [vmem:[%s1583 + $0x4c] sm:$0xf] %v1622
                  %v1624 = vld [vmem:[%s1582 + $0x50] sm:$0xf]
                  %1625 = vst [vmem:[%s1583 + $0x50] sm:$0xf] %v1624
                  %v1626 = vld [vmem:[%s1582 + $0x54] sm:$0xf]
                  %1627 = vst [vmem:[%s1583 + $0x54] sm:$0xf] %v1626
                  %v1628 = vld [vmem:[%s1582 + $0x58] sm:$0xf]
                  %1629 = vst [vmem:[%s1583 + $0x58] sm:$0xf] %v1628
                  %v1630 = vld [vmem:[%s1582 + $0x5c] sm:$0xf]
                  %1631 = vst [vmem:[%s1583 + $0x5c] sm:$0xf] %v1630
                  %v1632 = vld [vmem:[%s1582 + $0x60] sm:$0xf]
                  %1633 = vst [vmem:[%s1583 + $0x60] sm:$0xf] %v1632
                  %v1634 = vld [vmem:[%s1582 + $0x64] sm:$0xf]
                  %1635 = vst [vmem:[%s1583 + $0x64] sm:$0xf] %v1634
                  %v1636 = vld [vmem:[%s1582 + $0x68] sm:$0xf]
                  %1637 = vst [vmem:[%s1583 + $0x68] sm:$0xf] %v1636
                  %v1638 = vld [vmem:[%s1582 + $0x6c] sm:$0xf]
                  %1639 = vst [vmem:[%s1583 + $0x6c] sm:$0xf] %v1638
                  %v1640 = vld [vmem:[%s1582 + $0x70] sm:$0xf]
                  %1641 = vst [vmem:[%s1583 + $0x70] sm:$0xf] %v1640
                  %v1642 = vld [vmem:[%s1582 + $0x74] sm:$0xf]
                  %1643 = vst [vmem:[%s1583 + $0x74] sm:$0xf] %v1642
                  %v1644 = vld [vmem:[%s1582 + $0x78] sm:$0xf]
                  %1645 = vst [vmem:[%s1583 + $0x78] sm:$0xf] %v1644
                  %v1646 = vld [vmem:[%s1582 + $0x7c] sm:$0xf]
                  %1647 = vst [vmem:[%s1583 + $0x7c] sm:$0xf] %v1646
                  %v1648 = vld [vmem:[%s1582 + $0x80] sm:$0xf]
                  %1649 = vst [vmem:[%s1583 + $0x80] sm:$0xf] %v1648
                  %v1650 = vld [vmem:[%s1582 + $0x84] sm:$0xf]
                  %1651 = vst [vmem:[%s1583 + $0x84] sm:$0xf] %v1650
                  %v1652 = vld [vmem:[%s1582 + $0x88] sm:$0xf]
                  %1653 = vst [vmem:[%s1583 + $0x88] sm:$0xf] %v1652
                  %v1654 = vld [vmem:[%s1582 + $0x8c] sm:$0xf]
                  %1655 = vst [vmem:[%s1583 + $0x8c] sm:$0xf] %v1654
                  %v1656 = vld [vmem:[%s1582 + $0x90] sm:$0xf]
                  %1657 = vst [vmem:[%s1583 + $0x90] sm:$0xf] %v1656
                  %v1658 = vld [vmem:[%s1582 + $0x94] sm:$0xf]
                  %1659 = vst [vmem:[%s1583 + $0x94] sm:$0xf] %v1658
                  %v1660 = vld [vmem:[%s1582 + $0x98] sm:$0xf]
                  %1661 = vst [vmem:[%s1583 + $0x98] sm:$0xf] %v1660
                  %v1662 = vld [vmem:[%s1582 + $0x9c] sm:$0xf]
                  %1663 = vst [vmem:[%s1583 + $0x9c] sm:$0xf] %v1662
                  %v1664 = vld [vmem:[%s1582 + $0xa0] sm:$0xf]
                  %1665 = vst [vmem:[%s1583 + $0xa0] sm:$0xf] %v1664
                  %v1666 = vld [vmem:[%s1582 + $0xa4] sm:$0xf]
                  %1667 = vst [vmem:[%s1583 + $0xa4] sm:$0xf] %v1666
                  %v1668 = vld [vmem:[%s1582 + $0xa8] sm:$0xf]
                  %1669 = vst [vmem:[%s1583 + $0xa8] sm:$0xf] %v1668
                  %v1670 = vld [vmem:[%s1582 + $0xac] sm:$0xf]
                  %1671 = vst [vmem:[%s1583 + $0xac] sm:$0xf] %v1670
                  %v1672 = vld [vmem:[%s1582 + $0xb0] sm:$0xf]
                  %1673 = vst [vmem:[%s1583 + $0xb0] sm:$0xf] %v1672
                  %v1674 = vld [vmem:[%s1582 + $0xb4] sm:$0xf]
                  %1675 = vst [vmem:[%s1583 + $0xb4] sm:$0xf] %v1674
                  %v1676 = vld [vmem:[%s1582 + $0xb8] sm:$0xf]
                  %1677 = vst [vmem:[%s1583 + $0xb8] sm:$0xf] %v1676
                  %v1678 = vld [vmem:[%s1582 + $0xbc] sm:$0xf]
                  %1679 = vst [vmem:[%s1583 + $0xbc] sm:$0xf] %v1678
                  %v1680 = vld [vmem:[%s1582 + $0xc0] sm:$0xf]
                  %1681 = vst [vmem:[%s1583 + $0xc0] sm:$0xf] %v1680
                  %v1682 = vld [vmem:[%s1582 + $0xc4] sm:$0xf]
                  %1683 = vst [vmem:[%s1583 + $0xc4] sm:$0xf] %v1682
                  %v1684 = vld [vmem:[%s1582 + $0xc8] sm:$0xf]
                  %1685 = vst [vmem:[%s1583 + $0xc8] sm:$0xf] %v1684
                  %v1686 = vld [vmem:[%s1582 + $0xcc] sm:$0xf]
                  %1687 = vst [vmem:[%s1583 + $0xcc] sm:$0xf] %v1686
                  %v1688 = vld [vmem:[%s1582 + $0xd0] sm:$0xf]
                  %1689 = vst [vmem:[%s1583 + $0xd0] sm:$0xf] %v1688
                  %v1690 = vld [vmem:[%s1582 + $0xd4] sm:$0xf]
                  %1691 = vst [vmem:[%s1583 + $0xd4] sm:$0xf] %v1690
                  %v1692 = vld [vmem:[%s1582 + $0xd8] sm:$0xf]
                  %1693 = vst [vmem:[%s1583 + $0xd8] sm:$0xf] %v1692
                  %v1694 = vld [vmem:[%s1582 + $0xdc] sm:$0xf]
                  %1695 = vst [vmem:[%s1583 + $0xdc] sm:$0xf] %v1694
                  %v1696 = vld [vmem:[%s1582 + $0xe0] sm:$0xf]
                  %1697 = vst [vmem:[%s1583 + $0xe0] sm:$0xf] %v1696
                  %v1698 = vld [vmem:[%s1582 + $0xe4] sm:$0xf]
                  %1699 = vst [vmem:[%s1583 + $0xe4] sm:$0xf] %v1698
                  %v1700 = vld [vmem:[%s1582 + $0xe8] sm:$0xf]
                  %1701 = vst [vmem:[%s1583 + $0xe8] sm:$0xf] %v1700
                  %v1702 = vld [vmem:[%s1582 + $0xec] sm:$0xf]
                  %1703 = vst [vmem:[%s1583 + $0xec] sm:$0xf] %v1702
                  %v1704 = vld [vmem:[%s1582 + $0xf0] sm:$0xf]
                  %1705 = vst [vmem:[%s1583 + $0xf0] sm:$0xf] %v1704
                  %v1706 = vld [vmem:[%s1582 + $0xf4] sm:$0xf]
                  %1707 = vst [vmem:[%s1583 + $0xf4] sm:$0xf] %v1706
                  %v1708 = vld [vmem:[%s1582 + $0xf8] sm:$0xf]
                  %1709 = vst [vmem:[%s1583 + $0xf8] sm:$0xf] %v1708
                  %v1710 = vld [vmem:[%s1582 + $0xfc] sm:$0xf]
                  %1711 = vst [vmem:[%s1583 + $0xfc] sm:$0xf] %v1710
                  %s1712 = sadd.s32 1, %s1581
                  %p1713 = scmp.ge.s32.totalorder %s1712, %s1574
                  %s1714 = scalar_select %p1713, 0, %s1712
                  %s1715 = smul.u32 %s1714, 256
                  %s1716 = smul.u32 %s1714, 256
                  %s1717 = scalar_lea.vmem %s1381, %s1715 [#allocation2]
                  %s1718 = scalar_lea.vmem %s1392, %s1716
                $region75: #{model_forward.6} parent=69 // loop_footer
                  %s1578 = sadd.s32 %s1576, 1
                $region76: #{model_forward.6} parent=69 // loop_footer_branch
                  %1575 = sbr.rel target = $region72
                $region77: #{model_forward.6} parent=69 // loop_exit
                  _
                %s1719 = sshrl.u32 %s1388, 6
                %s1720 = sand.u32 %s1388, 63
                %s1721 = smul.u32 %s1719, 64
                %s1722 = smul.u32 4, %s1721
                %s1723 = scalar_lea.vmem %s1381, %s1722 [#allocation2]
                %s1724 = smul.u32 4, %s1721
                %s1725 = scalar_lea.vmem %s1392, %s1724
                // While loop
                $region78: #{model_forward.6} parent=69 // loop_pre_header
                  _
                $region79: #{model_forward.6} parent=69 // loop_header
                  %s1727 = sphi 0, %s1729
                  %p1728 = scmp.ge.s32.totalorder %s1727, %s1720
                  %s1732 = sphi 0, %s1739
                  %s1733 = sphi %s1723, %s1742
                  %s1734 = sphi %s1725, %s1743
                $region80: #{model_forward.6} parent=69 // loop_header_branch
                  %1731 = sbr.rel (%p1728) target = $region84
                $region81: #{model_forward.6} parent=69 // loop_body
                  %v1735 = vld [vmem:[%s1733] sm:$0xf]
                  %1736 = vst [vmem:[%s1734] sm:$0xf] %v1735
                  %s1737 = sadd.s32 1, %s1732
                  %p1738 = scmp.ge.s32.totalorder %s1737, %s1720
                  %s1739 = scalar_select %p1738, 0, %s1737
                  %s1740 = smul.u32 %s1739, 4
                  %s1741 = smul.u32 %s1739, 4
                  %s1742 = scalar_lea.vmem %s1723, %s1740 [#allocation2]
                  %s1743 = scalar_lea.vmem %s1725, %s1741
                $region82: #{model_forward.6} parent=69 // loop_footer
                  %s1729 = sadd.s32 %s1727, 1
                $region83: #{model_forward.6} parent=69 // loop_footer_branch
                  %1726 = sbr.rel target = $region79
                $region84: #{model_forward.6} parent=69 // loop_exit
                  _
              $region70: #{model_forward.6} parent=47 // pred_fallthru
                _
            $region48: #{model_forward.6} parent=43 // pred_fallthru
              _
            // Predicated region
            $region49: #{model_forward.6} parent=43 // pred_check
              _
            $region50: #{model_forward.6} parent=43 // pred_check_branch
              %1399 = sbr.rel (0) target = $region52
            $region51: #{model_forward.6} parent=43 // pred_region
              %s1401 = sshrl.u32 %s1388, 6
              // While loop
              $region53: #{model_forward.6} parent=51 // loop_pre_header
                _
              $region54: #{model_forward.6} parent=51 // loop_header
                %s1403 = sphi 0, %s1405
                %p1404 = scmp.ge.s32.totalorder %s1403, %s1401
                %s1408 = sphi 0, %s1541
                %s1409 = sphi %s1381, %s1544
                %s1410 = sphi %s1392, %s1545
              $region55: #{model_forward.6} parent=51 // loop_header_branch
                %1407 = sbr.rel (%p1404) target = $region59
              $region56: #{model_forward.6} parent=51 // loop_body
                %v1411 = vld [vmem:[%s1409] sm:$0xf]
                %1412 = vst [vmem:[%s1410] sm:$0xf] %v1411
                %v1413 = vld [vmem:[%s1409 + $0x4] sm:$0xf]
                %1414 = vst [vmem:[%s1410 + $0x4] sm:$0xf] %v1413
                %v1415 = vld [vmem:[%s1409 + $0x8] sm:$0xf]
                %1416 = vst [vmem:[%s1410 + $0x8] sm:$0xf] %v1415
                %v1417 = vld [vmem:[%s1409 + $0xc] sm:$0xf]
                %1418 = vst [vmem:[%s1410 + $0xc] sm:$0xf] %v1417
                %v1419 = vld [vmem:[%s1409 + $0x10] sm:$0xf]
                %1420 = vst [vmem:[%s1410 + $0x10] sm:$0xf] %v1419
                %v1421 = vld [vmem:[%s1409 + $0x14] sm:$0xf]
                %1422 = vst [vmem:[%s1410 + $0x14] sm:$0xf] %v1421
                %v1423 = vld [vmem:[%s1409 + $0x18] sm:$0xf]
                %1424 = vst [vmem:[%s1410 + $0x18] sm:$0xf] %v1423
                %v1425 = vld [vmem:[%s1409 + $0x1c] sm:$0xf]
                %1426 = vst [vmem:[%s1410 + $0x1c] sm:$0xf] %v1425
                %v1427 = vld [vmem:[%s1409 + $0x20] sm:$0xf]
                %1428 = vst [vmem:[%s1410 + $0x20] sm:$0xf] %v1427
                %v1429 = vld [vmem:[%s1409 + $0x24] sm:$0xf]
                %1430 = vst [vmem:[%s1410 + $0x24] sm:$0xf] %v1429
                %v1431 = vld [vmem:[%s1409 + $0x28] sm:$0xf]
                %1432 = vst [vmem:[%s1410 + $0x28] sm:$0xf] %v1431
                %v1433 = vld [vmem:[%s1409 + $0x2c] sm:$0xf]
                %1434 = vst [vmem:[%s1410 + $0x2c] sm:$0xf] %v1433
                %v1435 = vld [vmem:[%s1409 + $0x30] sm:$0xf]
                %1436 = vst [vmem:[%s1410 + $0x30] sm:$0xf] %v1435
                %v1437 = vld [vmem:[%s1409 + $0x34] sm:$0xf]
                %1438 = vst [vmem:[%s1410 + $0x34] sm:$0xf] %v1437
                %v1439 = vld [vmem:[%s1409 + $0x38] sm:$0xf]
                %1440 = vst [vmem:[%s1410 + $0x38] sm:$0xf] %v1439
                %v1441 = vld [vmem:[%s1409 + $0x3c] sm:$0xf]
                %1442 = vst [vmem:[%s1410 + $0x3c] sm:$0xf] %v1441
                %v1443 = vld [vmem:[%s1409 + $0x40] sm:$0xf]
                %1444 = vst [vmem:[%s1410 + $0x40] sm:$0xf] %v1443
                %v1445 = vld [vmem:[%s1409 + $0x44] sm:$0xf]
                %1446 = vst [vmem:[%s1410 + $0x44] sm:$0xf] %v1445
                %v1447 = vld [vmem:[%s1409 + $0x48] sm:$0xf]
                %1448 = vst [vmem:[%s1410 + $0x48] sm:$0xf] %v1447
                %v1449 = vld [vmem:[%s1409 + $0x4c] sm:$0xf]
                %1450 = vst [vmem:[%s1410 + $0x4c] sm:$0xf] %v1449
                %v1451 = vld [vmem:[%s1409 + $0x50] sm:$0xf]
                %1452 = vst [vmem:[%s1410 + $0x50] sm:$0xf] %v1451
                %v1453 = vld [vmem:[%s1409 + $0x54] sm:$0xf]
                %1454 = vst [vmem:[%s1410 + $0x54] sm:$0xf] %v1453
                %v1455 = vld [vmem:[%s1409 + $0x58] sm:$0xf]
                %1456 = vst [vmem:[%s1410 + $0x58] sm:$0xf] %v1455
                %v1457 = vld [vmem:[%s1409 + $0x5c] sm:$0xf]
                %1458 = vst [vmem:[%s1410 + $0x5c] sm:$0xf] %v1457
                %v1459 = vld [vmem:[%s1409 + $0x60] sm:$0xf]
                %1460 = vst [vmem:[%s1410 + $0x60] sm:$0xf] %v1459
                %v1461 = vld [vmem:[%s1409 + $0x64] sm:$0xf]
                %1462 = vst [vmem:[%s1410 + $0x64] sm:$0xf] %v1461
                %v1463 = vld [vmem:[%s1409 + $0x68] sm:$0xf]
                %1464 = vst [vmem:[%s1410 + $0x68] sm:$0xf] %v1463
                %v1465 = vld [vmem:[%s1409 + $0x6c] sm:$0xf]
                %1466 = vst [vmem:[%s1410 + $0x6c] sm:$0xf] %v1465
                %v1467 = vld [vmem:[%s1409 + $0x70] sm:$0xf]
                %1468 = vst [vmem:[%s1410 + $0x70] sm:$0xf] %v1467
                %v1469 = vld [vmem:[%s1409 + $0x74] sm:$0xf]
                %1470 = vst [vmem:[%s1410 + $0x74] sm:$0xf] %v1469
                %v1471 = vld [vmem:[%s1409 + $0x78] sm:$0xf]
                %1472 = vst [vmem:[%s1410 + $0x78] sm:$0xf] %v1471
                %v1473 = vld [vmem:[%s1409 + $0x7c] sm:$0xf]
                %1474 = vst [vmem:[%s1410 + $0x7c] sm:$0xf] %v1473
                %v1475 = vld [vmem:[%s1409 + $0x80] sm:$0xf]
                %1476 = vst [vmem:[%s1410 + $0x80] sm:$0xf] %v1475
                %v1477 = vld [vmem:[%s1409 + $0x84] sm:$0xf]
                %1478 = vst [vmem:[%s1410 + $0x84] sm:$0xf] %v1477
                %v1479 = vld [vmem:[%s1409 + $0x88] sm:$0xf]
                %1480 = vst [vmem:[%s1410 + $0x88] sm:$0xf] %v1479
                %v1481 = vld [vmem:[%s1409 + $0x8c] sm:$0xf]
                %1482 = vst [vmem:[%s1410 + $0x8c] sm:$0xf] %v1481
                %v1483 = vld [vmem:[%s1409 + $0x90] sm:$0xf]
                %1484 = vst [vmem:[%s1410 + $0x90] sm:$0xf] %v1483
                %v1485 = vld [vmem:[%s1409 + $0x94] sm:$0xf]
                %1486 = vst [vmem:[%s1410 + $0x94] sm:$0xf] %v1485
                %v1487 = vld [vmem:[%s1409 + $0x98] sm:$0xf]
                %1488 = vst [vmem:[%s1410 + $0x98] sm:$0xf] %v1487
                %v1489 = vld [vmem:[%s1409 + $0x9c] sm:$0xf]
                %1490 = vst [vmem:[%s1410 + $0x9c] sm:$0xf] %v1489
                %v1491 = vld [vmem:[%s1409 + $0xa0] sm:$0xf]
                %1492 = vst [vmem:[%s1410 + $0xa0] sm:$0xf] %v1491
                %v1493 = vld [vmem:[%s1409 + $0xa4] sm:$0xf]
                %1494 = vst [vmem:[%s1410 + $0xa4] sm:$0xf] %v1493
                %v1495 = vld [vmem:[%s1409 + $0xa8] sm:$0xf]
                %1496 = vst [vmem:[%s1410 + $0xa8] sm:$0xf] %v1495
                %v1497 = vld [vmem:[%s1409 + $0xac] sm:$0xf]
                %1498 = vst [vmem:[%s1410 + $0xac] sm:$0xf] %v1497
                %v1499 = vld [vmem:[%s1409 + $0xb0] sm:$0xf]
                %1500 = vst [vmem:[%s1410 + $0xb0] sm:$0xf] %v1499
                %v1501 = vld [vmem:[%s1409 + $0xb4] sm:$0xf]
                %1502 = vst [vmem:[%s1410 + $0xb4] sm:$0xf] %v1501
                %v1503 = vld [vmem:[%s1409 + $0xb8] sm:$0xf]
                %1504 = vst [vmem:[%s1410 + $0xb8] sm:$0xf] %v1503
                %v1505 = vld [vmem:[%s1409 + $0xbc] sm:$0xf]
                %1506 = vst [vmem:[%s1410 + $0xbc] sm:$0xf] %v1505
                %v1507 = vld [vmem:[%s1409 + $0xc0] sm:$0xf]
                %1508 = vst [vmem:[%s1410 + $0xc0] sm:$0xf] %v1507
                %v1509 = vld [vmem:[%s1409 + $0xc4] sm:$0xf]
                %1510 = vst [vmem:[%s1410 + $0xc4] sm:$0xf] %v1509
                %v1511 = vld [vmem:[%s1409 + $0xc8] sm:$0xf]
                %1512 = vst [vmem:[%s1410 + $0xc8] sm:$0xf] %v1511
                %v1513 = vld [vmem:[%s1409 + $0xcc] sm:$0xf]
                %1514 = vst [vmem:[%s1410 + $0xcc] sm:$0xf] %v1513
                %v1515 = vld [vmem:[%s1409 + $0xd0] sm:$0xf]
                %1516 = vst [vmem:[%s1410 + $0xd0] sm:$0xf] %v1515
                %v1517 = vld [vmem:[%s1409 + $0xd4] sm:$0xf]
                %1518 = vst [vmem:[%s1410 + $0xd4] sm:$0xf] %v1517
                %v1519 = vld [vmem:[%s1409 + $0xd8] sm:$0xf]
                %1520 = vst [vmem:[%s1410 + $0xd8] sm:$0xf] %v1519
                %v1521 = vld [vmem:[%s1409 + $0xdc] sm:$0xf]
                %1522 = vst [vmem:[%s1410 + $0xdc] sm:$0xf] %v1521
                %v1523 = vld [vmem:[%s1409 + $0xe0] sm:$0xf]
                %1524 = vst [vmem:[%s1410 + $0xe0] sm:$0xf] %v1523
                %v1525 = vld [vmem:[%s1409 + $0xe4] sm:$0xf]
                %1526 = vst [vmem:[%s1410 + $0xe4] sm:$0xf] %v1525
                %v1527 = vld [vmem:[%s1409 + $0xe8] sm:$0xf]
                %1528 = vst [vmem:[%s1410 + $0xe8] sm:$0xf] %v1527
                %v1529 = vld [vmem:[%s1409 + $0xec] sm:$0xf]
                %1530 = vst [vmem:[%s1410 + $0xec] sm:$0xf] %v1529
                %v1531 = vld [vmem:[%s1409 + $0xf0] sm:$0xf]
                %1532 = vst [vmem:[%s1410 + $0xf0] sm:$0xf] %v1531
                %v1533 = vld [vmem:[%s1409 + $0xf4] sm:$0xf]
                %1534 = vst [vmem:[%s1410 + $0xf4] sm:$0xf] %v1533
                %v1535 = vld [vmem:[%s1409 + $0xf8] sm:$0xf]
                %1536 = vst [vmem:[%s1410 + $0xf8] sm:$0xf] %v1535
                %v1537 = vld [vmem:[%s1409 + $0xfc] sm:$0xf]
                %1538 = vst [vmem:[%s1410 + $0xfc] sm:$0xf] %v1537
                %s1539 = sadd.s32 1, %s1408
                %p1540 = scmp.ge.s32.totalorder %s1539, %s1401
                %s1541 = scalar_select %p1540, 0, %s1539
                %s1542 = smul.u32 %s1541, 256
                %s1543 = smul.u32 %s1541, 256
                %s1544 = scalar_lea.vmem %s1381, %s1542 [#allocation2]
                %s1545 = scalar_lea.vmem %s1392, %s1543
              $region57: #{model_forward.6} parent=51 // loop_footer
                %s1405 = sadd.s32 %s1403, 1
              $region58: #{model_forward.6} parent=51 // loop_footer_branch
                %1402 = sbr.rel target = $region54
              $region59: #{model_forward.6} parent=51 // loop_exit
                _
              %s1546 = sshrl.u32 %s1388, 6
              %s1547 = sand.u32 %s1388, 63
              %s1548 = smul.u32 %s1546, 64
              %s1549 = smul.u32 4, %s1548
              %s1550 = scalar_lea.vmem %s1381, %s1549 [#allocation2]
              %s1551 = smul.u32 4, %s1548
              %s1552 = scalar_lea.vmem %s1392, %s1551
              // While loop
              $region60: #{model_forward.6} parent=51 // loop_pre_header
                _
              $region61: #{model_forward.6} parent=51 // loop_header
                %s1554 = sphi 0, %s1556
                %p1555 = scmp.ge.s32.totalorder %s1554, %s1547
                %s1559 = sphi 0, %s1566
                %s1560 = sphi %s1550, %s1569
                %s1561 = sphi %s1552, %s1570
              $region62: #{model_forward.6} parent=51 // loop_header_branch
                %1558 = sbr.rel (%p1555) target = $region66
              $region63: #{model_forward.6} parent=51 // loop_body
                %v1562 = vld [vmem:[%s1560] sm:$0xf]
                %1563 = vst [vmem:[%s1561] sm:$0xf] %v1562
                %s1564 = sadd.s32 1, %s1559
                %p1565 = scmp.ge.s32.totalorder %s1564, %s1547
                %s1566 = scalar_select %p1565, 0, %s1564
                %s1567 = smul.u32 %s1566, 4
                %s1568 = smul.u32 %s1566, 4
                %s1569 = scalar_lea.vmem %s1550, %s1567 [#allocation2]
                %s1570 = scalar_lea.vmem %s1552, %s1568
              $region64: #{model_forward.6} parent=51 // loop_footer
                %s1556 = sadd.s32 %s1554, 1
              $region65: #{model_forward.6} parent=51 // loop_footer_branch
                %1553 = sbr.rel target = $region61
              $region66: #{model_forward.6} parent=51 // loop_exit
                _
            $region52: #{model_forward.6} parent=43 // pred_fallthru
              _
          $region44: #{model_forward.6} parent=39 // pred_fallthru
            _
          %1744 = vnop
        $region40: #{model_forward.6} parent=35 // pred_fallthru
          _
      $region36: #{model_forward.6} parent=5 // pred_fallthru
        _
      %p1745 = scmp.le.s32.totalorder 2, %s10
      // Predicated region
      $region85: #{model_forward.6} parent=5 // pred_check
        %p1746 = pneg %p1745
      $region86: #{model_forward.6} parent=5 // pred_check_branch
        %1748 = sbr.rel (%p1746) target = $region88
      $region87: #{model_forward.6} parent=5 // pred_region
        %s1749 = ssub.s32 %s10, 2
        // Predicated region
        $region89: #{model_forward.6} parent=87 // pred_check
          %p1750 = pneg %p128
        $region90: #{model_forward.6} parent=87 // pred_check_branch
          %1752 = sbr.rel (%p1750) target = $region92
        $region91: #{model_forward.6} parent=87 // pred_region
          %s1753 = sand.u32 %s113, 1
          %s1754 = sand.u32 %s113, 1
          %s1755 = smul.addr %s1754, 256
          %s1756 = scalar_lea.vmem [#allocation2], %s1755
        $region92: #{model_forward.6} parent=87 // pred_fallthru
          _
      $region88: #{model_forward.6} parent=5 // pred_fallthru
        _
    $region6: #{model_forward.6} parent=1 // loop_footer
      %s14 = sadd.s32 1, %s10
    $region7: #{model_forward.6} parent=1 // loop_footer_branch
      %9 = sbr.rel target = $region3
    $region8: #{model_forward.6} parent=1 // loop_exit
      _

// kernel: model_forward.8
$region0: #{model_forward.8}
  #allocation0 [shape = 'u32[]', space=smem, size = 0x4, offset = 0x4, fixed_abs, tag = 'smem constant byte address 0x4 - core index']
  #allocation1 [shape = 'u32[144,128]{1,0:T(1,128)}', space=vmem, size = 0x12000, scoped, tag = 'internal scratch']
  %s0 = inlined_call_operand.vmem [shape: bf16[128,500], index: 0, kind: input, shape index: {}]
  %s1 = inlined_call_operand.vmem [shape: bf16[500,128], index: 1, kind: input, shape index: {}]
  %s2 = inlined_call_operand.vmem [shape: f32[1,128], index: 2, kind: input, shape index: {}]
  %s3 = inlined_call_operand.vmem [shape: f32[1,128], index: 3, kind: input, shape index: {}]
  %s4 = inlined_call_operand.vmem [shape: bf16[128,128], index: 4, kind: output, shape index: {}]
  %s5 = sld [smem:[#allocation0]]
  $region26: #{model_forward.8} parent=0
    _
  %s7 = ssub.s32 1, %s5
  %s8 = scalar_select 0, %s7, %s5
  // Predicated region
  $region2: #{model_forward.8} parent=0 // pred_check
    _
  $region3: #{model_forward.8} parent=0 // pred_check_branch
    %10 = sbr.rel (0) target = $region5
  $region4: #{model_forward.8} parent=0 // pred_region
    _
  $region5: #{model_forward.8} parent=0 // pred_fallthru
    _
  // Predicated region
  $region6: #{model_forward.8} parent=0 // pred_check
    _
  $region7: #{model_forward.8} parent=0 // pred_check_branch
    %12 = sbr.rel (0) target = $region9
  $region8: #{model_forward.8} parent=0 // pred_region
    _
  $region9: #{model_forward.8} parent=0 // pred_fallthru
    _
  // Predicated region
  $region10: #{model_forward.8} parent=0 // pred_check
    _
  $region11: #{model_forward.8} parent=0 // pred_check_branch
    %14 = sbr.rel (0) target = $region13
  $region12: #{model_forward.8} parent=0 // pred_region
    _
  $region13: #{model_forward.8} parent=0 // pred_fallthru
    _
  // Predicated region
  $region14: #{model_forward.8} parent=0 // pred_check
    _
  $region15: #{model_forward.8} parent=0 // pred_check_branch
    %16 = sbr.rel (0) target = $region17
  $region16: #{model_forward.8} parent=0 // pred_region
    _
  $region17: #{model_forward.8} parent=0 // pred_fallthru
    _
  %v18 = vld [vmem:[%s0] sm:$0xff]
  %v19 = vld [vmem:[%s0 + $0x8] sm:$0xff]
  %v20 = vld [vmem:[%s0 + $0x10] sm:$0xff]
  %v21 = vld [vmem:[%s0 + $0x18] sm:$0xff]
  %v22 = vld [vmem:[%s0 + $0x20] sm:$0xff]
  %v23 = vld [vmem:[%s0 + $0x28] sm:$0xff]
  %v24 = vld [vmem:[%s0 + $0x30] sm:$0xff]
  %v25 = vld [vmem:[%s0 + $0x38] sm:$0xff]
  %v26 = vld [vmem:[%s0 + $0x40] sm:$0xff]
  %v27 = vld [vmem:[%s0 + $0x48] sm:$0xff]
  %v28 = vld [vmem:[%s0 + $0x50] sm:$0xff]
  %v29 = vld [vmem:[%s0 + $0x58] sm:$0xff]
  %v30 = vld [vmem:[%s0 + $0x60] sm:$0xff]
  %v31 = vld [vmem:[%s0 + $0x68] sm:$0xff]
  %v32 = vld [vmem:[%s0 + $0x70] sm:$0xff]
  %v33 = vld [vmem:[%s0 + $0x78] sm:$0xff]
  %v34 = vld [vmem:[%s0 + $0x80] sm:$0xff]
  %v35 = vld [vmem:[%s0 + $0x88] sm:$0xff]
  %v36 = vld [vmem:[%s0 + $0x90] sm:$0xff]
  %v37 = vld [vmem:[%s0 + $0x98] sm:$0xff]
  %v38 = vld [vmem:[%s0 + $0xa0] sm:$0xff]
  %v39 = vld [vmem:[%s0 + $0xa8] sm:$0xff]
  %v40 = vld [vmem:[%s0 + $0xb0] sm:$0xff]
  %v41 = vld [vmem:[%s0 + $0xb8] sm:$0xff]
  %v42 = vld [vmem:[%s0 + $0xc0] sm:$0xff]
  %v43 = vld [vmem:[%s0 + $0xc8] sm:$0xff]
  %v44 = vld [vmem:[%s0 + $0xd0] sm:$0xff]
  %v45 = vld [vmem:[%s0 + $0xd8] sm:$0xff]
  %v46 = vld [vmem:[%s0 + $0xe0] sm:$0xff]
  %v47 = vld [vmem:[%s0 + $0xe8] sm:$0xff]
  %v48 = vld [vmem:[%s0 + $0xf0] sm:$0xff]
  %v49 = vld [vmem:[%s0 + $0xf8] sm:$0xff]
  %v50 = vld [vmem:[%s1] sm:$0xf]
  %v51 = vld [vmem:[%s1 + $0x4] sm:$0xf]
  %v52 = vld [vmem:[%s1 + $0x8] sm:$0xf]
  %v53 = vld [vmem:[%s1 + $0xc] sm:$0xf]
  %v54 = vld [vmem:[%s1 + $0x10] sm:$0xf]
  %v55 = vld [vmem:[%s1 + $0x14] sm:$0xf]
  %v56 = vld [vmem:[%s1 + $0x18] sm:$0xf]
  %v57 = vld [vmem:[%s1 + $0x1c] sm:$0xf]
  %v58 = vld [vmem:[%s1 + $0x20] sm:$0xf]
  %v59 = vld [vmem:[%s1 + $0x24] sm:$0xf]
  %v60 = vld [vmem:[%s1 + $0x28] sm:$0xf]
  %v61 = vld [vmem:[%s1 + $0x2c] sm:$0xf]
  %v62 = vld [vmem:[%s1 + $0x30] sm:$0xf]
  %v63 = vld [vmem:[%s1 + $0x34] sm:$0xf]
  %v64 = vld [vmem:[%s1 + $0x38] sm:$0xf]
  %v65 = vld [vmem:[%s1 + $0x3c] sm:$0xf]
  %v66 = vld [vmem:[%s1 + $0x40] sm:$0xf]
  %v67 = vld [vmem:[%s1 + $0x44] sm:$0xf]
  %v68 = vld [vmem:[%s1 + $0x48] sm:$0xf]
  %v69 = vld [vmem:[%s1 + $0x4c] sm:$0xf]
  %v70 = vld [vmem:[%s1 + $0x50] sm:$0xf]
  %v71 = vld [vmem:[%s1 + $0x54] sm:$0xf]
  %v72 = vld [vmem:[%s1 + $0x58] sm:$0xf]
  %v73 = vld [vmem:[%s1 + $0x5c] sm:$0xf]
  %v74 = vld [vmem:[%s1 + $0x60] sm:$0xf]
  %v75 = vld [vmem:[%s1 + $0x64] sm:$0xf]
  %v76 = vld [vmem:[%s1 + $0x68] sm:$0xf]
  %v77 = vld [vmem:[%s1 + $0x6c] sm:$0xf]
  %v78 = vld [vmem:[%s1 + $0x70] sm:$0xf]
  %v79 = vld [vmem:[%s1 + $0x74] sm:$0xf]
  %v80 = vld [vmem:[%s1 + $0x78] sm:$0xf]
  %v81 = vld [vmem:[%s1 + $0x7c] sm:$0xf]
  %v82 = vld [vmem:[%s1 + $0x80] sm:$0xf]
  %v83 = vld [vmem:[%s1 + $0x84] sm:$0xf]
  %v84 = vld [vmem:[%s1 + $0x88] sm:$0xf]
  %v85 = vld [vmem:[%s1 + $0x8c] sm:$0xf]
  %v86 = vld [vmem:[%s1 + $0x90] sm:$0xf]
  %v87 = vld [vmem:[%s1 + $0x94] sm:$0xf]
  %v88 = vld [vmem:[%s1 + $0x98] sm:$0xf]
  %v89 = vld [vmem:[%s1 + $0x9c] sm:$0xf]
  %v90 = vld [vmem:[%s1 + $0xa0] sm:$0xf]
  %v91 = vld [vmem:[%s1 + $0xa4] sm:$0xf]
  %v92 = vld [vmem:[%s1 + $0xa8] sm:$0xf]
  %v93 = vld [vmem:[%s1 + $0xac] sm:$0xf]
  %v94 = vld [vmem:[%s1 + $0xb0] sm:$0xf]
  %v95 = vld [vmem:[%s1 + $0xb4] sm:$0xf]
  %v96 = vld [vmem:[%s1 + $0xb8] sm:$0xf]
  %v97 = vld [vmem:[%s1 + $0xbc] sm:$0xf]
  %v98 = vld [vmem:[%s1 + $0xc0] sm:$0xf]
  %v99 = vld [vmem:[%s1 + $0xc4] sm:$0xf]
  %v100 = vld [vmem:[%s1 + $0xc8] sm:$0xf]
  %v101 = vld [vmem:[%s1 + $0xcc] sm:$0xf]
  %v102 = vld [vmem:[%s1 + $0xd0] sm:$0xf]
  %v103 = vld [vmem:[%s1 + $0xd4] sm:$0xf]
  %v104 = vld [vmem:[%s1 + $0xd8] sm:$0xf]
  %v105 = vld [vmem:[%s1 + $0xdc] sm:$0xf]
  %v106 = vld [vmem:[%s1 + $0xe0] sm:$0xf]
  %v107 = vld [vmem:[%s1 + $0xe4] sm:$0xf]
  %v108 = vld [vmem:[%s1 + $0xe8] sm:$0xf]
  %v109 = vld [vmem:[%s1 + $0xec] sm:$0xf]
  %v110 = vld [vmem:[%s1 + $0xf0] sm:$0xf]
  %v111 = vld [vmem:[%s1 + $0xf4] sm:$0xf]
  %v112 = vld [vmem:[%s1 + $0xf8] sm:$0x3]
  %v145 = vunpack.c.l.b16 %v18
  %v146 = vunpack.c.h.b16 %v18
  %v147 = vunpack.c.l.b16 %v19
  %v148 = vunpack.c.h.b16 %v19
  %v149 = vunpack.c.l.b16 %v20
  %v150 = vunpack.c.h.b16 %v20
  %v151 = vunpack.c.l.b16 %v21
  %v152 = vunpack.c.h.b16 %v21
  %v153 = vunpack.c.l.b16 %v22
  %v154 = vunpack.c.h.b16 %v22
  %v155 = vunpack.c.l.b16 %v23
  %v156 = vunpack.c.h.b16 %v23
  %v157 = vunpack.c.l.b16 %v24
  %v158 = vunpack.c.h.b16 %v24
  %v159 = vunpack.c.l.b16 %v25
  %v160 = vunpack.c.h.b16 %v25
  %v161 = vunpack.c.l.b16 %v26
  %v162 = vunpack.c.h.b16 %v26
  %v163 = vunpack.c.l.b16 %v27
  %v164 = vunpack.c.h.b16 %v27
  %v165 = vunpack.c.l.b16 %v28
  %v166 = vunpack.c.h.b16 %v28
  %v167 = vunpack.c.l.b16 %v29
  %v168 = vunpack.c.h.b16 %v29
  %v169 = vunpack.c.l.b16 %v30
  %v170 = vunpack.c.h.b16 %v30
  %v171 = vunpack.c.l.b16 %v31
  %v172 = vunpack.c.h.b16 %v31
  %v173 = vunpack.c.l.b16 %v32
  %v174 = vunpack.c.h.b16 %v32
  %v175 = vunpack.c.l.b16 %v33
  %v176 = vunpack.c.h.b16 %v33
  %v177 = vunpack.c.l.b16 %v34
  %v178 = vunpack.c.h.b16 %v34
  %v179 = vunpack.c.l.b16 %v35
  %v180 = vunpack.c.h.b16 %v35
  %v181 = vunpack.c.l.b16 %v36
  %v182 = vunpack.c.h.b16 %v36
  %v183 = vunpack.c.l.b16 %v37
  %v184 = vunpack.c.h.b16 %v37
  %v185 = vunpack.c.l.b16 %v38
  %v186 = vunpack.c.h.b16 %v38
  %v187 = vunpack.c.l.b16 %v39
  %v188 = vunpack.c.h.b16 %v39
  %v189 = vunpack.c.l.b16 %v40
  %v190 = vunpack.c.h.b16 %v40
  %v191 = vunpack.c.l.b16 %v41
  %v192 = vunpack.c.h.b16 %v41
  %v193 = vunpack.c.l.b16 %v42
  %v194 = vunpack.c.h.b16 %v42
  %v195 = vunpack.c.l.b16 %v43
  %v196 = vunpack.c.h.b16 %v43
  %v197 = vunpack.c.l.b16 %v44
  %v198 = vunpack.c.h.b16 %v44
  %v199 = vunpack.c.l.b16 %v45
  %v200 = vunpack.c.h.b16 %v45
  %v201 = vunpack.c.l.b16 %v46
  %v202 = vunpack.c.h.b16 %v46
  %v203 = vunpack.c.l.b16 %v47
  %v204 = vunpack.c.h.b16 %v47
  %v205 = vunpack.c.l.b16 %v48
  %v206 = vunpack.c.h.b16 %v48
  %v207 = vunpack.c.l.b16 %v49
  %v208 = vunpack.c.h.b16 %v49
  %v209 = vpack.c.b16 %v149, %v145
  %v210 = vpack.c.b16 %v150, %v146
  %v211 = vpack.c.b16 %v151, %v147
  %v212 = vpack.c.b16 %v152, %v148
  %v213 = vpack.c.b16 %v157, %v153
  %v214 = vpack.c.b16 %v158, %v154
  %v215 = vpack.c.b16 %v159, %v155
  %v216 = vpack.c.b16 %v160, %v156
  %v217 = vpack.c.b16 %v165, %v161
  %v218 = vpack.c.b16 %v166, %v162
  %v219 = vpack.c.b16 %v167, %v163
  %v220 = vpack.c.b16 %v168, %v164
  %v221 = vpack.c.b16 %v173, %v169
  %v222 = vpack.c.b16 %v174, %v170
  %v223 = vpack.c.b16 %v175, %v171
  %v224 = vpack.c.b16 %v176, %v172
  %v225 = vpack.c.b16 %v181, %v177
  %v226 = vpack.c.b16 %v182, %v178
  %v227 = vpack.c.b16 %v183, %v179
  %v228 = vpack.c.b16 %v184, %v180
  %v229 = vpack.c.b16 %v189, %v185
  %v230 = vpack.c.b16 %v190, %v186
  %v231 = vpack.c.b16 %v191, %v187
  %v232 = vpack.c.b16 %v192, %v188
  %v233 = vpack.c.b16 %v197, %v193
  %v234 = vpack.c.b16 %v198, %v194
  %v235 = vpack.c.b16 %v199, %v195
  %v236 = vpack.c.b16 %v200, %v196
  %v237 = vpack.c.b16 %v205, %v201
  %v238 = vpack.c.b16 %v206, %v202
  %v239 = vpack.c.b16 %v207, %v203
  %v240 = vpack.c.b16 %v208, %v204
  %v328 = vunpack.c.l.b16 %v50
  %v329 = vunpack.c.l.b16 %v51
  %v330 = vunpack.c.l.b16 %v52
  %v331 = vunpack.c.l.b16 %v53
  %v332 = vunpack.c.l.b16 %v54
  %v333 = vunpack.c.l.b16 %v55
  %v334 = vunpack.c.l.b16 %v56
  %v335 = vunpack.c.l.b16 %v57
  %v336 = vunpack.c.l.b16 %v58
  %v337 = vunpack.c.l.b16 %v59
  %v338 = vunpack.c.l.b16 %v60
  %v339 = vunpack.c.l.b16 %v61
  %v340 = vunpack.c.l.b16 %v62
  %v341 = vunpack.c.l.b16 %v63
  %v342 = vunpack.c.l.b16 %v64
  %v343 = vunpack.c.l.b16 %v65
  %v344 = vunpack.c.l.b16 %v66
  %v345 = vunpack.c.l.b16 %v67
  %v346 = vunpack.c.l.b16 %v68
  %v347 = vunpack.c.l.b16 %v69
  %v348 = vunpack.c.l.b16 %v70
  %v349 = vunpack.c.l.b16 %v71
  %v350 = vunpack.c.l.b16 %v72
  %v351 = vunpack.c.l.b16 %v73
  %v352 = vunpack.c.l.b16 %v74
  %v353 = vunpack.c.l.b16 %v75
  %v354 = vunpack.c.l.b16 %v76
  %v355 = vunpack.c.l.b16 %v77
  %v356 = vunpack.c.l.b16 %v78
  %v357 = vunpack.c.l.b16 %v79
  %v358 = vunpack.c.l.b16 %v80
  %v359 = vunpack.c.l.b16 %v81
  %v360 = vunpack.c.l.b16 %v82
  %v361 = vunpack.c.l.b16 %v83
  %v362 = vunpack.c.l.b16 %v84
  %v363 = vunpack.c.l.b16 %v85
  %v364 = vunpack.c.l.b16 %v86
  %v365 = vunpack.c.l.b16 %v87
  %v366 = vunpack.c.l.b16 %v88
  %v367 = vunpack.c.l.b16 %v89
  %v368 = vunpack.c.l.b16 %v90
  %v369 = vunpack.c.l.b16 %v91
  %v370 = vunpack.c.l.b16 %v92
  %v371 = vunpack.c.l.b16 %v93
  %v372 = vunpack.c.l.b16 %v94
  %v373 = vunpack.c.l.b16 %v95
  %v374 = vunpack.c.l.b16 %v96
  %v375 = vunpack.c.l.b16 %v97
  %v376 = vunpack.c.l.b16 %v98
  %v377 = vunpack.c.l.b16 %v99
  %v378 = vunpack.c.l.b16 %v100
  %v379 = vunpack.c.l.b16 %v101
  %v380 = vunpack.c.l.b16 %v102
  %v381 = vunpack.c.l.b16 %v103
  %v382 = vunpack.c.l.b16 %v104
  %v383 = vunpack.c.l.b16 %v105
  %v384 = vunpack.c.l.b16 %v106
  %v385 = vunpack.c.l.b16 %v107
  %v386 = vunpack.c.l.b16 %v108
  %v387 = vunpack.c.l.b16 %v109
  %v388 = vunpack.c.l.b16 %v110
  %v389 = vunpack.c.l.b16 %v111
  %v390 = vunpack.c.l.b16 %v112
  %v391 = vpack.c.b16 %v329, %v328
  %v392 = vpack.c.b16 %v331, %v330
  %v393 = vpack.c.b16 %v333, %v332
  %v394 = vpack.c.b16 %v335, %v334
  %v395 = vpack.c.b16 %v337, %v336
  %v396 = vpack.c.b16 %v339, %v338
  %v397 = vpack.c.b16 %v341, %v340
  %v398 = vpack.c.b16 %v343, %v342
  %v399 = vpack.c.b16 %v345, %v344
  %v400 = vpack.c.b16 %v347, %v346
  %v401 = vpack.c.b16 %v349, %v348
  %v402 = vpack.c.b16 %v351, %v350
  %v403 = vpack.c.b16 %v353, %v352
  %v404 = vpack.c.b16 %v355, %v354
  %v405 = vpack.c.b16 %v357, %v356
  %v406 = vpack.c.b16 %v359, %v358
  %v407 = vpack.c.b16 %v361, %v360
  %v408 = vpack.c.b16 %v363, %v362
  %v409 = vpack.c.b16 %v365, %v364
  %v410 = vpack.c.b16 %v367, %v366
  %v411 = vpack.c.b16 %v369, %v368
  %v412 = vpack.c.b16 %v371, %v370
  %v413 = vpack.c.b16 %v373, %v372
  %v414 = vpack.c.b16 %v375, %v374
  %v415 = vpack.c.b16 %v377, %v376
  %v416 = vpack.c.b16 %v379, %v378
  %v417 = vpack.c.b16 %v381, %v380
  %v418 = vpack.c.b16 %v383, %v382
  %v419 = vpack.c.b16 %v385, %v384
  %v420 = vpack.c.b16 %v387, %v386
  %v421 = vpack.c.b16 %v389, %v388
  %v422 = vpack.c.b16 %v390, %v390
  %vm454 = vcmask 949248
  %v456 = vsel %vm454, %v212, 0
  %v459 = vsel %vm454, %v216, 0
  %v462 = vsel %vm454, %v220, 0
  %v465 = vsel %vm454, %v224, 0
  %v468 = vsel %vm454, %v228, 0
  %v471 = vsel %vm454, %v232, 0
  %v474 = vsel %vm454, %v236, 0
  %v477 = vsel %vm454, %v240, 0
  %vm479 = vcmask 1041408
  %v481 = vsel %vm479, %v422, 0
  %483 = vmatprep.subr.bf16.mxu0 0
  %484 = vmatpush1.bf16.msra.mxu0 %v391
  %485 = vmatprep.subr.bf16.mxu0 0
  %486 = vmatpush1.bf16.msra.mxu0 %v392
  %487 = vmatprep.subr.bf16.mxu0 0
  %488 = vmatpush1.bf16.msra.mxu0 %v393
  %489 = vmatprep.subr.bf16.mxu0 0
  %490 = vmatpush1.bf16.msra.mxu0 %v394
  %491 = vmatprep.subr.bf16.mxu0 0
  %492 = vmatpush1.bf16.msra.mxu0 %v395
  %493 = vmatprep.subr.bf16.mxu0 0
  %494 = vmatpush1.bf16.msra.mxu0 %v396
  %495 = vmatprep.subr.bf16.mxu0 0
  %496 = vmatpush1.bf16.msra.mxu0 %v397
  %497 = vmatprep.subr.bf16.mxu0 0
  %498 = vmatpush1.bf16.msra.mxu0 %v398
  %499 = vmatprep.subr.bf16.mxu0 0
  %500 = vmatpush1.bf16.msra.mxu0 %v399
  %501 = vmatprep.subr.bf16.mxu0 0
  %502 = vmatpush1.bf16.msra.mxu0 %v400
  %503 = vmatprep.subr.bf16.mxu0 0
  %504 = vmatpush1.bf16.msra.mxu0 %v401
  %505 = vmatprep.subr.bf16.mxu0 0
  %506 = vmatpush1.bf16.msra.mxu0 %v402
  %507 = vmatprep.subr.bf16.mxu0 0
  %508 = vmatpush1.bf16.msra.mxu0 %v403
  %509 = vmatprep.subr.bf16.mxu0 0
  %510 = vmatpush1.bf16.msra.mxu0 %v404
  %511 = vmatprep.subr.bf16.mxu0 0
  %512 = vmatpush1.bf16.msra.mxu0 %v405
  %513 = vmatprep.subr.bf16.mxu0 0
  %514 = vmatpush1.bf16.msra.mxu0 %v406
  %515 = vmatprep.mubr.bf16.mxu0 %v210
  %516 = vmatmul.mubr.bf16.gmra.mrb[0].mxu0 %v209
  %v517 = vpop.f32.mrb[0].mxu0
  %v518 = vadd.f32 0.0, %v517
  %v519 = vpop.f32.mrb[0].mxu0
  %v520 = vpop.f32.mrb[0].mxu0
  %v521 = vadd.f32 0.0, %v520
  %v522 = vpop.f32.mrb[0].mxu0
  %523 = vmatprep.mubr.bf16.mxu0 %v214
  %524 = vmatmul.mubr.bf16.gmra.mrb[0].mxu0 %v213
  %v525 = vpop.f32.mrb[0].mxu0
  %v526 = vadd.f32 0.0, %v525
  %v527 = vpop.f32.mrb[0].mxu0
  %v528 = vpop.f32.mrb[0].mxu0
  %v529 = vadd.f32 0.0, %v528
  %v530 = vpop.f32.mrb[0].mxu0
  %531 = vmatprep.mubr.bf16.mxu0 %v218
  %532 = vmatmul.mubr.bf16.gmra.mrb[0].mxu0 %v217
  %v533 = vpop.f32.mrb[0].mxu0
  %v534 = vadd.f32 0.0, %v533
  %v535 = vpop.f32.mrb[0].mxu0
  %v536 = vpop.f32.mrb[0].mxu0
  %v537 = vadd.f32 0.0, %v536
  %v538 = vpop.f32.mrb[0].mxu0
  %539 = vmatprep.mubr.bf16.mxu0 %v222
  %540 = vmatmul.mubr.bf16.gmra.mrb[0].mxu0 %v221
  %v541 = vpop.f32.mrb[0].mxu0
  %v542 = vadd.f32 0.0, %v541
  %v543 = vpop.f32.mrb[0].mxu0
  %v544 = vpop.f32.mrb[0].mxu0
  %v545 = vadd.f32 0.0, %v544
  %v546 = vpop.f32.mrb[0].mxu0
  %547 = vmatprep.mubr.bf16.mxu0 %v226
  %548 = vmatmul.mubr.bf16.gmra.mrb[0].mxu0 %v225
  %v549 = vpop.f32.mrb[0].mxu0
  %v550 = vadd.f32 0.0, %v549
  %v551 = vpop.f32.mrb[0].mxu0
  %v552 = vpop.f32.mrb[0].mxu0
  %v553 = vadd.f32 0.0, %v552
  %v554 = vpop.f32.mrb[0].mxu0
  %555 = vmatprep.mubr.bf16.mxu0 %v230
  %556 = vmatmul.mubr.bf16.gmra.mrb[0].mxu0 %v229
  %v557 = vpop.f32.mrb[0].mxu0
  %v558 = vadd.f32 0.0, %v557
  %v559 = vpop.f32.mrb[0].mxu0
  %v560 = vpop.f32.mrb[0].mxu0
  %v561 = vadd.f32 0.0, %v560
  %v562 = vpop.f32.mrb[0].mxu0
  %563 = vmatprep.mubr.bf16.mxu0 %v234
  %564 = vmatmul.mubr.bf16.gmra.mrb[0].mxu0 %v233
  %v565 = vpop.f32.mrb[0].mxu0
  %v566 = vadd.f32 0.0, %v565
  %v567 = vpop.f32.mrb[0].mxu0
  %v568 = vpop.f32.mrb[0].mxu0
  %v569 = vadd.f32 0.0, %v568
  %v570 = vpop.f32.mrb[0].mxu0
  %571 = vmatprep.mubr.bf16.mxu0 %v238
  %572 = vmatmul.mubr.bf16.gmra.mrb[0].mxu0 %v237
  %v573 = vpop.f32.mrb[0].mxu0
  %v574 = vadd.f32 0.0, %v573
  %v575 = vpop.f32.mrb[0].mxu0
  %v576 = vpop.f32.mrb[0].mxu0
  %v577 = vadd.f32 0.0, %v576
  %v578 = vpop.f32.mrb[0].mxu0
  %579 = vdwg.mxu0
  %580 = vmatprep.subr.bf16.mxu0 0
  %581 = vmatpush1.bf16.msra.mxu0 %v407
  %582 = vmatprep.subr.bf16.mxu0 0
  %583 = vmatpush1.bf16.msra.mxu0 %v408
  %584 = vmatprep.subr.bf16.mxu0 0
  %585 = vmatpush1.bf16.msra.mxu0 %v409
  %586 = vmatprep.subr.bf16.mxu0 0
  %587 = vmatpush1.bf16.msra.mxu0 %v410
  %588 = vmatprep.subr.bf16.mxu0 0
  %589 = vmatpush1.bf16.msra.mxu0 %v411
  %590 = vmatprep.subr.bf16.mxu0 0
  %591 = vmatpush1.bf16.msra.mxu0 %v412
  %592 = vmatprep.subr.bf16.mxu0 0
  %593 = vmatpush1.bf16.msra.mxu0 %v413
  %594 = vmatprep.subr.bf16.mxu0 0
  %595 = vmatpush1.bf16.msra.mxu0 %v414
  %596 = vmatprep.subr.bf16.mxu0 0
  %597 = vmatpush1.bf16.msra.mxu0 %v415
  %598 = vmatprep.subr.bf16.mxu0 0
  %599 = vmatpush1.bf16.msra.mxu0 %v416
  %600 = vmatprep.subr.bf16.mxu0 0
  %601 = vmatpush1.bf16.msra.mxu0 %v417
  %602 = vmatprep.subr.bf16.mxu0 0
  %603 = vmatpush1.bf16.msra.mxu0 %v418
  %604 = vmatprep.subr.bf16.mxu0 0
  %605 = vmatpush1.bf16.msra.mxu0 %v419
  %606 = vmatprep.subr.bf16.mxu0 0
  %607 = vmatpush1.bf16.msra.mxu0 %v420
  %608 = vmatprep.subr.bf16.mxu0 0
  %609 = vmatpush1.bf16.msra.mxu0 %v421
  %610 = vmatprep.subr.bf16.mxu0 0
  %611 = vmatpush1.bf16.msra.mxu0 %v481
  %612 = vmatprep.mubr.bf16.mxu0 %v456
  %613 = vmatmul.mubr.bf16.gmra.mrb[0].mxu0 %v211
  %v614 = vpop.f32.mrb[0].mxu0
  %v615 = vadd.f32 %v518, %v614
  %v616 = vpop.f32.mrb[0].mxu0
  %v617 = vpop.f32.mrb[0].mxu0
  %v618 = vadd.f32 %v521, %v617
  %v619 = vpop.f32.mrb[0].mxu0
  %620 = vmatprep.mubr.bf16.mxu0 %v459
  %621 = vmatmul.mubr.bf16.gmra.mrb[0].mxu0 %v215
  %v622 = vpop.f32.mrb[0].mxu0
  %v623 = vadd.f32 %v526, %v622
  %v624 = vpop.f32.mrb[0].mxu0
  %v625 = vpop.f32.mrb[0].mxu0
  %v626 = vadd.f32 %v529, %v625
  %v627 = vpop.f32.mrb[0].mxu0
  %628 = vmatprep.mubr.bf16.mxu0 %v462
  %629 = vmatmul.mubr.bf16.gmra.mrb[0].mxu0 %v219
  %v630 = vpop.f32.mrb[0].mxu0
  %v631 = vadd.f32 %v534, %v630
  %v632 = vpop.f32.mrb[0].mxu0
  %v633 = vpop.f32.mrb[0].mxu0
  %v634 = vadd.f32 %v537, %v633
  %v635 = vpop.f32.mrb[0].mxu0
  %636 = vmatprep.mubr.bf16.mxu0 %v465
  %637 = vmatmul.mubr.bf16.gmra.mrb[0].mxu0 %v223
  %v638 = vpop.f32.mrb[0].mxu0
  %v639 = vadd.f32 %v542, %v638
  %v640 = vpop.f32.mrb[0].mxu0
  %v641 = vpop.f32.mrb[0].mxu0
  %v642 = vadd.f32 %v545, %v641
  %v643 = vpop.f32.mrb[0].mxu0
  %644 = vmatprep.mubr.bf16.mxu0 %v468
  %645 = vmatmul.mubr.bf16.gmra.mrb[0].mxu0 %v227
  %v646 = vpop.f32.mrb[0].mxu0
  %v647 = vadd.f32 %v550, %v646
  %v648 = vpop.f32.mrb[0].mxu0
  %v649 = vpop.f32.mrb[0].mxu0
  %v650 = vadd.f32 %v553, %v649
  %v651 = vpop.f32.mrb[0].mxu0
  %652 = vmatprep.mubr.bf16.mxu0 %v471
  %653 = vmatmul.mubr.bf16.gmra.mrb[0].mxu0 %v231
  %v654 = vpop.f32.mrb[0].mxu0
  %v655 = vadd.f32 %v558, %v654
  %v656 = vpop.f32.mrb[0].mxu0
  %v657 = vpop.f32.mrb[0].mxu0
  %v658 = vadd.f32 %v561, %v657
  %v659 = vpop.f32.mrb[0].mxu0
  %660 = vmatprep.mubr.bf16.mxu0 %v474
  %661 = vmatmul.mubr.bf16.gmra.mrb[0].mxu0 %v235
  %v662 = vpop.f32.mrb[0].mxu0
  %v663 = vadd.f32 %v566, %v662
  %v664 = vpop.f32.mrb[0].mxu0
  %v665 = vpop.f32.mrb[0].mxu0
  %v666 = vadd.f32 %v569, %v665
  %v667 = vpop.f32.mrb[0].mxu0
  %668 = vmatprep.mubr.bf16.mxu0 %v477
  %669 = vmatmul.mubr.bf16.gmra.mrb[0].mxu0 %v239
  %v670 = vpop.f32.mrb[0].mxu0
  %v671 = vadd.f32 %v574, %v670
  %v672 = vpop.f32.mrb[0].mxu0
  %v673 = vpop.f32.mrb[0].mxu0
  %v674 = vadd.f32 %v577, %v673
  %v675 = vpop.f32.mrb[0].mxu0
  %676 = vdwg.mxu0
  %v677 = vld [vmem:[%s2] sm:$0x1]
  %v679 = vlaneseq
  %v680 = vshrl.u32 %v679, 7
  %v681 = vsub.s32 0, %v680
  %v682 = vrot.slane %v677, %v681
  %v684 = vmul.f32 %v615, %v682
  %v685 = vmul.f32 %v618, %v682
  %v686 = vmul.f32 %v623, %v682
  %v687 = vmul.f32 %v626, %v682
  %v688 = vmul.f32 %v631, %v682
  %v689 = vmul.f32 %v634, %v682
  %v690 = vmul.f32 %v639, %v682
  %v691 = vmul.f32 %v642, %v682
  %v692 = vmul.f32 %v647, %v682
  %v693 = vmul.f32 %v650, %v682
  %v694 = vmul.f32 %v655, %v682
  %v695 = vmul.f32 %v658, %v682
  %v696 = vmul.f32 %v663, %v682
  %v697 = vmul.f32 %v666, %v682
  %v698 = vmul.f32 %v671, %v682
  %v699 = vmul.f32 %v674, %v682
  %v700 = vld [vmem:[%s3] sm:$0x1]
  %v702 = vlaneseq
  %v703 = vshrl.u32 %v702, 7
  %v704 = vsub.s32 0, %v703
  %v705 = vrot.slane %v700, %v704
  %v707 = vadd.f32 %v684, %v705
  %v708 = vadd.f32 %v685, %v705
  %v709 = vadd.f32 %v686, %v705
  %v710 = vadd.f32 %v687, %v705
  %v711 = vadd.f32 %v688, %v705
  %v712 = vadd.f32 %v689, %v705
  %v713 = vadd.f32 %v690, %v705
  %v714 = vadd.f32 %v691, %v705
  %v715 = vadd.f32 %v692, %v705
  %v716 = vadd.f32 %v693, %v705
  %v717 = vadd.f32 %v694, %v705
  %v718 = vadd.f32 %v695, %v705
  %v719 = vadd.f32 %v696, %v705
  %v720 = vadd.f32 %v697, %v705
  %v721 = vadd.f32 %v698, %v705
  %v722 = vadd.f32 %v699, %v705
  %v723 = vmax.f32 %v707, 0.0
  %v724 = vmax.f32 %v708, 0.0
  %v725 = vmax.f32 %v709, 0.0
  %v726 = vmax.f32 %v710, 0.0
  %v727 = vmax.f32 %v711, 0.0
  %v728 = vmax.f32 %v712, 0.0
  %v729 = vmax.f32 %v713, 0.0
  %v730 = vmax.f32 %v714, 0.0
  %v731 = vmax.f32 %v715, 0.0
  %v732 = vmax.f32 %v716, 0.0
  %v733 = vmax.f32 %v717, 0.0
  %v734 = vmax.f32 %v718, 0.0
  %v735 = vmax.f32 %v719, 0.0
  %v736 = vmax.f32 %v720, 0.0
  %v737 = vmax.f32 %v721, 0.0
  %v738 = vmax.f32 %v722, 0.0
  %v739 = vpack.c.bf16 %v724, %v723
  %v740 = vpack.c.bf16 %v726, %v725
  %v741 = vpack.c.bf16 %v728, %v727
  %v742 = vpack.c.bf16 %v730, %v729
  %v743 = vpack.c.bf16 %v732, %v731
  %v744 = vpack.c.bf16 %v734, %v733
  %v745 = vpack.c.bf16 %v736, %v735
  %v746 = vpack.c.bf16 %v738, %v737
  %v755 = vunpack.c.l.b16 %v739
  %v756 = vunpack.c.h.b16 %v739
  %v757 = vunpack.c.l.b16 %v740
  %v758 = vunpack.c.h.b16 %v740
  %v759 = vunpack.c.l.b16 %v741
  %v760 = vunpack.c.h.b16 %v741
  %v761 = vunpack.c.l.b16 %v742
  %v762 = vunpack.c.h.b16 %v742
  %v763 = vunpack.c.l.b16 %v743
  %v764 = vunpack.c.h.b16 %v743
  %v765 = vunpack.c.l.b16 %v744
  %v766 = vunpack.c.h.b16 %v744
  %v767 = vunpack.c.l.b16 %v745
  %v768 = vunpack.c.h.b16 %v745
  %v769 = vunpack.c.l.b16 %v746
  %v770 = vunpack.c.h.b16 %v746
  %v771 = vpack.c.b16 %v755, %v755
  %v772 = vpack.c.b16 %v756, %v756
  %v773 = vpack.c.b16 %v757, %v757
  %v774 = vpack.c.b16 %v758, %v758
  %v775 = vpack.c.b16 %v759, %v759
  %v776 = vpack.c.b16 %v760, %v760
  %v777 = vpack.c.b16 %v761, %v761
  %v778 = vpack.c.b16 %v762, %v762
  %v779 = vpack.c.b16 %v763, %v763
  %v780 = vpack.c.b16 %v764, %v764
  %v781 = vpack.c.b16 %v765, %v765
  %v782 = vpack.c.b16 %v766, %v766
  %v783 = vpack.c.b16 %v767, %v767
  %v784 = vpack.c.b16 %v768, %v768
  %v785 = vpack.c.b16 %v769, %v769
  %v786 = vpack.c.b16 %v770, %v770
  %803 = vst [vmem:[%s4] sm:$0xf] %v771
  %804 = vst [vmem:[%s4 + $0x4] sm:$0xf] %v772
  %805 = vst [vmem:[%s4 + $0x8] sm:$0xf] %v773
  %806 = vst [vmem:[%s4 + $0xc] sm:$0xf] %v774
  %807 = vst [vmem:[%s4 + $0x10] sm:$0xf] %v775
  %808 = vst [vmem:[%s4 + $0x14] sm:$0xf] %v776
  %809 = vst [vmem:[%s4 + $0x18] sm:$0xf] %v777
  %810 = vst [vmem:[%s4 + $0x1c] sm:$0xf] %v778
  %811 = vst [vmem:[%s4 + $0x20] sm:$0xf] %v779
  %812 = vst [vmem:[%s4 + $0x24] sm:$0xf] %v780
  %813 = vst [vmem:[%s4 + $0x28] sm:$0xf] %v781
  %814 = vst [vmem:[%s4 + $0x2c] sm:$0xf] %v782
  %815 = vst [vmem:[%s4 + $0x30] sm:$0xf] %v783
  %816 = vst [vmem:[%s4 + $0x34] sm:$0xf] %v784
  %817 = vst [vmem:[%s4 + $0x38] sm:$0xf] %v785
  %818 = vst [vmem:[%s4 + $0x3c] sm:$0xf] %v786
  // Predicated region
  $region18: #{model_forward.8} parent=0 // pred_check
    _
  $region19: #{model_forward.8} parent=0 // pred_check_branch
    %820 = sbr.rel (0) target = $region21
  $region20: #{model_forward.8} parent=0 // pred_region
    _
  $region21: #{model_forward.8} parent=0 // pred_fallthru
    _
  // Predicated region
  $region22: #{model_forward.8} parent=0 // pred_check
    _
  $region23: #{model_forward.8} parent=0 // pred_check_branch
    %822 = sbr.rel (0) target = $region25
  $region24: #{model_forward.8} parent=0 // pred_region
    _
  $region25: #{model_forward.8} parent=0 // pred_fallthru
    _

// kernel: model_forward.9
$region0: #{model_forward.9}
  #allocation0 [shape = 'u32[]', space=smem, size = 0x4, offset = 0x4, fixed_abs, tag = 'smem constant byte address 0x4 - core index']
  #allocation1 [shape = 'u32[144,128]{1,0:T(1,128)}', space=vmem, size = 0x12000, scoped, tag = 'internal scratch']
  %s0 = inlined_call_operand.vmem [shape: bf16[8,2,4,256], index: 0, kind: input, shape index: {}]
  %s1 = inlined_call_operand.vmem [shape: bf16[8,4,128], index: 1, kind: output, shape index: {}]
  %s2 = sld [smem:[#allocation0]]
  $region14: #{model_forward.9} parent=0
    _
  %s4 = ssub.s32 1, %s2
  %s5 = scalar_select 0, %s4, %s2
  // Predicated region
  $region2: #{model_forward.9} parent=0 // pred_check
    _
  $region3: #{model_forward.9} parent=0 // pred_check_branch
    %7 = sbr.rel (0) target = $region5
  $region4: #{model_forward.9} parent=0 // pred_region
    _
  $region5: #{model_forward.9} parent=0 // pred_fallthru
    _
  %v9 = vld [vmem:[%s0] sm:$0xf]
  %v10 = vld [vmem:[%s0 + $0x4] sm:$0xf]
  %v11 = vld [vmem:[%s0 + $0x8] sm:$0xf]
  %v12 = vld [vmem:[%s0 + $0xc] sm:$0xf]
  %v13 = vld [vmem:[%s0 + $0x10] sm:$0xf]
  %v14 = vld [vmem:[%s0 + $0x14] sm:$0xf]
  %v15 = vld [vmem:[%s0 + $0x18] sm:$0xf]
  %v16 = vld [vmem:[%s0 + $0x1c] sm:$0xf]
  %v17 = vld [vmem:[%s0 + $0x20] sm:$0xf]
  %v18 = vld [vmem:[%s0 + $0x24] sm:$0xf]
  %v19 = vld [vmem:[%s0 + $0x28] sm:$0xf]
  %v20 = vld [vmem:[%s0 + $0x2c] sm:$0xf]
  %v21 = vld [vmem:[%s0 + $0x30] sm:$0xf]
  %v22 = vld [vmem:[%s0 + $0x34] sm:$0xf]
  %v23 = vld [vmem:[%s0 + $0x38] sm:$0xf]
  %v24 = vld [vmem:[%s0 + $0x3c] sm:$0xf]
  %vm25 = vcmask 1041408
  %vm26 = vcmask 1043458
  %vm27 = vmor %vm26, %vm25
  %v30 = vsel %vm27, %v9, 4286644096
  %v33 = vsel %vm27, %v10, 4286644096
  %v35 = vmax.bf16 %v30, %v33
  %v37 = vsel %vm27, %v11, 4286644096
  %v40 = vsel %vm27, %v12, 4286644096
  %v42 = vmax.bf16 %v37, %v40
  %v44 = vsel %vm27, %v13, 4286644096
  %v47 = vsel %vm27, %v14, 4286644096
  %v49 = vmax.bf16 %v44, %v47
  %v51 = vsel %vm27, %v15, 4286644096
  %v54 = vsel %vm27, %v16, 4286644096
  %v56 = vmax.bf16 %v51, %v54
  %v58 = vsel %vm27, %v17, 4286644096
  %v61 = vsel %vm27, %v18, 4286644096
  %v63 = vmax.bf16 %v58, %v61
  %v65 = vsel %vm27, %v19, 4286644096
  %v68 = vsel %vm27, %v20, 4286644096
  %v70 = vmax.bf16 %v65, %v68
  %v72 = vsel %vm27, %v21, 4286644096
  %v75 = vsel %vm27, %v22, 4286644096
  %v77 = vmax.bf16 %v72, %v75
  %v79 = vsel %vm27, %v23, 4286644096
  %v82 = vsel %vm27, %v24, 4286644096
  %v84 = vmax.bf16 %v79, %v82
  %v93 = vrot.slane %v35, 2
  %v94 = vrot.slane %v42, 2
  %v95 = vrot.slane %v49, 2
  %v96 = vrot.slane %v56, 2
  %v97 = vrot.slane %v63, 2
  %v98 = vrot.slane %v70, 2
  %v99 = vrot.slane %v77, 2
  %v100 = vrot.slane %v84, 2
  %v109 = vmax.bf16 %v35, %v93
  %v110 = vmax.bf16 %v42, %v94
  %v111 = vmax.bf16 %v49, %v95
  %v112 = vmax.bf16 %v56, %v96
  %v113 = vmax.bf16 %v63, %v97
  %v114 = vmax.bf16 %v70, %v98
  %v115 = vmax.bf16 %v77, %v99
  %v116 = vmax.bf16 %v84, %v100
  %117 = vst [vmem:[%s1] sm:$0x3] %v109
  %118 = vst [vmem:[%s1 + $0x2] sm:$0x3] %v110
  %119 = vst [vmem:[%s1 + $0x4] sm:$0x3] %v111
  %120 = vst [vmem:[%s1 + $0x6] sm:$0x3] %v112
  %121 = vst [vmem:[%s1 + $0x8] sm:$0x3] %v113
  %122 = vst [vmem:[%s1 + $0xa] sm:$0x3] %v114
  %123 = vst [vmem:[%s1 + $0xc] sm:$0x3] %v115
  %124 = vst [vmem:[%s1 + $0xe] sm:$0x3] %v116
  // Predicated region
  $region6: #{model_forward.9} parent=0 // pred_check
    _
  $region7: #{model_forward.9} parent=0 // pred_check_branch
    %126 = sbr.rel (0) target = $region9
  $region8: #{model_forward.9} parent=0 // pred_region
    _
  $region9: #{model_forward.9} parent=0 // pred_fallthru
    _
  // Predicated region
  $region10: #{model_forward.9} parent=0 // pred_check
    _
  $region11: #{model_forward.9} parent=0 // pred_check_branch
    %128 = sbr.rel (0) target = $region13
  $region12: #{model_forward.9} parent=0 // pred_region
    _
  $region13: #{model_forward.9} parent=0 // pred_fallthru
    _

// kernel: model_forward.11
$region0: #{model_forward.11}
  #allocation0 [shape = 'u32[]', space=smem, size = 0x4, offset = 0x4, fixed_abs, tag = 'smem constant byte address 0x4 - core index']
  #allocation1 [shape = 'u32[144,128]{1,0:T(1,128)}', space=vmem, size = 0x12000, scoped, tag = 'internal scratch']
  %s0 = inlined_call_operand.vmem [shape: bf16[2,512], index: 0, kind: input, shape index: {}]
  %s1 = inlined_call_operand.vmem [shape: bf16[512,128], index: 1, kind: input, shape index: {}]
  %s2 = inlined_call_operand.vmem [shape: f32[1,128], index: 2, kind: input, shape index: {}]
  %s3 = inlined_call_operand.vmem [shape: f32[1,128], index: 3, kind: input, shape index: {}]
  %s4 = inlined_call_operand.hbm [shape: f32[2,128], index: 4, kind: output, shape index: {}]
  %s5 = sld [smem:[#allocation0]]
  $region26: #{model_forward.11} parent=0
    _
  %s7 = ssub.s32 1, %s5
  %s8 = scalar_select 0, %s7, %s5
  $region1: #{model_forward.11} parent=0
    #allocation2 [shape = 'u8[1024]{0}', space=vmem, size = 0x400, scoped, tag = 'output window, operand 0, single buffered']
    #allocation3 [shape = 's32[1]{0}', space=sflag, size = 0x4, scoped, tag = 'scoped memory for model_forward.11']
    %9 = vsyncpa [#allocation3], 0
    // Predicated region
    $region2: #{model_forward.11} parent=1 // pred_check
      _
    $region3: #{model_forward.11} parent=1 // pred_check_branch
      %11 = sbr.rel (0) target = $region5
    $region4: #{model_forward.11} parent=1 // pred_region
      _
    $region5: #{model_forward.11} parent=1 // pred_fallthru
      _
    // Predicated region
    $region6: #{model_forward.11} parent=1 // pred_check
      _
    $region7: #{model_forward.11} parent=1 // pred_check_branch
      %13 = sbr.rel (0) target = $region9
    $region8: #{model_forward.11} parent=1 // pred_region
      _
    $region9: #{model_forward.11} parent=1 // pred_fallthru
      _
    // Predicated region
    $region10: #{model_forward.11} parent=1 // pred_check
      _
    $region11: #{model_forward.11} parent=1 // pred_check_branch
      %15 = sbr.rel (0) target = $region13
    $region12: #{model_forward.11} parent=1 // pred_region
      _
    $region13: #{model_forward.11} parent=1 // pred_fallthru
      _
    // Predicated region
    $region14: #{model_forward.11} parent=1 // pred_check
      _
    $region15: #{model_forward.11} parent=1 // pred_check_branch
      %17 = sbr.rel (0) target = $region17
    $region16: #{model_forward.11} parent=1 // pred_region
      _
    $region17: #{model_forward.11} parent=1 // pred_fallthru
      _
    %v19 = vld [vmem:[%s0] sm:$0xf]
    %v20 = vld [vmem:[%s1] sm:$0xf]
    %v21 = vld [vmem:[%s1 + $0x4] sm:$0xf]
    %v22 = vld [vmem:[%s1 + $0x8] sm:$0xf]
    %v23 = vld [vmem:[%s1 + $0xc] sm:$0xf]
    %v24 = vld [vmem:[%s1 + $0x10] sm:$0xf]
    %v25 = vld [vmem:[%s1 + $0x14] sm:$0xf]
    %v26 = vld [vmem:[%s1 + $0x18] sm:$0xf]
    %v27 = vld [vmem:[%s1 + $0x1c] sm:$0xf]
    %v28 = vld [vmem:[%s1 + $0x20] sm:$0xf]
    %v29 = vld [vmem:[%s1 + $0x24] sm:$0xf]
    %v30 = vld [vmem:[%s1 + $0x28] sm:$0xf]
    %v31 = vld [vmem:[%s1 + $0x2c] sm:$0xf]
    %v32 = vld [vmem:[%s1 + $0x30] sm:$0xf]
    %v33 = vld [vmem:[%s1 + $0x34] sm:$0xf]
    %v34 = vld [vmem:[%s1 + $0x38] sm:$0xf]
    %v35 = vld [vmem:[%s1 + $0x3c] sm:$0xf]
    %v36 = vld [vmem:[%s1 + $0x40] sm:$0xf]
    %v37 = vld [vmem:[%s1 + $0x44] sm:$0xf]
    %v38 = vld [vmem:[%s1 + $0x48] sm:$0xf]
    %v39 = vld [vmem:[%s1 + $0x4c] sm:$0xf]
    %v40 = vld [vmem:[%s1 + $0x50] sm:$0xf]
    %v41 = vld [vmem:[%s1 + $0x54] sm:$0xf]
    %v42 = vld [vmem:[%s1 + $0x58] sm:$0xf]
    %v43 = vld [vmem:[%s1 + $0x5c] sm:$0xf]
    %v44 = vld [vmem:[%s1 + $0x60] sm:$0xf]
    %v45 = vld [vmem:[%s1 + $0x64] sm:$0xf]
    %v46 = vld [vmem:[%s1 + $0x68] sm:$0xf]
    %v47 = vld [vmem:[%s1 + $0x6c] sm:$0xf]
    %v48 = vld [vmem:[%s1 + $0x70] sm:$0xf]
    %v49 = vld [vmem:[%s1 + $0x74] sm:$0xf]
    %v50 = vld [vmem:[%s1 + $0x78] sm:$0xf]
    %v51 = vld [vmem:[%s1 + $0x7c] sm:$0xf]
    %v52 = vld [vmem:[%s1 + $0x80] sm:$0xf]
    %v53 = vld [vmem:[%s1 + $0x84] sm:$0xf]
    %v54 = vld [vmem:[%s1 + $0x88] sm:$0xf]
    %v55 = vld [vmem:[%s1 + $0x8c] sm:$0xf]
    %v56 = vld [vmem:[%s1 + $0x90] sm:$0xf]
    %v57 = vld [vmem:[%s1 + $0x94] sm:$0xf]
    %v58 = vld [vmem:[%s1 + $0x98] sm:$0xf]
    %v59 = vld [vmem:[%s1 + $0x9c] sm:$0xf]
    %v60 = vld [vmem:[%s1 + $0xa0] sm:$0xf]
    %v61 = vld [vmem:[%s1 + $0xa4] sm:$0xf]
    %v62 = vld [vmem:[%s1 + $0xa8] sm:$0xf]
    %v63 = vld [vmem:[%s1 + $0xac] sm:$0xf]
    %v64 = vld [vmem:[%s1 + $0xb0] sm:$0xf]
    %v65 = vld [vmem:[%s1 + $0xb4] sm:$0xf]
    %v66 = vld [vmem:[%s1 + $0xb8] sm:$0xf]
    %v67 = vld [vmem:[%s1 + $0xbc] sm:$0xf]
    %v68 = vld [vmem:[%s1 + $0xc0] sm:$0xf]
    %v69 = vld [vmem:[%s1 + $0xc4] sm:$0xf]
    %v70 = vld [vmem:[%s1 + $0xc8] sm:$0xf]
    %v71 = vld [vmem:[%s1 + $0xcc] sm:$0xf]
    %v72 = vld [vmem:[%s1 + $0xd0] sm:$0xf]
    %v73 = vld [vmem:[%s1 + $0xd4] sm:$0xf]
    %v74 = vld [vmem:[%s1 + $0xd8] sm:$0xf]
    %v75 = vld [vmem:[%s1 + $0xdc] sm:$0xf]
    %v76 = vld [vmem:[%s1 + $0xe0] sm:$0xf]
    %v77 = vld [vmem:[%s1 + $0xe4] sm:$0xf]
    %v78 = vld [vmem:[%s1 + $0xe8] sm:$0xf]
    %v79 = vld [vmem:[%s1 + $0xec] sm:$0xf]
    %v80 = vld [vmem:[%s1 + $0xf0] sm:$0xf]
    %v81 = vld [vmem:[%s1 + $0xf4] sm:$0xf]
    %v82 = vld [vmem:[%s1 + $0xf8] sm:$0xf]
    %v83 = vld [vmem:[%s1 + $0xfc] sm:$0xf]
    %v86 = vunpack.c.l.s4 1966171168
    %v87 = vunpack.c.0.s8 %v86
    %v88 = vlaneseq
    %v89 = vshrl.u32 %v88, 7
    %v90 = vsub.s32 %v87, %v89
    %v91 = vrot.slane %v19, %v90
    %v92 = vcombine.high %v91, %v91
    %v94 = vunpack.c.l.s4 1966171168
    %v95 = vunpack.c.0.s8 %v94
    %v96 = vlaneseq
    %v97 = vshrl.u32 %v96, 7
    %v98 = vsub.s32 %v95, %v97
    %v99 = vrot.slane %v91, %v98
    %v101 = vunpack.c.l.s4 1966171168
    %v102 = vunpack.c.0.s8 %v101
    %v103 = vlaneseq
    %v104 = vshrl.u32 %v103, 7
    %v105 = vsub.s32 %v102, %v104
    %v106 = vrot.slane %v92, %v105
    %v107 = vcombine.high %v99, %v99
    %v108 = vcombine.high %v106, %v106
    %v177 = vunpack.c.l.b16 %v20
    %v178 = vunpack.c.l.b16 %v21
    %v179 = vunpack.c.l.b16 %v22
    %v180 = vunpack.c.l.b16 %v23
    %v181 = vunpack.c.l.b16 %v24
    %v182 = vunpack.c.l.b16 %v25
    %v183 = vunpack.c.l.b16 %v26
    %v184 = vunpack.c.l.b16 %v27
    %v185 = vunpack.c.l.b16 %v28
    %v186 = vunpack.c.l.b16 %v29
    %v187 = vunpack.c.l.b16 %v30
    %v188 = vunpack.c.l.b16 %v31
    %v189 = vunpack.c.l.b16 %v32
    %v190 = vunpack.c.l.b16 %v33
    %v191 = vunpack.c.l.b16 %v34
    %v192 = vunpack.c.l.b16 %v35
    %v193 = vunpack.c.l.b16 %v36
    %v194 = vunpack.c.l.b16 %v37
    %v195 = vunpack.c.l.b16 %v38
    %v196 = vunpack.c.l.b16 %v39
    %v197 = vunpack.c.l.b16 %v40
    %v198 = vunpack.c.l.b16 %v41
    %v199 = vunpack.c.l.b16 %v42
    %v200 = vunpack.c.l.b16 %v43
    %v201 = vunpack.c.l.b16 %v44
    %v202 = vunpack.c.l.b16 %v45
    %v203 = vunpack.c.l.b16 %v46
    %v204 = vunpack.c.l.b16 %v47
    %v205 = vunpack.c.l.b16 %v48
    %v206 = vunpack.c.l.b16 %v49
    %v207 = vunpack.c.l.b16 %v50
    %v208 = vunpack.c.l.b16 %v51
    %v209 = vunpack.c.l.b16 %v52
    %v210 = vunpack.c.l.b16 %v53
    %v211 = vunpack.c.l.b16 %v54
    %v212 = vunpack.c.l.b16 %v55
    %v213 = vunpack.c.l.b16 %v56
    %v214 = vunpack.c.l.b16 %v57
    %v215 = vunpack.c.l.b16 %v58
    %v216 = vunpack.c.l.b16 %v59
    %v217 = vunpack.c.l.b16 %v60
    %v218 = vunpack.c.l.b16 %v61
    %v219 = vunpack.c.l.b16 %v62
    %v220 = vunpack.c.l.b16 %v63
    %v221 = vunpack.c.l.b16 %v64
    %v222 = vunpack.c.l.b16 %v65
    %v223 = vunpack.c.l.b16 %v66
    %v224 = vunpack.c.l.b16 %v67
    %v225 = vunpack.c.l.b16 %v68
    %v226 = vunpack.c.l.b16 %v69
    %v227 = vunpack.c.l.b16 %v70
    %v228 = vunpack.c.l.b16 %v71
    %v229 = vunpack.c.l.b16 %v72
    %v230 = vunpack.c.l.b16 %v73
    %v231 = vunpack.c.l.b16 %v74
    %v232 = vunpack.c.l.b16 %v75
    %v233 = vunpack.c.l.b16 %v76
    %v234 = vunpack.c.l.b16 %v77
    %v235 = vunpack.c.l.b16 %v78
    %v236 = vunpack.c.l.b16 %v79
    %v237 = vunpack.c.l.b16 %v80
    %v238 = vunpack.c.l.b16 %v81
    %v239 = vunpack.c.l.b16 %v82
    %v240 = vunpack.c.l.b16 %v83
    %v241 = vpack.c.b16 %v178, %v177
    %v242 = vpack.c.b16 %v180, %v179
    %v243 = vpack.c.b16 %v182, %v181
    %v244 = vpack.c.b16 %v184, %v183
    %v245 = vpack.c.b16 %v186, %v185
    %v246 = vpack.c.b16 %v188, %v187
    %v247 = vpack.c.b16 %v190, %v189
    %v248 = vpack.c.b16 %v192, %v191
    %v249 = vpack.c.b16 %v194, %v193
    %v250 = vpack.c.b16 %v196, %v195
    %v251 = vpack.c.b16 %v198, %v197
    %v252 = vpack.c.b16 %v200, %v199
    %v253 = vpack.c.b16 %v202, %v201
    %v254 = vpack.c.b16 %v204, %v203
    %v255 = vpack.c.b16 %v206, %v205
    %v256 = vpack.c.b16 %v208, %v207
    %v257 = vpack.c.b16 %v210, %v209
    %v258 = vpack.c.b16 %v212, %v211
    %v259 = vpack.c.b16 %v214, %v213
    %v260 = vpack.c.b16 %v216, %v215
    %v261 = vpack.c.b16 %v218, %v217
    %v262 = vpack.c.b16 %v220, %v219
    %v263 = vpack.c.b16 %v222, %v221
    %v264 = vpack.c.b16 %v224, %v223
    %v265 = vpack.c.b16 %v226, %v225
    %v266 = vpack.c.b16 %v228, %v227
    %v267 = vpack.c.b16 %v230, %v229
    %v268 = vpack.c.b16 %v232, %v231
    %v269 = vpack.c.b16 %v234, %v233
    %v270 = vpack.c.b16 %v236, %v235
    %v271 = vpack.c.b16 %v238, %v237
    %v272 = vpack.c.b16 %v240, %v239
    %305 = vmatprep.subr.bf16.mxu0 0
    %306 = vmatpush1.bf16.msra.mxu0 %v241
    %307 = vmatprep.subr.bf16.mxu0 0
    %308 = vmatpush1.bf16.msra.mxu0 %v242
    %309 = vmatprep.subr.bf16.mxu0 0
    %310 = vmatpush1.bf16.msra.mxu0 %v243
    %311 = vmatprep.subr.bf16.mxu0 0
    %312 = vmatpush1.bf16.msra.mxu0 %v244
    %313 = vmatprep.subr.bf16.mxu0 0
    %314 = vmatpush1.bf16.msra.mxu0 %v245
    %315 = vmatprep.subr.bf16.mxu0 0
    %316 = vmatpush1.bf16.msra.mxu0 %v246
    %317 = vmatprep.subr.bf16.mxu0 0
    %318 = vmatpush1.bf16.msra.mxu0 %v247
    %319 = vmatprep.subr.bf16.mxu0 0
    %320 = vmatpush1.bf16.msra.mxu0 %v248
    %321 = vmatprep.subr.bf16.mxu0 0
    %322 = vmatpush1.bf16.msra.mxu0 %v249
    %323 = vmatprep.subr.bf16.mxu0 0
    %324 = vmatpush1.bf16.msra.mxu0 %v250
    %325 = vmatprep.subr.bf16.mxu0 0
    %326 = vmatpush1.bf16.msra.mxu0 %v251
    %327 = vmatprep.subr.bf16.mxu0 0
    %328 = vmatpush1.bf16.msra.mxu0 %v252
    %329 = vmatprep.subr.bf16.mxu0 0
    %330 = vmatpush1.bf16.msra.mxu0 %v253
    %331 = vmatprep.subr.bf16.mxu0 0
    %332 = vmatpush1.bf16.msra.mxu0 %v254
    %333 = vmatprep.subr.bf16.mxu0 0
    %334 = vmatpush1.bf16.msra.mxu0 %v255
    %335 = vmatprep.subr.bf16.mxu0 0
    %336 = vmatpush1.bf16.msra.mxu0 %v256
    %337 = vmatprep.mubr.bf16.mxu0 %v106
    %338 = vmatmul.mubr.bf16.gmra.mrb[0].mxu0 %v99
    %v339 = vpop.f32.mrb[0].mxu0
    %v340 = vadd.f32 0.0, %v339
    %v341 = vpop.f32.mrb[0].mxu0
    %v342 = vpop.f32.mrb[0].mxu0
    %v343 = vpop.f32.mrb[0].mxu0
    %344 = vdwg.mxu0
    %345 = vmatprep.subr.bf16.mxu0 0
    %346 = vmatpush1.bf16.msra.mxu0 %v257
    %347 = vmatprep.subr.bf16.mxu0 0
    %348 = vmatpush1.bf16.msra.mxu0 %v258
    %349 = vmatprep.subr.bf16.mxu0 0
    %350 = vmatpush1.bf16.msra.mxu0 %v259
    %351 = vmatprep.subr.bf16.mxu0 0
    %352 = vmatpush1.bf16.msra.mxu0 %v260
    %353 = vmatprep.subr.bf16.mxu0 0
    %354 = vmatpush1.bf16.msra.mxu0 %v261
    %355 = vmatprep.subr.bf16.mxu0 0
    %356 = vmatpush1.bf16.msra.mxu0 %v262
    %357 = vmatprep.subr.bf16.mxu0 0
    %358 = vmatpush1.bf16.msra.mxu0 %v263
    %359 = vmatprep.subr.bf16.mxu0 0
    %360 = vmatpush1.bf16.msra.mxu0 %v264
    %361 = vmatprep.subr.bf16.mxu0 0
    %362 = vmatpush1.bf16.msra.mxu0 %v265
    %363 = vmatprep.subr.bf16.mxu0 0
    %364 = vmatpush1.bf16.msra.mxu0 %v266
    %365 = vmatprep.subr.bf16.mxu0 0
    %366 = vmatpush1.bf16.msra.mxu0 %v267
    %367 = vmatprep.subr.bf16.mxu0 0
    %368 = vmatpush1.bf16.msra.mxu0 %v268
    %369 = vmatprep.subr.bf16.mxu0 0
    %370 = vmatpush1.bf16.msra.mxu0 %v269
    %371 = vmatprep.subr.bf16.mxu0 0
    %372 = vmatpush1.bf16.msra.mxu0 %v270
    %373 = vmatprep.subr.bf16.mxu0 0
    %374 = vmatpush1.bf16.msra.mxu0 %v271
    %375 = vmatprep.subr.bf16.mxu0 0
    %376 = vmatpush1.bf16.msra.mxu0 %v272
    %377 = vmatprep.mubr.bf16.mxu0 %v108
    %378 = vmatmul.mubr.bf16.gmra.mrb[0].mxu0 %v107
    %v379 = vpop.f32.mrb[0].mxu0
    %v380 = vadd.f32 %v340, %v379
    %v381 = vpop.f32.mrb[0].mxu0
    %v382 = vpop.f32.mrb[0].mxu0
    %v383 = vpop.f32.mrb[0].mxu0
    %384 = vdwg.mxu0
    %v385 = vld [vmem:[%s2] sm:$0x1]
    %v387 = vlaneseq
    %v388 = vshrl.u32 %v387, 7
    %v389 = vsub.s32 0, %v388
    %v390 = vrot.slane %v385, %v389
    %v392 = vmul.f32 %v380, %v390
    %v393 = vld [vmem:[%s3] sm:$0x1]
    %v395 = vlaneseq
    %v396 = vshrl.u32 %v395, 7
    %v397 = vsub.s32 0, %v396
    %v398 = vrot.slane %v393, %v397
    %v400 = vadd.f32 %v392, %v398
    %401 = vst [vmem:[#allocation2] sm:$0x3] %v400
    // Predicated region
    $region18: #{model_forward.11} parent=1 // pred_check
      _
    $region19: #{model_forward.11} parent=1 // pred_check_branch
      %403 = sbr.rel (0) target = $region21
    $region20: #{model_forward.11} parent=1 // pred_region
      %s405 = ssub.s32 32, 32
      %406 = vsyncadd [#allocation3], %s405
      %s408 = sshll.u32 [#allocation2], 4
      %s409 = int_to_ptr.vmem [resolvable:$true] %s408
      %411 = dma.vmem_to_hbm [thread:$0]  %s409, 32, %s4, [#allocation3]
    $region21: #{model_forward.11} parent=1 // pred_fallthru
      _
    // Predicated region
    $region22: #{model_forward.11} parent=1 // pred_check
      _
    $region23: #{model_forward.11} parent=1 // pred_check_branch
      %413 = sbr.rel (0) target = $region25
    $region24: #{model_forward.11} parent=1 // pred_region
      %414 = dma.done [#allocation3], 32
    $region25: #{model_forward.11} parent=1 // pred_fallthru
      _
    %415 = vsyncpa [#allocation3], 1

// kernel: model_forward.10
$region0: #{model_forward.10}
  #allocation0 [shape = 'u32[]', space=smem, size = 0x4, offset = 0x4, fixed_abs, tag = 'smem constant byte address 0x4 - core index']
  #allocation1 [shape = 'u32[144,128]{1,0:T(1,128)}', space=vmem, size = 0x12000, scoped, tag = 'internal scratch']
  %s0 = inlined_call_operand.vmem [shape: bf16[2,800], index: 0, kind: input, shape index: {}]
  %s1 = inlined_call_operand.vmem [shape: bf16[800,512], index: 1, kind: input, shape index: {}]
  %s2 = inlined_call_operand.vmem [shape: f32[1,512], index: 2, kind: input, shape index: {}]
  %s3 = inlined_call_operand.vmem [shape: f32[1,512], index: 3, kind: input, shape index: {}]
  %s4 = inlined_call_operand.vmem [shape: bf16[2,512], index: 4, kind: output, shape index: {}]
  %s5 = sld [smem:[#allocation0]]
  $region26: #{model_forward.10} parent=0
    _
  %s7 = ssub.s32 1, %s5
  %s8 = scalar_select 0, %s7, %s5
  // Predicated region
  $region2: #{model_forward.10} parent=0 // pred_check
    _
  $region3: #{model_forward.10} parent=0 // pred_check_branch
    %10 = sbr.rel (0) target = $region5
  $region4: #{model_forward.10} parent=0 // pred_region
    _
  $region5: #{model_forward.10} parent=0 // pred_fallthru
    _
  // Predicated region
  $region6: #{model_forward.10} parent=0 // pred_check
    _
  $region7: #{model_forward.10} parent=0 // pred_check_branch
    %12 = sbr.rel (0) target = $region9
  $region8: #{model_forward.10} parent=0 // pred_region
    _
  $region9: #{model_forward.10} parent=0 // pred_fallthru
    _
  // Predicated region
  $region10: #{model_forward.10} parent=0 // pred_check
    _
  $region11: #{model_forward.10} parent=0 // pred_check_branch
    %14 = sbr.rel (0) target = $region13
  $region12: #{model_forward.10} parent=0 // pred_region
    _
  $region13: #{model_forward.10} parent=0 // pred_fallthru
    _
  // Predicated region
  $region14: #{model_forward.10} parent=0 // pred_check
    _
  $region15: #{model_forward.10} parent=0 // pred_check_branch
    %16 = sbr.rel (0) target = $region17
  $region16: #{model_forward.10} parent=0 // pred_region
    _
  $region17: #{model_forward.10} parent=0 // pred_fallthru
    _
  %v18 = vld [vmem:[%s0] sm:$0x7f]
  %v19 = vld [vmem:[%s1] sm:$0xff]
  %v20 = vld [vmem:[%s1 + $0x8] sm:$0xff]
  %v21 = vld [vmem:[%s1 + $0x10] sm:$0xff]
  %v22 = vld [vmem:[%s1 + $0x18] sm:$0xff]
  %v23 = vld [vmem:[%s1 + $0x20] sm:$0xff]
  %v24 = vld [vmem:[%s1 + $0x28] sm:$0xff]
  %v25 = vld [vmem:[%s1 + $0x30] sm:$0xff]
  %v26 = vld [vmem:[%s1 + $0x38] sm:$0xff]
  %v27 = vld [vmem:[%s1 + $0x40] sm:$0xff]
  %v28 = vld [vmem:[%s1 + $0x48] sm:$0xff]
  %v29 = vld [vmem:[%s1 + $0x50] sm:$0xff]
  %v30 = vld [vmem:[%s1 + $0x58] sm:$0xff]
  %v31 = vld [vmem:[%s1 + $0x60] sm:$0xff]
  %v32 = vld [vmem:[%s1 + $0x68] sm:$0xff]
  %v33 = vld [vmem:[%s1 + $0x70] sm:$0xff]
  %v34 = vld [vmem:[%s1 + $0x78] sm:$0xff]
  %v35 = vld [vmem:[%s1 + $0x80] sm:$0xff]
  %v36 = vld [vmem:[%s1 + $0x88] sm:$0xff]
  %v37 = vld [vmem:[%s1 + $0x90] sm:$0xff]
  %v38 = vld [vmem:[%s1 + $0x98] sm:$0xff]
  %v39 = vld [vmem:[%s1 + $0xa0] sm:$0xff]
  %v40 = vld [vmem:[%s1 + $0xa8] sm:$0xff]
  %v41 = vld [vmem:[%s1 + $0xb0] sm:$0xff]
  %v42 = vld [vmem:[%s1 + $0xb8] sm:$0xff]
  %v43 = vld [vmem:[%s1 + $0xc0] sm:$0xff]
  %v44 = vld [vmem:[%s1 + $0xc8] sm:$0xff]
  %v45 = vld [vmem:[%s1 + $0xd0] sm:$0xff]
  %v46 = vld [vmem:[%s1 + $0xd8] sm:$0xff]
  %v47 = vld [vmem:[%s1 + $0xe0] sm:$0xff]
  %v48 = vld [vmem:[%s1 + $0xe8] sm:$0xff]
  %v49 = vld [vmem:[%s1 + $0xf0] sm:$0xff]
  %v50 = vld [vmem:[%s1 + $0xf8] sm:$0xff]
  %v51 = vld [vmem:[%s1 + $0x100] sm:$0xff]
  %v52 = vld [vmem:[%s1 + $0x108] sm:$0xff]
  %v53 = vld [vmem:[%s1 + $0x110] sm:$0xff]
  %v54 = vld [vmem:[%s1 + $0x118] sm:$0xff]
  %v55 = vld [vmem:[%s1 + $0x120] sm:$0xff]
  %v56 = vld [vmem:[%s1 + $0x128] sm:$0xff]
  %v57 = vld [vmem:[%s1 + $0x130] sm:$0xff]
  %v58 = vld [vmem:[%s1 + $0x138] sm:$0xff]
  %v59 = vld [vmem:[%s1 + $0x140] sm:$0xff]
  %v60 = vld [vmem:[%s1 + $0x148] sm:$0xff]
  %v61 = vld [vmem:[%s1 + $0x150] sm:$0xff]
  %v62 = vld [vmem:[%s1 + $0x158] sm:$0xff]
  %v63 = vld [vmem:[%s1 + $0x160] sm:$0xff]
  %v64 = vld [vmem:[%s1 + $0x168] sm:$0xff]
  %v65 = vld [vmem:[%s1 + $0x170] sm:$0xff]
  %v66 = vld [vmem:[%s1 + $0x178] sm:$0xff]
  %v67 = vld [vmem:[%s1 + $0x180] sm:$0xff]
  %v68 = vld [vmem:[%s1 + $0x188] sm:$0xff]
  %v69 = vld [vmem:[%s1 + $0x190] sm:$0xff]
  %v70 = vld [vmem:[%s1 + $0x198] sm:$0xff]
  %v71 = vld [vmem:[%s1 + $0x1a0] sm:$0xff]
  %v72 = vld [vmem:[%s1 + $0x1a8] sm:$0xff]
  %v73 = vld [vmem:[%s1 + $0x1b0] sm:$0xff]
  %v74 = vld [vmem:[%s1 + $0x1b8] sm:$0xff]
  %v75 = vld [vmem:[%s1 + $0x1c0] sm:$0xff]
  %v76 = vld [vmem:[%s1 + $0x1c8] sm:$0xff]
  %v77 = vld [vmem:[%s1 + $0x1d0] sm:$0xff]
  %v78 = vld [vmem:[%s1 + $0x1d8] sm:$0xff]
  %v79 = vld [vmem:[%s1 + $0x1e0] sm:$0xff]
  %v80 = vld [vmem:[%s1 + $0x1e8] sm:$0xff]
  %v81 = vld [vmem:[%s1 + $0x1f0] sm:$0xff]
  %v82 = vld [vmem:[%s1 + $0x1f8] sm:$0xff]
  %v83 = vld [vmem:[%s1 + $0x200] sm:$0xff]
  %v84 = vld [vmem:[%s1 + $0x208] sm:$0xff]
  %v85 = vld [vmem:[%s1 + $0x210] sm:$0xff]
  %v86 = vld [vmem:[%s1 + $0x218] sm:$0xff]
  %v87 = vld [vmem:[%s1 + $0x220] sm:$0xff]
  %v88 = vld [vmem:[%s1 + $0x228] sm:$0xff]
  %v89 = vld [vmem:[%s1 + $0x230] sm:$0xff]
  %v90 = vld [vmem:[%s1 + $0x238] sm:$0xff]
  %v91 = vld [vmem:[%s1 + $0x240] sm:$0xff]
  %v92 = vld [vmem:[%s1 + $0x248] sm:$0xff]
  %v93 = vld [vmem:[%s1 + $0x250] sm:$0xff]
  %v94 = vld [vmem:[%s1 + $0x258] sm:$0xff]
  %v95 = vld [vmem:[%s1 + $0x260] sm:$0xff]
  %v96 = vld [vmem:[%s1 + $0x268] sm:$0xff]
  %v97 = vld [vmem:[%s1 + $0x270] sm:$0xff]
  %v98 = vld [vmem:[%s1 + $0x278] sm:$0xff]
  %v99 = vld [vmem:[%s1 + $0x280] sm:$0xff]
  %v100 = vld [vmem:[%s1 + $0x288] sm:$0xff]
  %v101 = vld [vmem:[%s1 + $0x290] sm:$0xff]
  %v102 = vld [vmem:[%s1 + $0x298] sm:$0xff]
  %v103 = vld [vmem:[%s1 + $0x2a0] sm:$0xff]
  %v104 = vld [vmem:[%s1 + $0x2a8] sm:$0xff]
  %v105 = vld [vmem:[%s1 + $0x2b0] sm:$0xff]
  %v106 = vld [vmem:[%s1 + $0x2b8] sm:$0xff]
  %v107 = vld [vmem:[%s1 + $0x2c0] sm:$0xff]
  %v108 = vld [vmem:[%s1 + $0x2c8] sm:$0xff]
  %v109 = vld [vmem:[%s1 + $0x2d0] sm:$0xff]
  %v110 = vld [vmem:[%s1 + $0x2d8] sm:$0xff]
  %v111 = vld [vmem:[%s1 + $0x2e0] sm:$0xff]
  %v112 = vld [vmem:[%s1 + $0x2e8] sm:$0xff]
  %v113 = vld [vmem:[%s1 + $0x2f0] sm:$0xff]
  %v114 = vld [vmem:[%s1 + $0x2f8] sm:$0xff]
  %v115 = vld [vmem:[%s1 + $0x300] sm:$0xff]
  %v116 = vld [vmem:[%s1 + $0x308] sm:$0xff]
  %v117 = vld [vmem:[%s1 + $0x310] sm:$0xff]
  %v118 = vld [vmem:[%s1 + $0x318] sm:$0xff]
  %v119 = vld [vmem:[%s1 + $0x320] sm:$0xff]
  %v120 = vld [vmem:[%s1 + $0x328] sm:$0xff]
  %v121 = vld [vmem:[%s1 + $0x330] sm:$0xff]
  %v122 = vld [vmem:[%s1 + $0x338] sm:$0xff]
  %v123 = vld [vmem:[%s1 + $0x340] sm:$0xff]
  %v124 = vld [vmem:[%s1 + $0x348] sm:$0xff]
  %v125 = vld [vmem:[%s1 + $0x350] sm:$0xff]
  %v126 = vld [vmem:[%s1 + $0x358] sm:$0xff]
  %v127 = vld [vmem:[%s1 + $0x360] sm:$0xff]
  %v128 = vld [vmem:[%s1 + $0x368] sm:$0xff]
  %v129 = vld [vmem:[%s1 + $0x370] sm:$0xff]
  %v130 = vld [vmem:[%s1 + $0x378] sm:$0xff]
  %v131 = vld [vmem:[%s1 + $0x380] sm:$0xff]
  %v132 = vld [vmem:[%s1 + $0x388] sm:$0xff]
  %v133 = vld [vmem:[%s1 + $0x390] sm:$0xff]
  %v134 = vld [vmem:[%s1 + $0x398] sm:$0xff]
  %v135 = vld [vmem:[%s1 + $0x3a0] sm:$0xff]
  %v136 = vld [vmem:[%s1 + $0x3a8] sm:$0xff]
  %v137 = vld [vmem:[%s1 + $0x3b0] sm:$0xff]
  %v138 = vld [vmem:[%s1 + $0x3b8] sm:$0xff]
  %v139 = vld [vmem:[%s1 + $0x3c0] sm:$0xff]
  %v140 = vld [vmem:[%s1 + $0x3c8] sm:$0xff]
  %v141 = vld [vmem:[%s1 + $0x3d0] sm:$0xff]
  %v142 = vld [vmem:[%s1 + $0x3d8] sm:$0xff]
  %v143 = vld [vmem:[%s1 + $0x3e0] sm:$0xff]
  %v144 = vld [vmem:[%s1 + $0x3e8] sm:$0xff]
  %v145 = vld [vmem:[%s1 + $0x3f0] sm:$0xff]
  %v146 = vld [vmem:[%s1 + $0x3f8] sm:$0xff]
  %v147 = vld [vmem:[%s1 + $0x400] sm:$0xff]
  %v148 = vld [vmem:[%s1 + $0x408] sm:$0xff]
  %v149 = vld [vmem:[%s1 + $0x410] sm:$0xff]
  %v150 = vld [vmem:[%s1 + $0x418] sm:$0xff]
  %v151 = vld [vmem:[%s1 + $0x420] sm:$0xff]
  %v152 = vld [vmem:[%s1 + $0x428] sm:$0xff]
  %v153 = vld [vmem:[%s1 + $0x430] sm:$0xff]
  %v154 = vld [vmem:[%s1 + $0x438] sm:$0xff]
  %v155 = vld [vmem:[%s1 + $0x440] sm:$0xff]
  %v156 = vld [vmem:[%s1 + $0x448] sm:$0xff]
  %v157 = vld [vmem:[%s1 + $0x450] sm:$0xff]
  %v158 = vld [vmem:[%s1 + $0x458] sm:$0xff]
  %v159 = vld [vmem:[%s1 + $0x460] sm:$0xff]
  %v160 = vld [vmem:[%s1 + $0x468] sm:$0xff]
  %v161 = vld [vmem:[%s1 + $0x470] sm:$0xff]
  %v162 = vld [vmem:[%s1 + $0x478] sm:$0xff]
  %v163 = vld [vmem:[%s1 + $0x480] sm:$0xff]
  %v164 = vld [vmem:[%s1 + $0x488] sm:$0xff]
  %v165 = vld [vmem:[%s1 + $0x490] sm:$0xff]
  %v166 = vld [vmem:[%s1 + $0x498] sm:$0xff]
  %v167 = vld [vmem:[%s1 + $0x4a0] sm:$0xff]
  %v168 = vld [vmem:[%s1 + $0x4a8] sm:$0xff]
  %v169 = vld [vmem:[%s1 + $0x4b0] sm:$0xff]
  %v170 = vld [vmem:[%s1 + $0x4b8] sm:$0xff]
  %v171 = vld [vmem:[%s1 + $0x4c0] sm:$0xff]
  %v172 = vld [vmem:[%s1 + $0x4c8] sm:$0xff]
  %v173 = vld [vmem:[%s1 + $0x4d0] sm:$0xff]
  %v174 = vld [vmem:[%s1 + $0x4d8] sm:$0xff]
  %v175 = vld [vmem:[%s1 + $0x4e0] sm:$0xff]
  %v176 = vld [vmem:[%s1 + $0x4e8] sm:$0xff]
  %v177 = vld [vmem:[%s1 + $0x4f0] sm:$0xff]
  %v178 = vld [vmem:[%s1 + $0x4f8] sm:$0xff]
  %v179 = vld [vmem:[%s1 + $0x500] sm:$0xff]
  %v180 = vld [vmem:[%s1 + $0x508] sm:$0xff]
  %v181 = vld [vmem:[%s1 + $0x510] sm:$0xff]
  %v182 = vld [vmem:[%s1 + $0x518] sm:$0xff]
  %v183 = vld [vmem:[%s1 + $0x520] sm:$0xff]
  %v184 = vld [vmem:[%s1 + $0x528] sm:$0xff]
  %v185 = vld [vmem:[%s1 + $0x530] sm:$0xff]
  %v186 = vld [vmem:[%s1 + $0x538] sm:$0xff]
  %v187 = vld [vmem:[%s1 + $0x540] sm:$0xff]
  %v188 = vld [vmem:[%s1 + $0x548] sm:$0xff]
  %v189 = vld [vmem:[%s1 + $0x550] sm:$0xff]
  %v190 = vld [vmem:[%s1 + $0x558] sm:$0xff]
  %v191 = vld [vmem:[%s1 + $0x560] sm:$0xff]
  %v192 = vld [vmem:[%s1 + $0x568] sm:$0xff]
  %v193 = vld [vmem:[%s1 + $0x570] sm:$0xff]
  %v194 = vld [vmem:[%s1 + $0x578] sm:$0xff]
  %v195 = vld [vmem:[%s1 + $0x580] sm:$0xff]
  %v196 = vld [vmem:[%s1 + $0x588] sm:$0xff]
  %v197 = vld [vmem:[%s1 + $0x590] sm:$0xff]
  %v198 = vld [vmem:[%s1 + $0x598] sm:$0xff]
  %v199 = vld [vmem:[%s1 + $0x5a0] sm:$0xff]
  %v200 = vld [vmem:[%s1 + $0x5a8] sm:$0xff]
  %v201 = vld [vmem:[%s1 + $0x5b0] sm:$0xff]
  %v202 = vld [vmem:[%s1 + $0x5b8] sm:$0xff]
  %v203 = vld [vmem:[%s1 + $0x5c0] sm:$0xff]
  %v204 = vld [vmem:[%s1 + $0x5c8] sm:$0xff]
  %v205 = vld [vmem:[%s1 + $0x5d0] sm:$0xff]
  %v206 = vld [vmem:[%s1 + $0x5d8] sm:$0xff]
  %v207 = vld [vmem:[%s1 + $0x5e0] sm:$0xff]
  %v208 = vld [vmem:[%s1 + $0x5e8] sm:$0xff]
  %v209 = vld [vmem:[%s1 + $0x5f0] sm:$0xff]
  %v210 = vld [vmem:[%s1 + $0x5f8] sm:$0xff]
  %v211 = vld [vmem:[%s1 + $0x600] sm:$0xff]
  %v212 = vld [vmem:[%s1 + $0x608] sm:$0xff]
  %v213 = vld [vmem:[%s1 + $0x610] sm:$0xff]
  %v214 = vld [vmem:[%s1 + $0x618] sm:$0xff]
  %v215 = vld [vmem:[%s1 + $0x620] sm:$0xff]
  %v216 = vld [vmem:[%s1 + $0x628] sm:$0xff]
  %v217 = vld [vmem:[%s1 + $0x630] sm:$0xff]
  %v218 = vld [vmem:[%s1 + $0x638] sm:$0xff]
  %v220 = vcombine.high %v18, %v18
  %v222 = vunpack.c.l.s4 1966171168
  %v223 = vunpack.c.0.s8 %v222
  %v224 = vlaneseq
  %v225 = vshrl.u32 %v224, 7
  %v226 = vsub.s32 %v223, %v225
  %v227 = vrot.slane %v18, %v226
  %v229 = vunpack.c.l.s4 1966171168
  %v230 = vunpack.c.0.s8 %v229
  %v231 = vlaneseq
  %v232 = vshrl.u32 %v231, 7
  %v233 = vsub.s32 %v230, %v232
  %v234 = vrot.slane %v220, %v233
  %v235 = vcombine.high %v227, %v227
  %v236 = vcombine.high %v234, %v234
  %v238 = vunpack.c.l.s4 1966171168
  %v239 = vunpack.c.0.s8 %v238
  %v240 = vlaneseq
  %v241 = vshrl.u32 %v240, 7
  %v242 = vsub.s32 %v239, %v241
  %v243 = vrot.slane %v227, %v242
  %v245 = vunpack.c.l.s4 1966171168
  %v246 = vunpack.c.0.s8 %v245
  %v247 = vlaneseq
  %v248 = vshrl.u32 %v247, 7
  %v249 = vsub.s32 %v246, %v248
  %v250 = vrot.slane %v234, %v249
  %v252 = vunpack.c.l.s4 1966171168
  %v253 = vunpack.c.0.s8 %v252
  %v254 = vlaneseq
  %v255 = vshrl.u32 %v254, 7
  %v256 = vsub.s32 %v253, %v255
  %v257 = vrot.slane %v235, %v256
  %v259 = vunpack.c.l.s4 1966171168
  %v260 = vunpack.c.0.s8 %v259
  %v261 = vlaneseq
  %v262 = vshrl.u32 %v261, 7
  %v263 = vsub.s32 %v260, %v262
  %v264 = vrot.slane %v236, %v263
  %v265 = vcombine.high %v243, %v243
  %v266 = vcombine.high %v250, %v250
  %v267 = vcombine.high %v257, %v257
  %v474 = vunpack.c.l.b16 %v19
  %v475 = vunpack.c.h.b16 %v19
  %v476 = vunpack.c.l.b16 %v20
  %v477 = vunpack.c.h.b16 %v20
  %v478 = vunpack.c.l.b16 %v21
  %v479 = vunpack.c.h.b16 %v21
  %v480 = vunpack.c.l.b16 %v22
  %v481 = vunpack.c.h.b16 %v22
  %v482 = vunpack.c.l.b16 %v23
  %v483 = vunpack.c.h.b16 %v23
  %v484 = vunpack.c.l.b16 %v24
  %v485 = vunpack.c.h.b16 %v24
  %v486 = vunpack.c.l.b16 %v25
  %v487 = vunpack.c.h.b16 %v25
  %v488 = vunpack.c.l.b16 %v26
  %v489 = vunpack.c.h.b16 %v26
  %v490 = vunpack.c.l.b16 %v27
  %v491 = vunpack.c.h.b16 %v27
  %v492 = vunpack.c.l.b16 %v28
  %v493 = vunpack.c.h.b16 %v28
  %v494 = vunpack.c.l.b16 %v29
  %v495 = vunpack.c.h.b16 %v29
  %v496 = vunpack.c.l.b16 %v30
  %v497 = vunpack.c.h.b16 %v30
  %v498 = vunpack.c.l.b16 %v31
  %v499 = vunpack.c.h.b16 %v31
  %v500 = vunpack.c.l.b16 %v32
  %v501 = vunpack.c.h.b16 %v32
  %v502 = vunpack.c.l.b16 %v33
  %v503 = vunpack.c.h.b16 %v33
  %v504 = vunpack.c.l.b16 %v34
  %v505 = vunpack.c.h.b16 %v34
  %v506 = vunpack.c.l.b16 %v35
  %v507 = vunpack.c.h.b16 %v35
  %v508 = vunpack.c.l.b16 %v36
  %v509 = vunpack.c.h.b16 %v36
  %v510 = vunpack.c.l.b16 %v37
  %v511 = vunpack.c.h.b16 %v37
  %v512 = vunpack.c.l.b16 %v38
  %v513 = vunpack.c.h.b16 %v38
  %v514 = vunpack.c.l.b16 %v39
  %v515 = vunpack.c.h.b16 %v39
  %v516 = vunpack.c.l.b16 %v40
  %v517 = vunpack.c.h.b16 %v40
  %v518 = vunpack.c.l.b16 %v41
  %v519 = vunpack.c.h.b16 %v41
  %v520 = vunpack.c.l.b16 %v42
  %v521 = vunpack.c.h.b16 %v42
  %v522 = vunpack.c.l.b16 %v43
  %v523 = vunpack.c.h.b16 %v43
  %v524 = vunpack.c.l.b16 %v44
  %v525 = vunpack.c.h.b16 %v44
  %v526 = vunpack.c.l.b16 %v45
  %v527 = vunpack.c.h.b16 %v45
  %v528 = vunpack.c.l.b16 %v46
  %v529 = vunpack.c.h.b16 %v46
  %v530 = vunpack.c.l.b16 %v47
  %v531 = vunpack.c.h.b16 %v47
  %v532 = vunpack.c.l.b16 %v48
  %v533 = vunpack.c.h.b16 %v48
  %v534 = vunpack.c.l.b16 %v49
  %v535 = vunpack.c.h.b16 %v49
  %v536 = vunpack.c.l.b16 %v50
  %v537 = vunpack.c.h.b16 %v50
  %v538 = vunpack.c.l.b16 %v51
  %v539 = vunpack.c.h.b16 %v51
  %v540 = vunpack.c.l.b16 %v52
  %v541 = vunpack.c.h.b16 %v52
  %v542 = vunpack.c.l.b16 %v53
  %v543 = vunpack.c.h.b16 %v53
  %v544 = vunpack.c.l.b16 %v54
  %v545 = vunpack.c.h.b16 %v54
  %v546 = vunpack.c.l.b16 %v55
  %v547 = vunpack.c.h.b16 %v55
  %v548 = vunpack.c.l.b16 %v56
  %v549 = vunpack.c.h.b16 %v56
  %v550 = vunpack.c.l.b16 %v57
  %v551 = vunpack.c.h.b16 %v57
  %v552 = vunpack.c.l.b16 %v58
  %v553 = vunpack.c.h.b16 %v58
  %v554 = vunpack.c.l.b16 %v59
  %v555 = vunpack.c.h.b16 %v59
  %v556 = vunpack.c.l.b16 %v60
  %v557 = vunpack.c.h.b16 %v60
  %v558 = vunpack.c.l.b16 %v61
  %v559 = vunpack.c.h.b16 %v61
  %v560 = vunpack.c.l.b16 %v62
  %v561 = vunpack.c.h.b16 %v62
  %v562 = vunpack.c.l.b16 %v63
  %v563 = vunpack.c.h.b16 %v63
  %v564 = vunpack.c.l.b16 %v64
  %v565 = vunpack.c.h.b16 %v64
  %v566 = vunpack.c.l.b16 %v65
  %v567 = vunpack.c.h.b16 %v65
  %v568 = vunpack.c.l.b16 %v66
  %v569 = vunpack.c.h.b16 %v66
  %v570 = vunpack.c.l.b16 %v67
  %v571 = vunpack.c.h.b16 %v67
  %v572 = vunpack.c.l.b16 %v68
  %v573 = vunpack.c.h.b16 %v68
  %v574 = vunpack.c.l.b16 %v69
  %v575 = vunpack.c.h.b16 %v69
  %v576 = vunpack.c.l.b16 %v70
  %v577 = vunpack.c.h.b16 %v70
  %v578 = vunpack.c.l.b16 %v71
  %v579 = vunpack.c.h.b16 %v71
  %v580 = vunpack.c.l.b16 %v72
  %v581 = vunpack.c.h.b16 %v72
  %v582 = vunpack.c.l.b16 %v73
  %v583 = vunpack.c.h.b16 %v73
  %v584 = vunpack.c.l.b16 %v74
  %v585 = vunpack.c.h.b16 %v74
  %v586 = vunpack.c.l.b16 %v75
  %v587 = vunpack.c.h.b16 %v75
  %v588 = vunpack.c.l.b16 %v76
  %v589 = vunpack.c.h.b16 %v76
  %v590 = vunpack.c.l.b16 %v77
  %v591 = vunpack.c.h.b16 %v77
  %v592 = vunpack.c.l.b16 %v78
  %v593 = vunpack.c.h.b16 %v78
  %v594 = vunpack.c.l.b16 %v79
  %v595 = vunpack.c.h.b16 %v79
  %v596 = vunpack.c.l.b16 %v80
  %v597 = vunpack.c.h.b16 %v80
  %v598 = vunpack.c.l.b16 %v81
  %v599 = vunpack.c.h.b16 %v81
  %v600 = vunpack.c.l.b16 %v82
  %v601 = vunpack.c.h.b16 %v82
  %v602 = vunpack.c.l.b16 %v83
  %v603 = vunpack.c.h.b16 %v83
  %v604 = vunpack.c.l.b16 %v84
  %v605 = vunpack.c.h.b16 %v84
  %v606 = vunpack.c.l.b16 %v85
  %v607 = vunpack.c.h.b16 %v85
  %v608 = vunpack.c.l.b16 %v86
  %v609 = vunpack.c.h.b16 %v86
  %v610 = vunpack.c.l.b16 %v87
  %v611 = vunpack.c.h.b16 %v87
  %v612 = vunpack.c.l.b16 %v88
  %v613 = vunpack.c.h.b16 %v88
  %v614 = vunpack.c.l.b16 %v89
  %v615 = vunpack.c.h.b16 %v89
  %v616 = vunpack.c.l.b16 %v90
  %v617 = vunpack.c.h.b16 %v90
  %v618 = vunpack.c.l.b16 %v91
  %v619 = vunpack.c.h.b16 %v91
  %v620 = vunpack.c.l.b16 %v92
  %v621 = vunpack.c.h.b16 %v92
  %v622 = vunpack.c.l.b16 %v93
  %v623 = vunpack.c.h.b16 %v93
  %v624 = vunpack.c.l.b16 %v94
  %v625 = vunpack.c.h.b16 %v94
  %v626 = vunpack.c.l.b16 %v95
  %v627 = vunpack.c.h.b16 %v95
  %v628 = vunpack.c.l.b16 %v96
  %v629 = vunpack.c.h.b16 %v96
  %v630 = vunpack.c.l.b16 %v97
  %v631 = vunpack.c.h.b16 %v97
  %v632 = vunpack.c.l.b16 %v98
  %v633 = vunpack.c.h.b16 %v98
  %v634 = vunpack.c.l.b16 %v99
  %v635 = vunpack.c.h.b16 %v99
  %v636 = vunpack.c.l.b16 %v100
  %v637 = vunpack.c.h.b16 %v100
  %v638 = vunpack.c.l.b16 %v101
  %v639 = vunpack.c.h.b16 %v101
  %v640 = vunpack.c.l.b16 %v102
  %v641 = vunpack.c.h.b16 %v102
  %v642 = vunpack.c.l.b16 %v103
  %v643 = vunpack.c.h.b16 %v103
  %v644 = vunpack.c.l.b16 %v104
  %v645 = vunpack.c.h.b16 %v104
  %v646 = vunpack.c.l.b16 %v105
  %v647 = vunpack.c.h.b16 %v105
  %v648 = vunpack.c.l.b16 %v106
  %v649 = vunpack.c.h.b16 %v106
  %v650 = vunpack.c.l.b16 %v107
  %v651 = vunpack.c.h.b16 %v107
  %v652 = vunpack.c.l.b16 %v108
  %v653 = vunpack.c.h.b16 %v108
  %v654 = vunpack.c.l.b16 %v109
  %v655 = vunpack.c.h.b16 %v109
  %v656 = vunpack.c.l.b16 %v110
  %v657 = vunpack.c.h.b16 %v110
  %v658 = vunpack.c.l.b16 %v111
  %v659 = vunpack.c.h.b16 %v111
  %v660 = vunpack.c.l.b16 %v112
  %v661 = vunpack.c.h.b16 %v112
  %v662 = vunpack.c.l.b16 %v113
  %v663 = vunpack.c.h.b16 %v113
  %v664 = vunpack.c.l.b16 %v114
  %v665 = vunpack.c.h.b16 %v114
  %v666 = vunpack.c.l.b16 %v115
  %v667 = vunpack.c.h.b16 %v115
  %v668 = vunpack.c.l.b16 %v116
  %v669 = vunpack.c.h.b16 %v116
  %v670 = vunpack.c.l.b16 %v117
  %v671 = vunpack.c.h.b16 %v117
  %v672 = vunpack.c.l.b16 %v118
  %v673 = vunpack.c.h.b16 %v118
  %v674 = vunpack.c.l.b16 %v119
  %v675 = vunpack.c.h.b16 %v119
  %v676 = vunpack.c.l.b16 %v120
  %v677 = vunpack.c.h.b16 %v120
  %v678 = vunpack.c.l.b16 %v121
  %v679 = vunpack.c.h.b16 %v121
  %v680 = vunpack.c.l.b16 %v122
  %v681 = vunpack.c.h.b16 %v122
  %v682 = vunpack.c.l.b16 %v123
  %v683 = vunpack.c.h.b16 %v123
  %v684 = vunpack.c.l.b16 %v124
  %v685 = vunpack.c.h.b16 %v124
  %v686 = vunpack.c.l.b16 %v125
  %v687 = vunpack.c.h.b16 %v125
  %v688 = vunpack.c.l.b16 %v126
  %v689 = vunpack.c.h.b16 %v126
  %v690 = vunpack.c.l.b16 %v127
  %v691 = vunpack.c.h.b16 %v127
  %v692 = vunpack.c.l.b16 %v128
  %v693 = vunpack.c.h.b16 %v128
  %v694 = vunpack.c.l.b16 %v129
  %v695 = vunpack.c.h.b16 %v129
  %v696 = vunpack.c.l.b16 %v130
  %v697 = vunpack.c.h.b16 %v130
  %v698 = vunpack.c.l.b16 %v131
  %v699 = vunpack.c.h.b16 %v131
  %v700 = vunpack.c.l.b16 %v132
  %v701 = vunpack.c.h.b16 %v132
  %v702 = vunpack.c.l.b16 %v133
  %v703 = vunpack.c.h.b16 %v133
  %v704 = vunpack.c.l.b16 %v134
  %v705 = vunpack.c.h.b16 %v134
  %v706 = vunpack.c.l.b16 %v135
  %v707 = vunpack.c.h.b16 %v135
  %v708 = vunpack.c.l.b16 %v136
  %v709 = vunpack.c.h.b16 %v136
  %v710 = vunpack.c.l.b16 %v137
  %v711 = vunpack.c.h.b16 %v137
  %v712 = vunpack.c.l.b16 %v138
  %v713 = vunpack.c.h.b16 %v138
  %v714 = vunpack.c.l.b16 %v139
  %v715 = vunpack.c.h.b16 %v139
  %v716 = vunpack.c.l.b16 %v140
  %v717 = vunpack.c.h.b16 %v140
  %v718 = vunpack.c.l.b16 %v141
  %v719 = vunpack.c.h.b16 %v141
  %v720 = vunpack.c.l.b16 %v142
  %v721 = vunpack.c.h.b16 %v142
  %v722 = vunpack.c.l.b16 %v143
  %v723 = vunpack.c.h.b16 %v143
  %v724 = vunpack.c.l.b16 %v144
  %v725 = vunpack.c.h.b16 %v144
  %v726 = vunpack.c.l.b16 %v145
  %v727 = vunpack.c.h.b16 %v145
  %v728 = vunpack.c.l.b16 %v146
  %v729 = vunpack.c.h.b16 %v146
  %v730 = vunpack.c.l.b16 %v147
  %v731 = vunpack.c.h.b16 %v147
  %v732 = vunpack.c.l.b16 %v148
  %v733 = vunpack.c.h.b16 %v148
  %v734 = vunpack.c.l.b16 %v149
  %v735 = vunpack.c.h.b16 %v149
  %v736 = vunpack.c.l.b16 %v150
  %v737 = vunpack.c.h.b16 %v150
  %v738 = vunpack.c.l.b16 %v151
  %v739 = vunpack.c.h.b16 %v151
  %v740 = vunpack.c.l.b16 %v152
  %v741 = vunpack.c.h.b16 %v152
  %v742 = vunpack.c.l.b16 %v153
  %v743 = vunpack.c.h.b16 %v153
  %v744 = vunpack.c.l.b16 %v154
  %v745 = vunpack.c.h.b16 %v154
  %v746 = vunpack.c.l.b16 %v155
  %v747 = vunpack.c.h.b16 %v155
  %v748 = vunpack.c.l.b16 %v156
  %v749 = vunpack.c.h.b16 %v156
  %v750 = vunpack.c.l.b16 %v157
  %v751 = vunpack.c.h.b16 %v157
  %v752 = vunpack.c.l.b16 %v158
  %v753 = vunpack.c.h.b16 %v158
  %v754 = vunpack.c.l.b16 %v159
  %v755 = vunpack.c.h.b16 %v159
  %v756 = vunpack.c.l.b16 %v160
  %v757 = vunpack.c.h.b16 %v160
  %v758 = vunpack.c.l.b16 %v161
  %v759 = vunpack.c.h.b16 %v161
  %v760 = vunpack.c.l.b16 %v162
  %v761 = vunpack.c.h.b16 %v162
  %v762 = vunpack.c.l.b16 %v163
  %v763 = vunpack.c.h.b16 %v163
  %v764 = vunpack.c.l.b16 %v164
  %v765 = vunpack.c.h.b16 %v164
  %v766 = vunpack.c.l.b16 %v165
  %v767 = vunpack.c.h.b16 %v165
  %v768 = vunpack.c.l.b16 %v166
  %v769 = vunpack.c.h.b16 %v166
  %v770 = vunpack.c.l.b16 %v167
  %v771 = vunpack.c.h.b16 %v167
  %v772 = vunpack.c.l.b16 %v168
  %v773 = vunpack.c.h.b16 %v168
  %v774 = vunpack.c.l.b16 %v169
  %v775 = vunpack.c.h.b16 %v169
  %v776 = vunpack.c.l.b16 %v170
  %v777 = vunpack.c.h.b16 %v170
  %v778 = vunpack.c.l.b16 %v171
  %v779 = vunpack.c.h.b16 %v171
  %v780 = vunpack.c.l.b16 %v172
  %v781 = vunpack.c.h.b16 %v172
  %v782 = vunpack.c.l.b16 %v173
  %v783 = vunpack.c.h.b16 %v173
  %v784 = vunpack.c.l.b16 %v174
  %v785 = vunpack.c.h.b16 %v174
  %v786 = vunpack.c.l.b16 %v175
  %v787 = vunpack.c.h.b16 %v175
  %v788 = vunpack.c.l.b16 %v176
  %v789 = vunpack.c.h.b16 %v176
  %v790 = vunpack.c.l.b16 %v177
  %v791 = vunpack.c.h.b16 %v177
  %v792 = vunpack.c.l.b16 %v178
  %v793 = vunpack.c.h.b16 %v178
  %v794 = vunpack.c.l.b16 %v179
  %v795 = vunpack.c.h.b16 %v179
  %v796 = vunpack.c.l.b16 %v180
  %v797 = vunpack.c.h.b16 %v180
  %v798 = vunpack.c.l.b16 %v181
  %v799 = vunpack.c.h.b16 %v181
  %v800 = vunpack.c.l.b16 %v182
  %v801 = vunpack.c.h.b16 %v182
  %v802 = vunpack.c.l.b16 %v183
  %v803 = vunpack.c.h.b16 %v183
  %v804 = vunpack.c.l.b16 %v184
  %v805 = vunpack.c.h.b16 %v184
  %v806 = vunpack.c.l.b16 %v185
  %v807 = vunpack.c.h.b16 %v185
  %v808 = vunpack.c.l.b16 %v186
  %v809 = vunpack.c.h.b16 %v186
  %v810 = vunpack.c.l.b16 %v187
  %v811 = vunpack.c.h.b16 %v187
  %v812 = vunpack.c.l.b16 %v188
  %v813 = vunpack.c.h.b16 %v188
  %v814 = vunpack.c.l.b16 %v189
  %v815 = vunpack.c.h.b16 %v189
  %v816 = vunpack.c.l.b16 %v190
  %v817 = vunpack.c.h.b16 %v190
  %v818 = vunpack.c.l.b16 %v191
  %v819 = vunpack.c.h.b16 %v191
  %v820 = vunpack.c.l.b16 %v192
  %v821 = vunpack.c.h.b16 %v192
  %v822 = vunpack.c.l.b16 %v193
  %v823 = vunpack.c.h.b16 %v193
  %v824 = vunpack.c.l.b16 %v194
  %v825 = vunpack.c.h.b16 %v194
  %v826 = vunpack.c.l.b16 %v195
  %v827 = vunpack.c.h.b16 %v195
  %v828 = vunpack.c.l.b16 %v196
  %v829 = vunpack.c.h.b16 %v196
  %v830 = vunpack.c.l.b16 %v197
  %v831 = vunpack.c.h.b16 %v197
  %v832 = vunpack.c.l.b16 %v198
  %v833 = vunpack.c.h.b16 %v198
  %v834 = vunpack.c.l.b16 %v199
  %v835 = vunpack.c.h.b16 %v199
  %v836 = vunpack.c.l.b16 %v200
  %v837 = vunpack.c.h.b16 %v200
  %v838 = vunpack.c.l.b16 %v201
  %v839 = vunpack.c.h.b16 %v201
  %v840 = vunpack.c.l.b16 %v202
  %v841 = vunpack.c.h.b16 %v202
  %v842 = vunpack.c.l.b16 %v203
  %v843 = vunpack.c.h.b16 %v203
  %v844 = vunpack.c.l.b16 %v204
  %v845 = vunpack.c.h.b16 %v204
  %v846 = vunpack.c.l.b16 %v205
  %v847 = vunpack.c.h.b16 %v205
  %v848 = vunpack.c.l.b16 %v206
  %v849 = vunpack.c.h.b16 %v206
  %v850 = vunpack.c.l.b16 %v207
  %v851 = vunpack.c.h.b16 %v207
  %v852 = vunpack.c.l.b16 %v208
  %v853 = vunpack.c.h.b16 %v208
  %v854 = vunpack.c.l.b16 %v209
  %v855 = vunpack.c.h.b16 %v209
  %v856 = vunpack.c.l.b16 %v210
  %v857 = vunpack.c.h.b16 %v210
  %v858 = vunpack.c.l.b16 %v211
  %v859 = vunpack.c.h.b16 %v211
  %v860 = vunpack.c.l.b16 %v212
  %v861 = vunpack.c.h.b16 %v212
  %v862 = vunpack.c.l.b16 %v213
  %v863 = vunpack.c.h.b16 %v213
  %v864 = vunpack.c.l.b16 %v214
  %v865 = vunpack.c.h.b16 %v214
  %v866 = vunpack.c.l.b16 %v215
  %v867 = vunpack.c.h.b16 %v215
  %v868 = vunpack.c.l.b16 %v216
  %v869 = vunpack.c.h.b16 %v216
  %v870 = vunpack.c.l.b16 %v217
  %v871 = vunpack.c.h.b16 %v217
  %v872 = vunpack.c.l.b16 %v218
  %v873 = vunpack.c.h.b16 %v218
  %v874 = vpack.c.b16 %v478, %v474
  %v875 = vpack.c.b16 %v479, %v475
  %v876 = vpack.c.b16 %v480, %v476
  %v877 = vpack.c.b16 %v481, %v477
  %v878 = vpack.c.b16 %v486, %v482
  %v879 = vpack.c.b16 %v487, %v483
  %v880 = vpack.c.b16 %v488, %v484
  %v881 = vpack.c.b16 %v489, %v485
  %v882 = vpack.c.b16 %v494, %v490
  %v883 = vpack.c.b16 %v495, %v491
  %v884 = vpack.c.b16 %v496, %v492
  %v885 = vpack.c.b16 %v497, %v493
  %v886 = vpack.c.b16 %v502, %v498
  %v887 = vpack.c.b16 %v503, %v499
  %v888 = vpack.c.b16 %v504, %v500
  %v889 = vpack.c.b16 %v505, %v501
  %v890 = vpack.c.b16 %v510, %v506
  %v891 = vpack.c.b16 %v511, %v507
  %v892 = vpack.c.b16 %v512, %v508
  %v893 = vpack.c.b16 %v513, %v509
  %v894 = vpack.c.b16 %v518, %v514
  %v895 = vpack.c.b16 %v519, %v515
  %v896 = vpack.c.b16 %v520, %v516
  %v897 = vpack.c.b16 %v521, %v517
  %v898 = vpack.c.b16 %v526, %v522
  %v899 = vpack.c.b16 %v527, %v523
  %v900 = vpack.c.b16 %v528, %v524
  %v901 = vpack.c.b16 %v529, %v525
  %v902 = vpack.c.b16 %v534, %v530
  %v903 = vpack.c.b16 %v535, %v531
  %v904 = vpack.c.b16 %v536, %v532
  %v905 = vpack.c.b16 %v537, %v533
  %v906 = vpack.c.b16 %v542, %v538
  %v907 = vpack.c.b16 %v543, %v539
  %v908 = vpack.c.b16 %v544, %v540
  %v909 = vpack.c.b16 %v545, %v541
  %v910 = vpack.c.b16 %v550, %v546
  %v911 = vpack.c.b16 %v551, %v547
  %v912 = vpack.c.b16 %v552, %v548
  %v913 = vpack.c.b16 %v553, %v549
  %v914 = vpack.c.b16 %v558, %v554
  %v915 = vpack.c.b16 %v559, %v555
  %v916 = vpack.c.b16 %v560, %v556
  %v917 = vpack.c.b16 %v561, %v557
  %v918 = vpack.c.b16 %v566, %v562
  %v919 = vpack.c.b16 %v567, %v563
  %v920 = vpack.c.b16 %v568, %v564
  %v921 = vpack.c.b16 %v569, %v565
  %v922 = vpack.c.b16 %v574, %v570
  %v923 = vpack.c.b16 %v575, %v571
  %v924 = vpack.c.b16 %v576, %v572
  %v925 = vpack.c.b16 %v577, %v573
  %v926 = vpack.c.b16 %v582, %v578
  %v927 = vpack.c.b16 %v583, %v579
  %v928 = vpack.c.b16 %v584, %v580
  %v929 = vpack.c.b16 %v585, %v581
  %v930 = vpack.c.b16 %v590, %v586
  %v931 = vpack.c.b16 %v591, %v587
  %v932 = vpack.c.b16 %v592, %v588
  %v933 = vpack.c.b16 %v593, %v589
  %v934 = vpack.c.b16 %v598, %v594
  %v935 = vpack.c.b16 %v599, %v595
  %v936 = vpack.c.b16 %v600, %v596
  %v937 = vpack.c.b16 %v601, %v597
  %v938 = vpack.c.b16 %v606, %v602
  %v939 = vpack.c.b16 %v607, %v603
  %v940 = vpack.c.b16 %v608, %v604
  %v941 = vpack.c.b16 %v609, %v605
  %v942 = vpack.c.b16 %v614, %v610
  %v943 = vpack.c.b16 %v615, %v611
  %v944 = vpack.c.b16 %v616, %v612
  %v945 = vpack.c.b16 %v617, %v613
  %v946 = vpack.c.b16 %v622, %v618
  %v947 = vpack.c.b16 %v623, %v619
  %v948 = vpack.c.b16 %v624, %v620
  %v949 = vpack.c.b16 %v625, %v621
  %v950 = vpack.c.b16 %v630, %v626
  %v951 = vpack.c.b16 %v631, %v627
  %v952 = vpack.c.b16 %v632, %v628
  %v953 = vpack.c.b16 %v633, %v629
  %v954 = vpack.c.b16 %v638, %v634
  %v955 = vpack.c.b16 %v639, %v635
  %v956 = vpack.c.b16 %v640, %v636
  %v957 = vpack.c.b16 %v641, %v637
  %v958 = vpack.c.b16 %v646, %v642
  %v959 = vpack.c.b16 %v647, %v643
  %v960 = vpack.c.b16 %v648, %v644
  %v961 = vpack.c.b16 %v649, %v645
  %v962 = vpack.c.b16 %v654, %v650
  %v963 = vpack.c.b16 %v655, %v651
  %v964 = vpack.c.b16 %v656, %v652
  %v965 = vpack.c.b16 %v657, %v653
  %v966 = vpack.c.b16 %v662, %v658
  %v967 = vpack.c.b16 %v663, %v659
  %v968 = vpack.c.b16 %v664, %v660
  %v969 = vpack.c.b16 %v665, %v661
  %v970 = vpack.c.b16 %v670, %v666
  %v971 = vpack.c.b16 %v671, %v667
  %v972 = vpack.c.b16 %v672, %v668
  %v973 = vpack.c.b16 %v673, %v669
  %v974 = vpack.c.b16 %v678, %v674
  %v975 = vpack.c.b16 %v679, %v675
  %v976 = vpack.c.b16 %v680, %v676
  %v977 = vpack.c.b16 %v681, %v677
  %v978 = vpack.c.b16 %v686, %v682
  %v979 = vpack.c.b16 %v687, %v683
  %v980 = vpack.c.b16 %v688, %v684
  %v981 = vpack.c.b16 %v689, %v685
  %v982 = vpack.c.b16 %v694, %v690
  %v983 = vpack.c.b16 %v695, %v691
  %v984 = vpack.c.b16 %v696, %v692
  %v985 = vpack.c.b16 %v697, %v693
  %v986 = vpack.c.b16 %v702, %v698
  %v987 = vpack.c.b16 %v703, %v699
  %v988 = vpack.c.b16 %v704, %v700
  %v989 = vpack.c.b16 %v705, %v701
  %v990 = vpack.c.b16 %v710, %v706
  %v991 = vpack.c.b16 %v711, %v707
  %v992 = vpack.c.b16 %v712, %v708
  %v993 = vpack.c.b16 %v713, %v709
  %v994 = vpack.c.b16 %v718, %v714
  %v995 = vpack.c.b16 %v719, %v715
  %v996 = vpack.c.b16 %v720, %v716
  %v997 = vpack.c.b16 %v721, %v717
  %v998 = vpack.c.b16 %v726, %v722
  %v999 = vpack.c.b16 %v727, %v723
  %v1000 = vpack.c.b16 %v728, %v724
  %v1001 = vpack.c.b16 %v729, %v725
  %v1002 = vpack.c.b16 %v734, %v730
  %v1003 = vpack.c.b16 %v735, %v731
  %v1004 = vpack.c.b16 %v736, %v732
  %v1005 = vpack.c.b16 %v737, %v733
  %v1006 = vpack.c.b16 %v742, %v738
  %v1007 = vpack.c.b16 %v743, %v739
  %v1008 = vpack.c.b16 %v744, %v740
  %v1009 = vpack.c.b16 %v745, %v741
  %v1010 = vpack.c.b16 %v750, %v746
  %v1011 = vpack.c.b16 %v751, %v747
  %v1012 = vpack.c.b16 %v752, %v748
  %v1013 = vpack.c.b16 %v753, %v749
  %v1014 = vpack.c.b16 %v758, %v754
  %v1015 = vpack.c.b16 %v759, %v755
  %v1016 = vpack.c.b16 %v760, %v756
  %v1017 = vpack.c.b16 %v761, %v757
  %v1018 = vpack.c.b16 %v766, %v762
  %v1019 = vpack.c.b16 %v767, %v763
  %v1020 = vpack.c.b16 %v768, %v764
  %v1021 = vpack.c.b16 %v769, %v765
  %v1022 = vpack.c.b16 %v774, %v770
  %v1023 = vpack.c.b16 %v775, %v771
  %v1024 = vpack.c.b16 %v776, %v772
  %v1025 = vpack.c.b16 %v777, %v773
  %v1026 = vpack.c.b16 %v782, %v778
  %v1027 = vpack.c.b16 %v783, %v779
  %v1028 = vpack.c.b16 %v784, %v780
  %v1029 = vpack.c.b16 %v785, %v781
  %v1030 = vpack.c.b16 %v790, %v786
  %v1031 = vpack.c.b16 %v791, %v787
  %v1032 = vpack.c.b16 %v792, %v788
  %v1033 = vpack.c.b16 %v793, %v789
  %v1034 = vpack.c.b16 %v798, %v794
  %v1035 = vpack.c.b16 %v799, %v795
  %v1036 = vpack.c.b16 %v800, %v796
  %v1037 = vpack.c.b16 %v801, %v797
  %v1038 = vpack.c.b16 %v806, %v802
  %v1039 = vpack.c.b16 %v807, %v803
  %v1040 = vpack.c.b16 %v808, %v804
  %v1041 = vpack.c.b16 %v809, %v805
  %v1042 = vpack.c.b16 %v814, %v810
  %v1043 = vpack.c.b16 %v815, %v811
  %v1044 = vpack.c.b16 %v816, %v812
  %v1045 = vpack.c.b16 %v817, %v813
  %v1046 = vpack.c.b16 %v822, %v818
  %v1047 = vpack.c.b16 %v823, %v819
  %v1048 = vpack.c.b16 %v824, %v820
  %v1049 = vpack.c.b16 %v825, %v821
  %v1050 = vpack.c.b16 %v830, %v826
  %v1051 = vpack.c.b16 %v831, %v827
  %v1052 = vpack.c.b16 %v832, %v828
  %v1053 = vpack.c.b16 %v833, %v829
  %v1054 = vpack.c.b16 %v838, %v834
  %v1055 = vpack.c.b16 %v839, %v835
  %v1056 = vpack.c.b16 %v840, %v836
  %v1057 = vpack.c.b16 %v841, %v837
  %v1058 = vpack.c.b16 %v846, %v842
  %v1059 = vpack.c.b16 %v847, %v843
  %v1060 = vpack.c.b16 %v848, %v844
  %v1061 = vpack.c.b16 %v849, %v845
  %v1062 = vpack.c.b16 %v854, %v850
  %v1063 = vpack.c.b16 %v855, %v851
  %v1064 = vpack.c.b16 %v856, %v852
  %v1065 = vpack.c.b16 %v857, %v853
  %v1066 = vpack.c.b16 %v862, %v858
  %v1067 = vpack.c.b16 %v863, %v859
  %v1068 = vpack.c.b16 %v864, %v860
  %v1069 = vpack.c.b16 %v865, %v861
  %v1070 = vpack.c.b16 %v870, %v866
  %v1071 = vpack.c.b16 %v871, %v867
  %v1072 = vpack.c.b16 %v872, %v868
  %v1073 = vpack.c.b16 %v873, %v869
  %vm1274 = vcmask 261120
  %v1276 = vsel %vm1274, %v266, 0
  %1278 = vmatprep.subr.bf16.mxu0 %v875
  %1279 = vmatpush1.bf16.msra.mxu0 %v874
  %1280 = vmatprep.subr.bf16.mxu0 %v879
  %1281 = vmatpush1.bf16.msra.mxu0 %v878
  %1282 = vmatprep.subr.bf16.mxu0 %v883
  %1283 = vmatpush1.bf16.msra.mxu0 %v882
  %1284 = vmatprep.subr.bf16.mxu0 %v887
  %1285 = vmatpush1.bf16.msra.mxu0 %v886
  %1286 = vmatprep.subr.bf16.mxu0 %v891
  %1287 = vmatpush1.bf16.msra.mxu0 %v890
  %1288 = vmatprep.subr.bf16.mxu0 %v895
  %1289 = vmatpush1.bf16.msra.mxu0 %v894
  %1290 = vmatprep.subr.bf16.mxu0 %v899
  %1291 = vmatpush1.bf16.msra.mxu0 %v898
  %1292 = vmatprep.subr.bf16.mxu0 %v903
  %1293 = vmatpush1.bf16.msra.mxu0 %v902
  %1294 = vmatprep.subr.bf16.mxu0 %v907
  %1295 = vmatpush1.bf16.msra.mxu0 %v906
  %1296 = vmatprep.subr.bf16.mxu0 %v911
  %1297 = vmatpush1.bf16.msra.mxu0 %v910
  %1298 = vmatprep.subr.bf16.mxu0 %v915
  %1299 = vmatpush1.bf16.msra.mxu0 %v914
  %1300 = vmatprep.subr.bf16.mxu0 %v919
  %1301 = vmatpush1.bf16.msra.mxu0 %v918
  %1302 = vmatprep.subr.bf16.mxu0 %v923
  %1303 = vmatpush1.bf16.msra.mxu0 %v922
  %1304 = vmatprep.subr.bf16.mxu0 %v927
  %1305 = vmatpush1.bf16.msra.mxu0 %v926
  %1306 = vmatprep.subr.bf16.mxu0 %v931
  %1307 = vmatpush1.bf16.msra.mxu0 %v930
  %1308 = vmatprep.subr.bf16.mxu0 %v935
  %1309 = vmatpush1.bf16.msra.mxu0 %v934
  %1310 = vmatprep.mubr.bf16.mxu0 %v257
  %1311 = vmatmul.mubr.bf16.gmra.mrb[0].mxu0 %v243
  %v1312 = vpop.f32.mrb[0].mxu0
  %v1313 = vadd.f32 0.0, %v1312
  %v1314 = vpop.f32.mrb[0].mxu0
  %v1315 = vadd.f32 0.0, %v1314
  %v1316 = vpop.f32.mrb[0].mxu0
  %v1317 = vpop.f32.mrb[0].mxu0
  %1318 = vdwg.mxu0
  %1319 = vmatprep.subr.bf16.mxu0 %v939
  %1320 = vmatpush1.bf16.msra.mxu0 %v938
  %1321 = vmatprep.subr.bf16.mxu0 %v943
  %1322 = vmatpush1.bf16.msra.mxu0 %v942
  %1323 = vmatprep.subr.bf16.mxu0 %v947
  %1324 = vmatpush1.bf16.msra.mxu0 %v946
  %1325 = vmatprep.subr.bf16.mxu0 %v951
  %1326 = vmatpush1.bf16.msra.mxu0 %v950
  %1327 = vmatprep.subr.bf16.mxu0 %v955
  %1328 = vmatpush1.bf16.msra.mxu0 %v954
  %1329 = vmatprep.subr.bf16.mxu0 %v959
  %1330 = vmatpush1.bf16.msra.mxu0 %v958
  %1331 = vmatprep.subr.bf16.mxu0 %v963
  %1332 = vmatpush1.bf16.msra.mxu0 %v962
  %1333 = vmatprep.subr.bf16.mxu0 %v967
  %1334 = vmatpush1.bf16.msra.mxu0 %v966
  %1335 = vmatprep.subr.bf16.mxu0 %v971
  %1336 = vmatpush1.bf16.msra.mxu0 %v970
  %1337 = vmatprep.subr.bf16.mxu0 %v975
  %1338 = vmatpush1.bf16.msra.mxu0 %v974
  %1339 = vmatprep.subr.bf16.mxu0 %v979
  %1340 = vmatpush1.bf16.msra.mxu0 %v978
  %1341 = vmatprep.subr.bf16.mxu0 %v983
  %1342 = vmatpush1.bf16.msra.mxu0 %v982
  %1343 = vmatprep.subr.bf16.mxu0 %v987
  %1344 = vmatpush1.bf16.msra.mxu0 %v986
  %1345 = vmatprep.subr.bf16.mxu0 %v991
  %1346 = vmatpush1.bf16.msra.mxu0 %v990
  %1347 = vmatprep.subr.bf16.mxu0 %v995
  %1348 = vmatpush1.bf16.msra.mxu0 %v994
  %1349 = vmatprep.subr.bf16.mxu0 %v999
  %1350 = vmatpush1.bf16.msra.mxu0 %v998
  %1351 = vmatprep.mubr.bf16.mxu0 %v267
  %1352 = vmatmul.mubr.bf16.gmra.mrb[0].mxu0 %v265
  %v1353 = vpop.f32.mrb[0].mxu0
  %v1354 = vadd.f32 %v1313, %v1353
  %v1355 = vpop.f32.mrb[0].mxu0
  %v1356 = vadd.f32 %v1315, %v1355
  %v1357 = vpop.f32.mrb[0].mxu0
  %v1358 = vpop.f32.mrb[0].mxu0
  %1359 = vdwg.mxu0
  %1360 = vmatprep.subr.bf16.mxu0 %v1003
  %1361 = vmatpush1.bf16.msra.mxu0 %v1002
  %1362 = vmatprep.subr.bf16.mxu0 %v1007
  %1363 = vmatpush1.bf16.msra.mxu0 %v1006
  %1364 = vmatprep.subr.bf16.mxu0 %v1011
  %1365 = vmatpush1.bf16.msra.mxu0 %v1010
  %1366 = vmatprep.subr.bf16.mxu0 %v1015
  %1367 = vmatpush1.bf16.msra.mxu0 %v1014
  %1368 = vmatprep.subr.bf16.mxu0 %v1019
  %1369 = vmatpush1.bf16.msra.mxu0 %v1018
  %1370 = vmatprep.subr.bf16.mxu0 %v1023
  %1371 = vmatpush1.bf16.msra.mxu0 %v1022
  %1372 = vmatprep.subr.bf16.mxu0 %v1027
  %1373 = vmatpush1.bf16.msra.mxu0 %v1026
  %1374 = vmatprep.subr.bf16.mxu0 %v1031
  %1375 = vmatpush1.bf16.msra.mxu0 %v1030
  %1376 = vmatprep.subr.bf16.mxu0 %v1035
  %1377 = vmatpush1.bf16.msra.mxu0 %v1034
  %1378 = vmatprep.subr.bf16.mxu0 %v1039
  %1379 = vmatpush1.bf16.msra.mxu0 %v1038
  %1380 = vmatprep.subr.bf16.mxu0 %v1043
  %1381 = vmatpush1.bf16.msra.mxu0 %v1042
  %1382 = vmatprep.subr.bf16.mxu0 %v1047
  %1383 = vmatpush1.bf16.msra.mxu0 %v1046
  %1384 = vmatprep.subr.bf16.mxu0 %v1051
  %1385 = vmatpush1.bf16.msra.mxu0 %v1050
  %1386 = vmatprep.subr.bf16.mxu0 %v1055
  %1387 = vmatpush1.bf16.msra.mxu0 %v1054
  %1388 = vmatprep.subr.bf16.mxu0 %v1059
  %1389 = vmatpush1.bf16.msra.mxu0 %v1058
  %1390 = vmatprep.subr.bf16.mxu0 %v1063
  %1391 = vmatpush1.bf16.msra.mxu0 %v1062
  %1392 = vmatprep.mubr.bf16.mxu0 %v264
  %1393 = vmatmul.mubr.bf16.gmra.mrb[0].mxu0 %v250
  %v1394 = vpop.f32.mrb[0].mxu0
  %v1395 = vadd.f32 %v1354, %v1394
  %v1396 = vpop.f32.mrb[0].mxu0
  %v1397 = vadd.f32 %v1356, %v1396
  %v1398 = vpop.f32.mrb[0].mxu0
  %v1399 = vpop.f32.mrb[0].mxu0
  %1400 = vdwg.mxu0
  %1401 = vmatprep.subr.bf16.mxu0 %v1067
  %1402 = vmatpush1.bf16.msra.mxu0 %v1066
  %1403 = vmatprep.subr.bf16.mxu0 %v1071
  %1404 = vmatpush1.bf16.msra.mxu0 %v1070
  %1405 = vmatprep.subr.bf16.mxu0 0
  %1406 = vmatpush1.bf16.msra.mxu0 0
  %1407 = vmatprep.subr.bf16.mxu0 0
  %1408 = vmatpush1.bf16.msra.mxu0 0
  %1409 = vmatprep.subr.bf16.mxu0 0
  %1410 = vmatpush1.bf16.msra.mxu0 0
  %1411 = vmatprep.subr.bf16.mxu0 0
  %1412 = vmatpush1.bf16.msra.mxu0 0
  %1413 = vmatprep.subr.bf16.mxu0 0
  %1414 = vmatpush1.bf16.msra.mxu0 0
  %1415 = vmatprep.subr.bf16.mxu0 0
  %1416 = vmatpush1.bf16.msra.mxu0 0
  %1417 = vmatprep.subr.bf16.mxu0 0
  %1418 = vmatpush1.bf16.msra.mxu0 0
  %1419 = vmatprep.subr.bf16.mxu0 0
  %1420 = vmatpush1.bf16.msra.mxu0 0
  %1421 = vmatprep.subr.bf16.mxu0 0
  %1422 = vmatpush1.bf16.msra.mxu0 0
  %1423 = vmatprep.subr.bf16.mxu0 0
  %1424 = vmatpush1.bf16.msra.mxu0 0
  %1425 = vmatprep.subr.bf16.mxu0 0
  %1426 = vmatpush1.bf16.msra.mxu0 0
  %1427 = vmatprep.subr.bf16.mxu0 0
  %1428 = vmatpush1.bf16.msra.mxu0 0
  %1429 = vmatprep.subr.bf16.mxu0 0
  %1430 = vmatpush1.bf16.msra.mxu0 0
  %1431 = vmatprep.subr.bf16.mxu0 0
  %1432 = vmatpush1.bf16.msra.mxu0 0
  %1433 = vmatprep.mubr.bf16.mxu0 0
  %1434 = vmatmul.mubr.bf16.gmra.mrb[0].mxu0 %v1276
  %v1435 = vpop.f32.mrb[0].mxu0
  %v1436 = vadd.f32 %v1395, %v1435
  %v1437 = vpop.f32.mrb[0].mxu0
  %v1438 = vadd.f32 %v1397, %v1437
  %v1439 = vpop.f32.mrb[0].mxu0
  %v1440 = vpop.f32.mrb[0].mxu0
  %1441 = vdwg.mxu0
  %1442 = vmatprep.subr.bf16.mxu0 %v877
  %1443 = vmatpush1.bf16.msra.mxu0 %v876
  %1444 = vmatprep.subr.bf16.mxu0 %v881
  %1445 = vmatpush1.bf16.msra.mxu0 %v880
  %1446 = vmatprep.subr.bf16.mxu0 %v885
  %1447 = vmatpush1.bf16.msra.mxu0 %v884
  %1448 = vmatprep.subr.bf16.mxu0 %v889
  %1449 = vmatpush1.bf16.msra.mxu0 %v888
  %1450 = vmatprep.subr.bf16.mxu0 %v893
  %1451 = vmatpush1.bf16.msra.mxu0 %v892
  %1452 = vmatprep.subr.bf16.mxu0 %v897
  %1453 = vmatpush1.bf16.msra.mxu0 %v896
  %1454 = vmatprep.subr.bf16.mxu0 %v901
  %1455 = vmatpush1.bf16.msra.mxu0 %v900
  %1456 = vmatprep.subr.bf16.mxu0 %v905
  %1457 = vmatpush1.bf16.msra.mxu0 %v904
  %1458 = vmatprep.subr.bf16.mxu0 %v909
  %1459 = vmatpush1.bf16.msra.mxu0 %v908
  %1460 = vmatprep.subr.bf16.mxu0 %v913
  %1461 = vmatpush1.bf16.msra.mxu0 %v912
  %1462 = vmatprep.subr.bf16.mxu0 %v917
  %1463 = vmatpush1.bf16.msra.mxu0 %v916
  %1464 = vmatprep.subr.bf16.mxu0 %v921
  %1465 = vmatpush1.bf16.msra.mxu0 %v920
  %1466 = vmatprep.subr.bf16.mxu0 %v925
  %1467 = vmatpush1.bf16.msra.mxu0 %v924
  %1468 = vmatprep.subr.bf16.mxu0 %v929
  %1469 = vmatpush1.bf16.msra.mxu0 %v928
  %1470 = vmatprep.subr.bf16.mxu0 %v933
  %1471 = vmatpush1.bf16.msra.mxu0 %v932
  %1472 = vmatprep.subr.bf16.mxu0 %v937
  %1473 = vmatpush1.bf16.msra.mxu0 %v936
  %1474 = vmatprep.mubr.bf16.mxu0 %v257
  %1475 = vmatmul.mubr.bf16.gmra.mrb[0].mxu0 %v243
  %v1476 = vpop.f32.mrb[0].mxu0
  %v1477 = vadd.f32 0.0, %v1476
  %v1478 = vpop.f32.mrb[0].mxu0
  %v1479 = vadd.f32 0.0, %v1478
  %v1480 = vpop.f32.mrb[0].mxu0
  %v1481 = vpop.f32.mrb[0].mxu0
  %1482 = vdwg.mxu0
  %1483 = vmatprep.subr.bf16.mxu0 %v941
  %1484 = vmatpush1.bf16.msra.mxu0 %v940
  %1485 = vmatprep.subr.bf16.mxu0 %v945
  %1486 = vmatpush1.bf16.msra.mxu0 %v944
  %1487 = vmatprep.subr.bf16.mxu0 %v949
  %1488 = vmatpush1.bf16.msra.mxu0 %v948
  %1489 = vmatprep.subr.bf16.mxu0 %v953
  %1490 = vmatpush1.bf16.msra.mxu0 %v952
  %1491 = vmatprep.subr.bf16.mxu0 %v957
  %1492 = vmatpush1.bf16.msra.mxu0 %v956
  %1493 = vmatprep.subr.bf16.mxu0 %v961
  %1494 = vmatpush1.bf16.msra.mxu0 %v960
  %1495 = vmatprep.subr.bf16.mxu0 %v965
  %1496 = vmatpush1.bf16.msra.mxu0 %v964
  %1497 = vmatprep.subr.bf16.mxu0 %v969
  %1498 = vmatpush1.bf16.msra.mxu0 %v968
  %1499 = vmatprep.subr.bf16.mxu0 %v973
  %1500 = vmatpush1.bf16.msra.mxu0 %v972
  %1501 = vmatprep.subr.bf16.mxu0 %v977
  %1502 = vmatpush1.bf16.msra.mxu0 %v976
  %1503 = vmatprep.subr.bf16.mxu0 %v981
  %1504 = vmatpush1.bf16.msra.mxu0 %v980
  %1505 = vmatprep.subr.bf16.mxu0 %v985
  %1506 = vmatpush1.bf16.msra.mxu0 %v984
  %1507 = vmatprep.subr.bf16.mxu0 %v989
  %1508 = vmatpush1.bf16.msra.mxu0 %v988
  %1509 = vmatprep.subr.bf16.mxu0 %v993
  %1510 = vmatpush1.bf16.msra.mxu0 %v992
  %1511 = vmatprep.subr.bf16.mxu0 %v997
  %1512 = vmatpush1.bf16.msra.mxu0 %v996
  %1513 = vmatprep.subr.bf16.mxu0 %v1001
  %1514 = vmatpush1.bf16.msra.mxu0 %v1000
  %1515 = vmatprep.mubr.bf16.mxu0 %v267
  %1516 = vmatmul.mubr.bf16.gmra.mrb[0].mxu0 %v265
  %v1517 = vpop.f32.mrb[0].mxu0
  %v1518 = vadd.f32 %v1477, %v1517
  %v1519 = vpop.f32.mrb[0].mxu0
  %v1520 = vadd.f32 %v1479, %v1519
  %v1521 = vpop.f32.mrb[0].mxu0
  %v1522 = vpop.f32.mrb[0].mxu0
  %1523 = vdwg.mxu0
  %1524 = vmatprep.subr.bf16.mxu0 %v1005
  %1525 = vmatpush1.bf16.msra.mxu0 %v1004
  %1526 = vmatprep.subr.bf16.mxu0 %v1009
  %1527 = vmatpush1.bf16.msra.mxu0 %v1008
  %1528 = vmatprep.subr.bf16.mxu0 %v1013
  %1529 = vmatpush1.bf16.msra.mxu0 %v1012
  %1530 = vmatprep.subr.bf16.mxu0 %v1017
  %1531 = vmatpush1.bf16.msra.mxu0 %v1016
  %1532 = vmatprep.subr.bf16.mxu0 %v1021
  %1533 = vmatpush1.bf16.msra.mxu0 %v1020
  %1534 = vmatprep.subr.bf16.mxu0 %v1025
  %1535 = vmatpush1.bf16.msra.mxu0 %v1024
  %1536 = vmatprep.subr.bf16.mxu0 %v1029
  %1537 = vmatpush1.bf16.msra.mxu0 %v1028
  %1538 = vmatprep.subr.bf16.mxu0 %v1033
  %1539 = vmatpush1.bf16.msra.mxu0 %v1032
  %1540 = vmatprep.subr.bf16.mxu0 %v1037
  %1541 = vmatpush1.bf16.msra.mxu0 %v1036
  %1542 = vmatprep.subr.bf16.mxu0 %v1041
  %1543 = vmatpush1.bf16.msra.mxu0 %v1040
  %1544 = vmatprep.subr.bf16.mxu0 %v1045
  %1545 = vmatpush1.bf16.msra.mxu0 %v1044
  %1546 = vmatprep.subr.bf16.mxu0 %v1049
  %1547 = vmatpush1.bf16.msra.mxu0 %v1048
  %1548 = vmatprep.subr.bf16.mxu0 %v1053
  %1549 = vmatpush1.bf16.msra.mxu0 %v1052
  %1550 = vmatprep.subr.bf16.mxu0 %v1057
  %1551 = vmatpush1.bf16.msra.mxu0 %v1056
  %1552 = vmatprep.subr.bf16.mxu0 %v1061
  %1553 = vmatpush1.bf16.msra.mxu0 %v1060
  %1554 = vmatprep.subr.bf16.mxu0 %v1065
  %1555 = vmatpush1.bf16.msra.mxu0 %v1064
  %1556 = vmatprep.mubr.bf16.mxu0 %v264
  %1557 = vmatmul.mubr.bf16.gmra.mrb[0].mxu0 %v250
  %v1558 = vpop.f32.mrb[0].mxu0
  %v1559 = vadd.f32 %v1518, %v1558
  %v1560 = vpop.f32.mrb[0].mxu0
  %v1561 = vadd.f32 %v1520, %v1560
  %v1562 = vpop.f32.mrb[0].mxu0
  %v1563 = vpop.f32.mrb[0].mxu0
  %1564 = vdwg.mxu0
  %1565 = vmatprep.subr.bf16.mxu0 %v1069
  %1566 = vmatpush1.bf16.msra.mxu0 %v1068
  %1567 = vmatprep.subr.bf16.mxu0 %v1073
  %1568 = vmatpush1.bf16.msra.mxu0 %v1072
  %1569 = vmatprep.subr.bf16.mxu0 0
  %1570 = vmatpush1.bf16.msra.mxu0 0
  %1571 = vmatprep.subr.bf16.mxu0 0
  %1572 = vmatpush1.bf16.msra.mxu0 0
  %1573 = vmatprep.subr.bf16.mxu0 0
  %1574 = vmatpush1.bf16.msra.mxu0 0
  %1575 = vmatprep.subr.bf16.mxu0 0
  %1576 = vmatpush1.bf16.msra.mxu0 0
  %1577 = vmatprep.subr.bf16.mxu0 0
  %1578 = vmatpush1.bf16.msra.mxu0 0
  %1579 = vmatprep.subr.bf16.mxu0 0
  %1580 = vmatpush1.bf16.msra.mxu0 0
  %1581 = vmatprep.subr.bf16.mxu0 0
  %1582 = vmatpush1.bf16.msra.mxu0 0
  %1583 = vmatprep.subr.bf16.mxu0 0
  %1584 = vmatpush1.bf16.msra.mxu0 0
  %1585 = vmatprep.subr.bf16.mxu0 0
  %1586 = vmatpush1.bf16.msra.mxu0 0
  %1587 = vmatprep.subr.bf16.mxu0 0
  %1588 = vmatpush1.bf16.msra.mxu0 0
  %1589 = vmatprep.subr.bf16.mxu0 0
  %1590 = vmatpush1.bf16.msra.mxu0 0
  %1591 = vmatprep.subr.bf16.mxu0 0
  %1592 = vmatpush1.bf16.msra.mxu0 0
  %1593 = vmatprep.subr.bf16.mxu0 0
  %1594 = vmatpush1.bf16.msra.mxu0 0
  %1595 = vmatprep.subr.bf16.mxu0 0
  %1596 = vmatpush1.bf16.msra.mxu0 0
  %1597 = vmatprep.mubr.bf16.mxu0 0
  %1598 = vmatmul.mubr.bf16.gmra.mrb[0].mxu0 %v1276
  %v1599 = vpop.f32.mrb[0].mxu0
  %v1600 = vadd.f32 %v1559, %v1599
  %v1601 = vpop.f32.mrb[0].mxu0
  %v1602 = vadd.f32 %v1561, %v1601
  %v1603 = vpop.f32.mrb[0].mxu0
  %v1604 = vpop.f32.mrb[0].mxu0
  %1605 = vdwg.mxu0
  %v1606 = vld [vmem:[%s2] sm:$0xf]
  %v1608 = vlaneseq
  %v1609 = vshrl.u32 %v1608, 7
  %v1610 = vsub.s32 0, %v1609
  %v1611 = vrot.slane %v1606, %v1610
  %v1612 = vlaneseq
  %v1613 = vshrl.u32 %v1612, 7
  %v1614 = vsub.s32 1, %v1613
  %v1615 = vrot.slane %v1606, %v1614
  %v1616 = vlaneseq
  %v1617 = vshrl.u32 %v1616, 7
  %v1618 = vsub.s32 2, %v1617
  %v1619 = vrot.slane %v1606, %v1618
  %v1620 = vlaneseq
  %v1621 = vshrl.u32 %v1620, 7
  %v1622 = vsub.s32 3, %v1621
  %v1623 = vrot.slane %v1606, %v1622
  %v1628 = vmul.f32 %v1436, %v1611
  %v1629 = vmul.f32 %v1438, %v1615
  %v1630 = vmul.f32 %v1600, %v1619
  %v1631 = vmul.f32 %v1602, %v1623
  %v1632 = vld [vmem:[%s3] sm:$0xf]
  %v1634 = vlaneseq
  %v1635 = vshrl.u32 %v1634, 7
  %v1636 = vsub.s32 0, %v1635
  %v1637 = vrot.slane %v1632, %v1636
  %v1638 = vlaneseq
  %v1639 = vshrl.u32 %v1638, 7
  %v1640 = vsub.s32 1, %v1639
  %v1641 = vrot.slane %v1632, %v1640
  %v1642 = vlaneseq
  %v1643 = vshrl.u32 %v1642, 7
  %v1644 = vsub.s32 2, %v1643
  %v1645 = vrot.slane %v1632, %v1644
  %v1646 = vlaneseq
  %v1647 = vshrl.u32 %v1646, 7
  %v1648 = vsub.s32 3, %v1647
  %v1649 = vrot.slane %v1632, %v1648
  %v1654 = vadd.f32 %v1628, %v1637
  %v1655 = vadd.f32 %v1629, %v1641
  %v1656 = vadd.f32 %v1630, %v1645
  %v1657 = vadd.f32 %v1631, %v1649
  %v1658 = vmax.f32 %v1654, 0.0
  %v1659 = vmax.f32 %v1655, 0.0
  %v1660 = vmax.f32 %v1656, 0.0
  %v1661 = vmax.f32 %v1657, 0.0
  %v1662 = vpack.c.bf16 %v1658, %v1658
  %v1663 = vpack.c.bf16 %v1659, %v1659
  %v1664 = vpack.c.bf16 %v1660, %v1660
  %v1665 = vpack.c.bf16 %v1661, %v1661
  %v1670 = vcombine.low %v1662, %v1663
  %v1671 = vcombine.low %v1664, %v1665
  %v1673 = vunpack.c.l.s4 1966171168
  %v1674 = vunpack.c.0.s8 %v1673
  %v1675 = vlaneseq
  %v1676 = vshrl.u32 %v1675, 7
  %v1677 = vsub.s32 %v1674, %v1676
  %v1678 = vrot.slane %v1670, %v1677
  %v1680 = vunpack.c.l.s4 1966171168
  %v1681 = vunpack.c.0.s8 %v1680
  %v1682 = vlaneseq
  %v1683 = vshrl.u32 %v1682, 7
  %v1684 = vsub.s32 %v1681, %v1683
  %v1685 = vrot.slane %v1671, %v1684
  %v1686 = vcombine.low %v1678, %v1685
  %v1688 = vunpack.c.l.s4 1966171168
  %v1689 = vunpack.c.0.s8 %v1688
  %v1690 = vlaneseq
  %v1691 = vshrl.u32 %v1690, 7
  %v1692 = vsub.s32 %v1689, %v1691
  %v1693 = vrot.slane %v1686, %v1692
  %1695 = vst [vmem:[%s4] sm:$0xf] %v1693
  // Predicated region
  $region18: #{model_forward.10} parent=0 // pred_check
    _
  $region19: #{model_forward.10} parent=0 // pred_check_branch
    %1697 = sbr.rel (0) target = $region21
  $region20: #{model_forward.10} parent=0 // pred_region
    _
  $region21: #{model_forward.10} parent=0 // pred_fallthru
    _
  // Predicated region
  $region22: #{model_forward.10} parent=0 // pred_check
    _
  $region23: #{model_forward.10} parent=0 // pred_check_branch
    %1699 = sbr.rel (0) target = $region25
  $region24: #{model_forward.10} parent=0 // pred_region
    _
  $region25: #{model_forward.10} parent=0 // pred_fallthru
    _

</llo_original>
